<compile_context>
chip_gen: v7x
topology: tpu7x:2x2x1
jax: 0.10.0
libtpu: 0.0.40
codegen_flags: <defaults>
</compile_context>

<pallas_src>
import math

import jax
import jax.numpy as jnp
from jax.experimental import pallas as pl
from jax.experimental.pallas import tpu as pltpu

# ----------------------------- config ---------------------------------------
VOCAB = 50
MAX_POS = 16
HIDDEN = 32
NUM_HEADS = 2
HEAD_DIM = HIDDEN // NUM_HEADS
INTERMEDIATE = 64
NUM_LAYERS = 2
NUM_CLASSES = 3
CLS_PAD = 128          # lane-dense padded logits width (final store is a full-lane vst)
HIDDEN_HALF = HIDDEN // 2
BATCH = 4
SEQ = 8


# ----------------------------- fused Pallas kernel ---------------------------
def _fused_forward_kernel(
    word_ref, pos_ref, type_ref, embg_ref, embb_ref, mask_ref,
    wqkv_ref, bqkv_ref, wo_ref, bo_ref, ln1g_ref, ln1b_ref,
    wi_ref, bi_ref, wf_ref, bf_ref, ln2g_ref, ln2b_ref,
    poolw_ref, poolb_ref, sent_ref, len_ref,
    cw1_ref, cw1s_ref, cw1l_ref, cb1_ref, cw2_ref, cb2_ref, cw3_ref, cb3_ref,
    out_ref,
):
    B, S, H = word_ref.shape
    Hn, D = NUM_HEADS, HEAD_DIM

    def mm(a, b):
        # bf16 MXU matmul, f32 accumulation
        return jnp.dot(a.astype(jnp.bfloat16), b.astype(jnp.bfloat16),
                       preferred_element_type=jnp.float32)

    def bmm(eq, a, b):
        return jnp.einsum(eq, a.astype(jnp.bfloat16), b.astype(jnp.bfloat16),
                          preferred_element_type=jnp.float32)

    def layernorm(x, g, b):
        mean = jnp.mean(x, axis=-1, keepdims=True)
        var = jnp.mean(jnp.square(x - mean), axis=-1, keepdims=True)
        return (x - mean) * jax.lax.rsqrt(var + 1e-12) * g + b

    # ---- embeddings: sum + LayerNorm (all in VMEM) ----
    emb = word_ref[...] + pos_ref[...][None, :, :] + type_ref[...][None, :, :]
    x = layernorm(emb.reshape(B * S, H), embg_ref[...], embb_ref[...])   # (B*S, H)

    # HF-style additive key mask (0 attended / -10000 masked), broadcast over queries
    mask_bias = mask_ref[...][:, None, :]                                # (B, 1, S)

    # ---- encoder layers (statically unrolled) ----
    for layer in range(NUM_LAYERS):
        # fused Q|K|V projection; 1/sqrt(D) scale is pre-folded into the Q weights
        qkv = mm(x, wqkv_ref[layer]) + bqkv_ref[layer]                   # (B*S, 3H)
        wo = wo_ref[layer]                                               # (H, H)

        attn = None
        for h in range(Hn):
            q = qkv[:, h * D:(h + 1) * D].reshape(B, S, D)
            k = qkv[:, H + h * D: H + (h + 1) * D].reshape(B, S, D)
            v = qkv[:, 2 * H + h * D: 2 * H + (h + 1) * D].reshape(B, S, D)
            s = bmm('bqd,bkd->bqk', q, k) + mask_bias                    # (B, S, S)
            s = s - jnp.max(s, axis=-1, keepdims=True)
            p = jnp.exp(s)
            p = p * pl.reciprocal(jnp.sum(p, axis=-1, keepdims=True), approx=True)
            ctx = bmm('bqk,bkd->bqd', p, v).reshape(B * S, D)            # (B*S, D)
            # fold per-head context straight into the output projection:
            # concat_h(ctx_h) @ Wo  ==  sum_h ctx_h @ Wo[h*D:(h+1)*D, :]
            contrib = mm(ctx, wo[h * D:(h + 1) * D, :])
            attn = contrib if attn is None else attn + contrib
        attn = attn + bo_ref[layer]

        # residual + LayerNorm (residual add fused in-kernel)
        x = layernorm(attn + x, ln1g_ref[layer], ln1b_ref[layer])

        # FFN
        inter = mm(x, wi_ref[layer]) + bi_ref[layer]                     # (B*S, I)
        # TODO(synk): HF BERT uses exact erf-GELU; tanh approximation used here.
        inter = 0.5 * inter * (1.0 + jnp.tanh(
            0.7978845608028654 * (inter + 0.044715 * inter * inter * inter)))
        ffn = mm(inter, wf_ref[layer]) + bf_ref[layer]
        x = layernorm(ffn + x, ln2g_ref[layer], ln2b_ref[layer])

    # ---- pooler: tanh(W h[:,0] + b) ----
    cls = x.reshape(B, S, H)[:, 0:1, :].reshape(B, H)
    pooled = jnp.tanh(mm(cls, poolw_ref[...]) + poolb_ref[...])          # (B, H)

    # ---- classifier head (BatchNorm folded into the Linears; Dropout = identity) ----
    # extended_features = [pooled | sentiment | text_length]; the two extra
    # columns contribute via rank-1 broadcast multiplies (no K=H+2 matmul).
    h1 = (mm(pooled, cw1_ref[...])
          + sent_ref[...] * cw1s_ref[...]
          + len_ref[...] * cw1l_ref[...]
          + cb1_ref[...])
    h1 = jnp.maximum(h1, 0.0)
    h2 = jnp.maximum(mm(h1, cw2_ref[...]) + cb2_ref[...], 0.0)
    out_ref[...] = mm(h2, cw3_ref[...]) + cb3_ref[...]                   # (B, CLS_PAD)


# ----------------------------- forward wrapper --------------------------------
def bert_review_classifier_forward(fp, input_ids, attention_mask,
                                   sentiment_score, text_length):
    B, S = input_ids.shape

    # embedding gather stays in XLA glue (no clean tiny-gather Pallas equivalent)
    word_g = jnp.take(fp["word_emb"], input_ids, axis=0)                 # (B, S, H)
    mask_bias = (1.0 - attention_mask.astype(jnp.float32)) * -10000.0    # (B, S)
    sent = sentiment_score[:, None].astype(jnp.float32)                  # (B, 1)
    tlen = text_length[:, None].astype(jnp.float32)                      # (B, 1)

    args = [
        word_g, fp["pos_emb"][:S], fp["type0"], fp["emb_ln_g"], fp["emb_ln_b"], mask_bias,
        fp["wqkv"], fp["bqkv"], fp["wo"], fp["bo"], fp["ln1_g"], fp["ln1_b"],
        fp["wi"], fp["bi"], fp["wf"], fp["bf"], fp["ln2_g"], fp["ln2_b"],
        fp["pool_w"], fp["pool_b"], sent, tlen,
        fp["cw1"], fp["cw1s"], fp["cw1l"], fp["cb1"],
        fp["cw2"], fp["cb2"], fp["cw3"], fp["cb3"],
    ]
    in_specs = [pl.BlockSpec(a.shape, lambda i, nd=a.ndim: (0,) * nd) for a in args]

    out = pl.pallas_call(
        _fused_forward_kernel,
        out_shape=jax.ShapeDtypeStruct((B, CLS_PAD), jnp.float32),
        grid=(1,),
        in_specs=in_specs,
        out_specs=pl.BlockSpec((B, CLS_PAD), lambda i: (0, 0)),
        compiler_params=pltpu.CompilerParams(dimension_semantics=("arbitrary",)),
    )(*args)
    return out[:, :NUM_CLASSES]


# ----------------------------- parameter init & fusion ------------------------
def init_params(key):
    keys = iter(jax.random.split(key, 128))
    nk = lambda: next(keys)

    def normal(shape, std=0.02):
        return std * jax.random.normal(nk(), shape, jnp.float32)

    def xavier(fan_in, fan_out):  # matches nn.init.xavier_normal_
        std = math.sqrt(2.0 / (fan_in + fan_out))
        return std * jax.random.normal(nk(), (fan_in, fan_out), jnp.float32)

    ones = lambda n: jnp.ones((1, n), jnp.float32)
    zeros = lambda n: jnp.zeros((1, n), jnp.float32)

    params = {
        "word_emb": normal((VOCAB, HIDDEN)),
        "pos_emb": normal((MAX_POS, HIDDEN)),
        "type_emb": normal((2, HIDDEN)),
        "emb_ln_g": ones(HIDDEN),
        "emb_ln_b": zeros(HIDDEN),
        "pool_w": normal((HIDDEN, HIDDEN)),
        "pool_b": zeros(HIDDEN),
    }
    layers = []
    for _ in range(NUM_LAYERS):
        layers.append({
            "wq": normal((HIDDEN, HIDDEN)), "bq": zeros(HIDDEN),
            "wk": normal((HIDDEN, HIDDEN)), "bk": zeros(HIDDEN),
            "wv": normal((HIDDEN, HIDDEN)), "bv": zeros(HIDDEN),
            "wo": normal((HIDDEN, HIDDEN)), "bo": zeros(HIDDEN),
            "ln1_g": ones(HIDDEN), "ln1_b": zeros(HIDDEN),
            "wi": normal((HIDDEN, INTERMEDIATE)), "bi": zeros(INTERMEDIATE),
            "wf": normal((INTERMEDIATE, HIDDEN)), "bf": zeros(HIDDEN),
            "ln2_g": ones(HIDDEN), "ln2_b": zeros(HIDDEN),
        })
    params["layers"] = layers

    params["classifier"] = {
        "w1": xavier(HIDDEN + 2, HIDDEN), "b1": zeros(HIDDEN),
        "bn1_g": ones(HIDDEN), "bn1_b": zeros(HIDDEN),
        "bn1_m": zeros(HIDDEN), "bn1_v": ones(HIDDEN),
        "w2": xavier(HIDDEN, HIDDEN_HALF), "b2": zeros(HIDDEN_HALF),
        "bn2_g": ones(HIDDEN_HALF), "bn2_b": zeros(HIDDEN_HALF),
        "bn2_m": zeros(HIDDEN_HALF), "bn2_v": ones(HIDDEN_HALF),
        "w3": xavier(HIDDEN_HALF, NUM_CLASSES), "b3": zeros(NUM_CLASSES),
    }
    return params


def fuse_params(p):
    """One-time parameter prep: fuse QKV (+scale into Wq), stack per-layer
    weights along a leading layer axis, fold eval-mode BatchNorm into the
    classifier Linears, pad the final Linear to a 128-lane output."""
    scale = 1.0 / math.sqrt(HEAD_DIM)
    stack = lambda key: jnp.stack([lp[key] for lp in p["layers"]], axis=0)

    wq = jnp.stack([lp["wq"] * scale for lp in p["layers"]], axis=0)
    bq = jnp.stack([lp["bq"] * scale for lp in p["layers"]], axis=0)
    wqkv = jnp.concatenate([wq, stack("wk"), stack("wv")], axis=-1)       # (L, H, 3H)
    bqkv = jnp.concatenate([bq, stack("bk"), stack("bv")], axis=-1)       # (L, 1, 3H)

    cp = p["classifier"]
    s1 = cp["bn1_g"] * jax.lax.rsqrt(cp["bn1_v"] + 1e-5)                  # (1, H)
    w1 = cp["w1"] * s1                                                    # (H+2, H)
    b1 = (cp["b1"] - cp["bn1_m"]) * s1 + cp["bn1_b"]
    s2 = cp["bn2_g"] * jax.lax.rsqrt(cp["bn2_v"] + 1e-5)
    w2 = cp["w2"] * s2
    b2 = (cp["b2"] - cp["bn2_m"]) * s2 + cp["bn2_b"]
    w3p = jnp.zeros((HIDDEN_HALF, CLS_PAD), jnp.float32).at[:, :NUM_CLASSES].set(cp["w3"])
    b3p = jnp.zeros((1, CLS_PAD), jnp.float32).at[:, :NUM_CLASSES].set(cp["b3"])

    return {
        "word_emb": p["word_emb"],
        "pos_emb": p["pos_emb"],
        "type0": p["type_emb"][0:1],
        "emb_ln_g": p["emb_ln_g"], "emb_ln_b": p["emb_ln_b"],
        "wqkv": wqkv, "bqkv": bqkv,
        "wo": stack("wo"), "bo": stack("bo"),
        "ln1_g": stack("ln1_g"), "ln1_b": stack("ln1_b"),
        "wi": stack("wi"), "bi": stack("bi"),
        "wf": stack("wf"), "bf": stack("bf"),
        "ln2_g": stack("ln2_g"), "ln2_b": stack("ln2_b"),
        "pool_w": p["pool_w"], "pool_b": p["pool_b"],
        "cw1": w1[:HIDDEN, :],
        "cw1s": w1[HIDDEN:HIDDEN + 1, :],
        "cw1l": w1[HIDDEN + 1:HIDDEN + 2, :],
        "cb1": b1, "cw2": w2, "cb2": b2, "cw3": w3p, "cb3": b3p,
    }


# ----------------------------- main ------------------------------------------
if __name__ == "__main__":
    root = jax.random.PRNGKey(0)
    k_params, k_ids, k_sent, k_len = jax.random.split(root, 4)

    raw_params = init_params(k_params)
    fused_params = fuse_params(raw_params)

    input_ids = jax.random.randint(k_ids, (BATCH, SEQ), 0, VOCAB, dtype=jnp.int32)
    attention_mask = jnp.ones((BATCH, SEQ), jnp.int32).at[:, SEQ - 2:].set(0)
    sentiment_score = jax.random.uniform(k_sent, (BATCH,), jnp.float32, -1.0, 1.0)
    text_length = jax.random.uniform(k_len, (BATCH,), jnp.float32, 0.0, 1.0)

    fwd = jax.jit(bert_review_classifier_forward)
    logits = fwd(fused_params, input_ids, attention_mask, sentiment_score, text_length)
    logits = jax.block_until_ready(logits)

    assert logits.shape == (BATCH, NUM_CLASSES)
    assert logits.dtype == jnp.float32
    print("KERNEL_OK")
</pallas_src>

<mosaic_0001>
module attributes {stable_mosaic.version = 11 : i64} {
  func.func @_fused_forward_kernel(%arg0: i32, %arg1: memref<4x8x32xf32, #tpu.memory_space<vmem>>, %arg2: memref<8x32xf32, #tpu.memory_space<vmem>>, %arg3: memref<1x32xf32, #tpu.memory_space<vmem>>, %arg4: memref<1x32xf32, #tpu.memory_space<vmem>>, %arg5: memref<1x32xf32, #tpu.memory_space<vmem>>, %arg6: memref<4x8xf32, #tpu.memory_space<vmem>>, %arg7: memref<2x32x96xf32, #tpu.memory_space<vmem>>, %arg8: memref<2x1x96xf32, #tpu.memory_space<vmem>>, %arg9: memref<2x32x32xf32, #tpu.memory_space<vmem>>, %arg10: memref<2x1x32xf32, #tpu.memory_space<vmem>>, %arg11: memref<2x1x32xf32, #tpu.memory_space<vmem>>, %arg12: memref<2x1x32xf32, #tpu.memory_space<vmem>>, %arg13: memref<2x32x64xf32, #tpu.memory_space<vmem>>, %arg14: memref<2x1x64xf32, #tpu.memory_space<vmem>>, %arg15: memref<2x64x32xf32, #tpu.memory_space<vmem>>, %arg16: memref<2x1x32xf32, #tpu.memory_space<vmem>>, %arg17: memref<2x1x32xf32, #tpu.memory_space<vmem>>, %arg18: memref<2x1x32xf32, #tpu.memory_space<vmem>>, %arg19: memref<32x32xf32, #tpu.memory_space<vmem>>, %arg20: memref<1x32xf32, #tpu.memory_space<vmem>>, %arg21: memref<4x1xf32, #tpu.memory_space<vmem>>, %arg22: memref<4x1xf32, #tpu.memory_space<vmem>>, %arg23: memref<32x32xf32, #tpu.memory_space<vmem>>, %arg24: memref<1x32xf32, #tpu.memory_space<vmem>>, %arg25: memref<1x32xf32, #tpu.memory_space<vmem>>, %arg26: memref<1x32xf32, #tpu.memory_space<vmem>>, %arg27: memref<32x16xf32, #tpu.memory_space<vmem>>, %arg28: memref<1x16xf32, #tpu.memory_space<vmem>>, %arg29: memref<16x128xf32, #tpu.memory_space<vmem>>, %arg30: memref<1x128xf32, #tpu.memory_space<vmem>>, %arg31: memref<4x128xf32, #tpu.memory_space<vmem>>) attributes {dimension_semantics = [#tpu.dimension_semantics<arbitrary>], iteration_bounds = array<i64: 1>, scalar_prefetch = 0 : i64, scratch_operands = 0 : i64, tpu.core_type = #tpu.core_type<tc>, window_params = [{pipeline_mode = #tpu.pipeline_mode<synchronous>, transform_indices = @transform_0, window_bounds = array<i64: 4, 8, 32>}, {pipeline_mode = #tpu.pipeline_mode<synchronous>, transform_indices = @transform_1, window_bounds = array<i64: 8, 32>}, {pipeline_mode = #tpu.pipeline_mode<synchronous>, transform_indices = @transform_2, window_bounds = array<i64: 1, 32>}, {pipeline_mode = #tpu.pipeline_mode<synchronous>, transform_indices = @transform_3, window_bounds = array<i64: 1, 32>}, {pipeline_mode = #tpu.pipeline_mode<synchronous>, transform_indices = @transform_4, window_bounds = array<i64: 1, 32>}, {pipeline_mode = #tpu.pipeline_mode<synchronous>, transform_indices = @transform_5, window_bounds = array<i64: 4, 8>}, {pipeline_mode = #tpu.pipeline_mode<synchronous>, transform_indices = @transform_6, window_bounds = array<i64: 2, 32, 96>}, {pipeline_mode = #tpu.pipeline_mode<synchronous>, transform_indices = @transform_7, window_bounds = array<i64: 2, 1, 96>}, {pipeline_mode = #tpu.pipeline_mode<synchronous>, transform_indices = @transform_8, window_bounds = array<i64: 2, 32, 32>}, {pipeline_mode = #tpu.pipeline_mode<synchronous>, transform_indices = @transform_9, window_bounds = array<i64: 2, 1, 32>}, {pipeline_mode = #tpu.pipeline_mode<synchronous>, transform_indices = @transform_10, window_bounds = array<i64: 2, 1, 32>}, {pipeline_mode = #tpu.pipeline_mode<synchronous>, transform_indices = @transform_11, window_bounds = array<i64: 2, 1, 32>}, {pipeline_mode = #tpu.pipeline_mode<synchronous>, transform_indices = @transform_12, window_bounds = array<i64: 2, 32, 64>}, {pipeline_mode = #tpu.pipeline_mode<synchronous>, transform_indices = @transform_13, window_bounds = array<i64: 2, 1, 64>}, {pipeline_mode = #tpu.pipeline_mode<synchronous>, transform_indices = @transform_14, window_bounds = array<i64: 2, 64, 32>}, {pipeline_mode = #tpu.pipeline_mode<synchronous>, transform_indices = @transform_15, window_bounds = array<i64: 2, 1, 32>}, {pipeline_mode = #tpu.pipeline_mode<synchronous>, transform_indices = @transform_16, window_bounds = array<i64: 2, 1, 32>}, {pipeline_mode = #tpu.pipeline_mode<synchronous>, transform_indices = @transform_17, window_bounds = array<i64: 2, 1, 32>}, {pipeline_mode = #tpu.pipeline_mode<synchronous>, transform_indices = @transform_18, window_bounds = array<i64: 32, 32>}, {pipeline_mode = #tpu.pipeline_mode<synchronous>, transform_indices = @transform_19, window_bounds = array<i64: 1, 32>}, {pipeline_mode = #tpu.pipeline_mode<synchronous>, transform_indices = @transform_20, window_bounds = array<i64: 4, 1>}, {pipeline_mode = #tpu.pipeline_mode<synchronous>, transform_indices = @transform_21, window_bounds = array<i64: 4, 1>}, {pipeline_mode = #tpu.pipeline_mode<synchronous>, transform_indices = @transform_22, window_bounds = array<i64: 32, 32>}, {pipeline_mode = #tpu.pipeline_mode<synchronous>, transform_indices = @transform_23, window_bounds = array<i64: 1, 32>}, {pipeline_mode = #tpu.pipeline_mode<synchronous>, transform_indices = @transform_24, window_bounds = array<i64: 1, 32>}, {pipeline_mode = #tpu.pipeline_mode<synchronous>, transform_indices = @transform_25, window_bounds = array<i64: 1, 32>}, {pipeline_mode = #tpu.pipeline_mode<synchronous>, transform_indices = @transform_26, window_bounds = array<i64: 32, 16>}, {pipeline_mode = #tpu.pipeline_mode<synchronous>, transform_indices = @transform_27, window_bounds = array<i64: 1, 16>}, {pipeline_mode = #tpu.pipeline_mode<synchronous>, transform_indices = @transform_28, window_bounds = array<i64: 16, 128>}, {pipeline_mode = #tpu.pipeline_mode<synchronous>, transform_indices = @transform_29, window_bounds = array<i64: 1, 128>}, {pipeline_mode = #tpu.pipeline_mode<synchronous>, transform_indices = @transform_30, window_bounds = array<i64: 4, 128>}]} {
    %c0 = arith.constant 0 : index
    %c0_0 = arith.constant 0 : index
    %c0_1 = arith.constant 0 : index
    %0 = vector.load %arg1[%c0, %c0_0, %c0_1] : memref<4x8x32xf32, #tpu.memory_space<vmem>>, vector<4x8x32xf32>
    %c0_2 = arith.constant 0 : index
    %c0_3 = arith.constant 0 : index
    %1 = vector.load %arg2[%c0_2, %c0_3] : memref<8x32xf32, #tpu.memory_space<vmem>>, vector<8x32xf32>
    %2 = vector.shape_cast %1 : vector<8x32xf32> to vector<1x8x32xf32>
    %3 = vector.broadcast %2 : vector<1x8x32xf32> to vector<4x8x32xf32>
    %4 = arith.addf %0, %3 : vector<4x8x32xf32>
    %c0_4 = arith.constant 0 : index
    %c0_5 = arith.constant 0 : index
    %5 = vector.load %arg3[%c0_4, %c0_5] : memref<1x32xf32, #tpu.memory_space<vmem>>, vector<1x32xf32>
    %6 = vector.shape_cast %5 : vector<1x32xf32> to vector<1x1x32xf32>
    %7 = vector.broadcast %6 : vector<1x1x32xf32> to vector<4x8x32xf32>
    %8 = arith.addf %4, %7 : vector<4x8x32xf32>
    %9 = vector.shape_cast %8 : vector<4x8x32xf32> to vector<32x32xf32>
    %c0_6 = arith.constant 0 : index
    %c0_7 = arith.constant 0 : index
    %10 = vector.load %arg4[%c0_6, %c0_7] : memref<1x32xf32, #tpu.memory_space<vmem>>, vector<1x32xf32>
    %c0_8 = arith.constant 0 : index
    %c0_9 = arith.constant 0 : index
    %11 = vector.load %arg5[%c0_8, %c0_9] : memref<1x32xf32, #tpu.memory_space<vmem>>, vector<1x32xf32>
    %cst = arith.constant dense<0.000000e+00> : vector<32xf32>
    %12 = vector.multi_reduction <add>, %9, %cst [1] : vector<32x32xf32> to vector<32xf32>
    %13 = vector.shape_cast %12 : vector<32xf32> to vector<32x1xf32>
    %cst_10 = arith.constant 3.200000e+01 : f32
    %14 = vector.broadcast %cst_10 : f32 to vector<32x1xf32>
    %15 = arith.divf %13, %14 : vector<32x1xf32>
    %16 = vector.broadcast %15 : vector<32x1xf32> to vector<32x32xf32>
    %17 = arith.subf %9, %16 : vector<32x32xf32>
    %18 = arith.mulf %17, %17 : vector<32x32xf32>
    %cst_11 = arith.constant dense<0.000000e+00> : vector<32xf32>
    %19 = vector.multi_reduction <add>, %18, %cst_11 [1] : vector<32x32xf32> to vector<32xf32>
    %20 = vector.shape_cast %19 : vector<32xf32> to vector<32x1xf32>
    %cst_12 = arith.constant 3.200000e+01 : f32
    %21 = vector.broadcast %cst_12 : f32 to vector<32x1xf32>
    %22 = arith.divf %20, %21 : vector<32x1xf32>
    %23 = vector.broadcast %15 : vector<32x1xf32> to vector<32x32xf32>
    %24 = arith.subf %9, %23 : vector<32x32xf32>
    %cst_13 = arith.constant 9.99999996E-13 : f32
    %25 = vector.broadcast %cst_13 : f32 to vector<32x1xf32>
    %26 = arith.addf %22, %25 : vector<32x1xf32>
    %27 = math.rsqrt %26 : vector<32x1xf32>
    %28 = vector.broadcast %27 : vector<32x1xf32> to vector<32x32xf32>
    %29 = arith.mulf %24, %28 : vector<32x32xf32>
    %30 = vector.broadcast %10 : vector<1x32xf32> to vector<32x32xf32>
    %31 = arith.mulf %29, %30 : vector<32x32xf32>
    %32 = vector.broadcast %11 : vector<1x32xf32> to vector<32x32xf32>
    %33 = arith.addf %31, %32 : vector<32x32xf32>
    %c0_14 = arith.constant 0 : index
    %c0_15 = arith.constant 0 : index
    %34 = vector.load %arg6[%c0_14, %c0_15] : memref<4x8xf32, #tpu.memory_space<vmem>>, vector<4x8xf32>
    %35 = vector.shape_cast %34 : vector<4x8xf32> to vector<4x1x8xf32>
    %c0_16 = arith.constant 0 : index
    %c0_17 = arith.constant 0 : index
    %c0_18 = arith.constant 0 : index
    %36 = vector.load %arg7[%c0_16, %c0_17, %c0_18] : memref<2x32x96xf32, #tpu.memory_space<vmem>>, vector<1x32x96xf32>
    %37 = vector.shape_cast %36 : vector<1x32x96xf32> to vector<32x96xf32>
    %38 = arith.truncf %33 : vector<32x32xf32> to vector<32x32xbf16>
    %39 = arith.truncf %37 : vector<32x96xf32> to vector<32x96xbf16>
    %cst_19 = arith.constant dense<0.000000e+00> : vector<32x96xf32>
    %40 = tpu.matmul %38, %39, %cst_19 {dimension_numbers = #tpu.dot_dimension_numbers<[1], [0], [0], [1], [0, 0, 1, 1], [], []>} : vector<32x32xbf16>, vector<32x96xbf16>, vector<32x96xf32> -> vector<32x96xf32>
    %c0_20 = arith.constant 0 : index
    %c0_21 = arith.constant 0 : index
    %c0_22 = arith.constant 0 : index
    %41 = vector.load %arg8[%c0_20, %c0_21, %c0_22] : memref<2x1x96xf32, #tpu.memory_space<vmem>>, vector<1x1x96xf32>
    %42 = vector.shape_cast %41 : vector<1x1x96xf32> to vector<1x96xf32>
    %43 = vector.broadcast %42 : vector<1x96xf32> to vector<32x96xf32>
    %44 = arith.addf %40, %43 : vector<32x96xf32>
    %c0_23 = arith.constant 0 : index
    %c0_24 = arith.constant 0 : index
    %c0_25 = arith.constant 0 : index
    %45 = vector.load %arg9[%c0_23, %c0_24, %c0_25] : memref<2x32x32xf32, #tpu.memory_space<vmem>>, vector<1x32x32xf32>
    %46 = vector.shape_cast %45 : vector<1x32x32xf32> to vector<32x32xf32>
    %47 = vector.extract_strided_slice %44 {offsets = [0, 0], sizes = [32, 16], strides = [1, 1]} : vector<32x96xf32> to vector<32x16xf32>
    %48 = vector.shape_cast %47 : vector<32x16xf32> to vector<4x8x16xf32>
    %49 = vector.extract_strided_slice %44 {offsets = [0, 32], sizes = [32, 16], strides = [1, 1]} : vector<32x96xf32> to vector<32x16xf32>
    %50 = vector.shape_cast %49 : vector<32x16xf32> to vector<4x8x16xf32>
    %51 = vector.extract_strided_slice %44 {offsets = [0, 64], sizes = [32, 16], strides = [1, 1]} : vector<32x96xf32> to vector<32x16xf32>
    %52 = vector.shape_cast %51 : vector<32x16xf32> to vector<4x8x16xf32>
    %53 = arith.truncf %48 : vector<4x8x16xf32> to vector<4x8x16xbf16>
    %54 = arith.truncf %50 : vector<4x8x16xf32> to vector<4x8x16xbf16>
    "tpu.trace_start"() <{level = 10 : i32, message = "bqd,bkd->bqk"}> : () -> ()
    %cst_26 = arith.constant dense<0.000000e+00> : vector<4x8x8xf32>
    %55 = tpu.matmul %53, %54, %cst_26 {dimension_numbers = #tpu.dot_dimension_numbers<[2], [2], [1], [1], [0, 0, 0, 1, 1, 1], [0], [0]>} : vector<4x8x16xbf16>, vector<4x8x16xbf16>, vector<4x8x8xf32> -> vector<4x8x8xf32>
    "tpu.trace_stop"() : () -> ()
    %56 = vector.broadcast %35 : vector<4x1x8xf32> to vector<4x8x8xf32>
    %57 = arith.addf %55, %56 : vector<4x8x8xf32>
    %cst_27 = arith.constant dense<0xFF800000> : vector<4x8xf32>
    %58 = vector.multi_reduction <maximumf>, %57, %cst_27 [2] : vector<4x8x8xf32> to vector<4x8xf32>
    %59 = vector.shape_cast %58 : vector<4x8xf32> to vector<4x8x1xf32>
    %60 = vector.broadcast %59 : vector<4x8x1xf32> to vector<4x8x8xf32>
    %61 = arith.subf %57, %60 : vector<4x8x8xf32>
    %62 = math.exp %61 : vector<4x8x8xf32>
    %cst_28 = arith.constant dense<0.000000e+00> : vector<4x8xf32>
    %63 = vector.multi_reduction <add>, %62, %cst_28 [2] : vector<4x8x8xf32> to vector<4x8xf32>
    %64 = vector.shape_cast %63 : vector<4x8xf32> to vector<4x8x1xf32>
    %65 = tpu.reciprocal %64 {approx = true} : vector<4x8x1xf32> -> vector<4x8x1xf32>
    %66 = vector.broadcast %65 : vector<4x8x1xf32> to vector<4x8x8xf32>
    %67 = arith.mulf %62, %66 : vector<4x8x8xf32>
    %68 = arith.truncf %67 : vector<4x8x8xf32> to vector<4x8x8xbf16>
    %69 = arith.truncf %52 : vector<4x8x16xf32> to vector<4x8x16xbf16>
    "tpu.trace_start"() <{level = 10 : i32, message = "bqk,bkd->bqd"}> : () -> ()
    %cst_29 = arith.constant dense<0.000000e+00> : vector<4x8x16xf32>
    %70 = tpu.matmul %68, %69, %cst_29 {dimension_numbers = #tpu.dot_dimension_numbers<[2], [1], [1], [2], [0, 0, 0, 1, 1, 2], [0], [0]>} : vector<4x8x8xbf16>, vector<4x8x16xbf16>, vector<4x8x16xf32> -> vector<4x8x16xf32>
    "tpu.trace_stop"() : () -> ()
    %71 = vector.shape_cast %70 : vector<4x8x16xf32> to vector<32x16xf32>
    %72 = vector.extract_strided_slice %46 {offsets = [0, 0], sizes = [16, 32], strides = [1, 1]} : vector<32x32xf32> to vector<16x32xf32>
    %73 = arith.truncf %71 : vector<32x16xf32> to vector<32x16xbf16>
    %74 = arith.truncf %72 : vector<16x32xf32> to vector<16x32xbf16>
    %cst_30 = arith.constant dense<0.000000e+00> : vector<32x32xf32>
    %75 = tpu.matmul %73, %74, %cst_30 {dimension_numbers = #tpu.dot_dimension_numbers<[1], [0], [0], [1], [0, 0, 1, 1], [], []>} : vector<32x16xbf16>, vector<16x32xbf16>, vector<32x32xf32> -> vector<32x32xf32>
    %76 = vector.extract_strided_slice %44 {offsets = [0, 16], sizes = [32, 16], strides = [1, 1]} : vector<32x96xf32> to vector<32x16xf32>
    %77 = vector.shape_cast %76 : vector<32x16xf32> to vector<4x8x16xf32>
    %78 = vector.extract_strided_slice %44 {offsets = [0, 48], sizes = [32, 16], strides = [1, 1]} : vector<32x96xf32> to vector<32x16xf32>
    %79 = vector.shape_cast %78 : vector<32x16xf32> to vector<4x8x16xf32>
    %80 = vector.extract_strided_slice %44 {offsets = [0, 80], sizes = [32, 16], strides = [1, 1]} : vector<32x96xf32> to vector<32x16xf32>
    %81 = vector.shape_cast %80 : vector<32x16xf32> to vector<4x8x16xf32>
    %82 = arith.truncf %77 : vector<4x8x16xf32> to vector<4x8x16xbf16>
    %83 = arith.truncf %79 : vector<4x8x16xf32> to vector<4x8x16xbf16>
    "tpu.trace_start"() <{level = 10 : i32, message = "bqd,bkd->bqk"}> : () -> ()
    %cst_31 = arith.constant dense<0.000000e+00> : vector<4x8x8xf32>
    %84 = tpu.matmul %82, %83, %cst_31 {dimension_numbers = #tpu.dot_dimension_numbers<[2], [2], [1], [1], [0, 0, 0, 1, 1, 1], [0], [0]>} : vector<4x8x16xbf16>, vector<4x8x16xbf16>, vector<4x8x8xf32> -> vector<4x8x8xf32>
    "tpu.trace_stop"() : () -> ()
    %85 = vector.broadcast %35 : vector<4x1x8xf32> to vector<4x8x8xf32>
    %86 = arith.addf %84, %85 : vector<4x8x8xf32>
    %cst_32 = arith.constant dense<0xFF800000> : vector<4x8xf32>
    %87 = vector.multi_reduction <maximumf>, %86, %cst_32 [2] : vector<4x8x8xf32> to vector<4x8xf32>
    %88 = vector.shape_cast %87 : vector<4x8xf32> to vector<4x8x1xf32>
    %89 = vector.broadcast %88 : vector<4x8x1xf32> to vector<4x8x8xf32>
    %90 = arith.subf %86, %89 : vector<4x8x8xf32>
    %91 = math.exp %90 : vector<4x8x8xf32>
    %cst_33 = arith.constant dense<0.000000e+00> : vector<4x8xf32>
    %92 = vector.multi_reduction <add>, %91, %cst_33 [2] : vector<4x8x8xf32> to vector<4x8xf32>
    %93 = vector.shape_cast %92 : vector<4x8xf32> to vector<4x8x1xf32>
    %94 = tpu.reciprocal %93 {approx = true} : vector<4x8x1xf32> -> vector<4x8x1xf32>
    %95 = vector.broadcast %94 : vector<4x8x1xf32> to vector<4x8x8xf32>
    %96 = arith.mulf %91, %95 : vector<4x8x8xf32>
    %97 = arith.truncf %96 : vector<4x8x8xf32> to vector<4x8x8xbf16>
    %98 = arith.truncf %81 : vector<4x8x16xf32> to vector<4x8x16xbf16>
    "tpu.trace_start"() <{level = 10 : i32, message = "bqk,bkd->bqd"}> : () -> ()
    %cst_34 = arith.constant dense<0.000000e+00> : vector<4x8x16xf32>
    %99 = tpu.matmul %97, %98, %cst_34 {dimension_numbers = #tpu.dot_dimension_numbers<[2], [1], [1], [2], [0, 0, 0, 1, 1, 2], [0], [0]>} : vector<4x8x8xbf16>, vector<4x8x16xbf16>, vector<4x8x16xf32> -> vector<4x8x16xf32>
    "tpu.trace_stop"() : () -> ()
    %100 = vector.shape_cast %99 : vector<4x8x16xf32> to vector<32x16xf32>
    %101 = vector.extract_strided_slice %46 {offsets = [16, 0], sizes = [16, 32], strides = [1, 1]} : vector<32x32xf32> to vector<16x32xf32>
    %102 = arith.truncf %100 : vector<32x16xf32> to vector<32x16xbf16>
    %103 = arith.truncf %101 : vector<16x32xf32> to vector<16x32xbf16>
    %cst_35 = arith.constant dense<0.000000e+00> : vector<32x32xf32>
    %104 = tpu.matmul %102, %103, %cst_35 {dimension_numbers = #tpu.dot_dimension_numbers<[1], [0], [0], [1], [0, 0, 1, 1], [], []>} : vector<32x16xbf16>, vector<16x32xbf16>, vector<32x32xf32> -> vector<32x32xf32>
    %105 = arith.addf %75, %104 : vector<32x32xf32>
    %c0_36 = arith.constant 0 : index
    %c0_37 = arith.constant 0 : index
    %c0_38 = arith.constant 0 : index
    %106 = vector.load %arg10[%c0_36, %c0_37, %c0_38] : memref<2x1x32xf32, #tpu.memory_space<vmem>>, vector<1x1x32xf32>
    %107 = vector.shape_cast %106 : vector<1x1x32xf32> to vector<1x32xf32>
    %108 = vector.broadcast %107 : vector<1x32xf32> to vector<32x32xf32>
    %109 = arith.addf %105, %108 : vector<32x32xf32>
    %110 = arith.addf %109, %33 : vector<32x32xf32>
    %c0_39 = arith.constant 0 : index
    %c0_40 = arith.constant 0 : index
    %c0_41 = arith.constant 0 : index
    %111 = vector.load %arg11[%c0_39, %c0_40, %c0_41] : memref<2x1x32xf32, #tpu.memory_space<vmem>>, vector<1x1x32xf32>
    %112 = vector.shape_cast %111 : vector<1x1x32xf32> to vector<1x32xf32>
    %c0_42 = arith.constant 0 : index
    %c0_43 = arith.constant 0 : index
    %c0_44 = arith.constant 0 : index
    %113 = vector.load %arg12[%c0_42, %c0_43, %c0_44] : memref<2x1x32xf32, #tpu.memory_space<vmem>>, vector<1x1x32xf32>
    %114 = vector.shape_cast %113 : vector<1x1x32xf32> to vector<1x32xf32>
    %cst_45 = arith.constant dense<0.000000e+00> : vector<32xf32>
    %115 = vector.multi_reduction <add>, %110, %cst_45 [1] : vector<32x32xf32> to vector<32xf32>
    %116 = vector.shape_cast %115 : vector<32xf32> to vector<32x1xf32>
    %cst_46 = arith.constant 3.200000e+01 : f32
    %117 = vector.broadcast %cst_46 : f32 to vector<32x1xf32>
    %118 = arith.divf %116, %117 : vector<32x1xf32>
    %119 = vector.broadcast %118 : vector<32x1xf32> to vector<32x32xf32>
    %120 = arith.subf %110, %119 : vector<32x32xf32>
    %121 = arith.mulf %120, %120 : vector<32x32xf32>
    %cst_47 = arith.constant dense<0.000000e+00> : vector<32xf32>
    %122 = vector.multi_reduction <add>, %121, %cst_47 [1] : vector<32x32xf32> to vector<32xf32>
    %123 = vector.shape_cast %122 : vector<32xf32> to vector<32x1xf32>
    %cst_48 = arith.constant 3.200000e+01 : f32
    %124 = vector.broadcast %cst_48 : f32 to vector<32x1xf32>
    %125 = arith.divf %123, %124 : vector<32x1xf32>
    %126 = vector.broadcast %118 : vector<32x1xf32> to vector<32x32xf32>
    %127 = arith.subf %110, %126 : vector<32x32xf32>
    %cst_49 = arith.constant 9.99999996E-13 : f32
    %128 = vector.broadcast %cst_49 : f32 to vector<32x1xf32>
    %129 = arith.addf %125, %128 : vector<32x1xf32>
    %130 = math.rsqrt %129 : vector<32x1xf32>
    %131 = vector.broadcast %130 : vector<32x1xf32> to vector<32x32xf32>
    %132 = arith.mulf %127, %131 : vector<32x32xf32>
    %133 = vector.broadcast %112 : vector<1x32xf32> to vector<32x32xf32>
    %134 = arith.mulf %132, %133 : vector<32x32xf32>
    %135 = vector.broadcast %114 : vector<1x32xf32> to vector<32x32xf32>
    %136 = arith.addf %134, %135 : vector<32x32xf32>
    %c0_50 = arith.constant 0 : index
    %c0_51 = arith.constant 0 : index
    %c0_52 = arith.constant 0 : index
    %137 = vector.load %arg13[%c0_50, %c0_51, %c0_52] : memref<2x32x64xf32, #tpu.memory_space<vmem>>, vector<1x32x64xf32>
    %138 = vector.shape_cast %137 : vector<1x32x64xf32> to vector<32x64xf32>
    %139 = arith.truncf %136 : vector<32x32xf32> to vector<32x32xbf16>
    %140 = arith.truncf %138 : vector<32x64xf32> to vector<32x64xbf16>
    %cst_53 = arith.constant dense<0.000000e+00> : vector<32x64xf32>
    %141 = tpu.matmul %139, %140, %cst_53 {dimension_numbers = #tpu.dot_dimension_numbers<[1], [0], [0], [1], [0, 0, 1, 1], [], []>} : vector<32x32xbf16>, vector<32x64xbf16>, vector<32x64xf32> -> vector<32x64xf32>
    %c0_54 = arith.constant 0 : index
    %c0_55 = arith.constant 0 : index
    %c0_56 = arith.constant 0 : index
    %142 = vector.load %arg14[%c0_54, %c0_55, %c0_56] : memref<2x1x64xf32, #tpu.memory_space<vmem>>, vector<1x1x64xf32>
    %143 = vector.shape_cast %142 : vector<1x1x64xf32> to vector<1x64xf32>
    %144 = vector.broadcast %143 : vector<1x64xf32> to vector<32x64xf32>
    %145 = arith.addf %141, %144 : vector<32x64xf32>
    %cst_57 = arith.constant 5.000000e-01 : f32
    %146 = vector.broadcast %cst_57 : f32 to vector<32x64xf32>
    %147 = arith.mulf %146, %145 : vector<32x64xf32>
    %cst_58 = arith.constant 4.471500e-02 : f32
    %148 = vector.broadcast %cst_58 : f32 to vector<32x64xf32>
    %149 = arith.mulf %148, %145 : vector<32x64xf32>
    %150 = arith.mulf %149, %145 : vector<32x64xf32>
    %151 = arith.mulf %150, %145 : vector<32x64xf32>
    %152 = arith.addf %145, %151 : vector<32x64xf32>
    %cst_59 = arith.constant 0.797884583 : f32
    %153 = vector.broadcast %cst_59 : f32 to vector<32x64xf32>
    %154 = arith.mulf %153, %152 : vector<32x64xf32>
    %155 = math.tanh %154 : vector<32x64xf32>
    %cst_60 = arith.constant 1.000000e+00 : f32
    %156 = vector.broadcast %cst_60 : f32 to vector<32x64xf32>
    %157 = arith.addf %156, %155 : vector<32x64xf32>
    %158 = arith.mulf %147, %157 : vector<32x64xf32>
    %c0_61 = arith.constant 0 : index
    %c0_62 = arith.constant 0 : index
    %c0_63 = arith.constant 0 : index
    %159 = vector.load %arg15[%c0_61, %c0_62, %c0_63] : memref<2x64x32xf32, #tpu.memory_space<vmem>>, vector<1x64x32xf32>
    %160 = vector.shape_cast %159 : vector<1x64x32xf32> to vector<64x32xf32>
    %161 = arith.truncf %158 : vector<32x64xf32> to vector<32x64xbf16>
    %162 = arith.truncf %160 : vector<64x32xf32> to vector<64x32xbf16>
    %cst_64 = arith.constant dense<0.000000e+00> : vector<32x32xf32>
    %163 = tpu.matmul %161, %162, %cst_64 {dimension_numbers = #tpu.dot_dimension_numbers<[1], [0], [0], [1], [0, 0, 1, 1], [], []>} : vector<32x64xbf16>, vector<64x32xbf16>, vector<32x32xf32> -> vector<32x32xf32>
    %c0_65 = arith.constant 0 : index
    %c0_66 = arith.constant 0 : index
    %c0_67 = arith.constant 0 : index
    %164 = vector.load %arg16[%c0_65, %c0_66, %c0_67] : memref<2x1x32xf32, #tpu.memory_space<vmem>>, vector<1x1x32xf32>
    %165 = vector.shape_cast %164 : vector<1x1x32xf32> to vector<1x32xf32>
    %166 = vector.broadcast %165 : vector<1x32xf32> to vector<32x32xf32>
    %167 = arith.addf %163, %166 : vector<32x32xf32>
    %168 = arith.addf %167, %136 : vector<32x32xf32>
    %c0_68 = arith.constant 0 : index
    %c0_69 = arith.constant 0 : index
    %c0_70 = arith.constant 0 : index
    %169 = vector.load %arg17[%c0_68, %c0_69, %c0_70] : memref<2x1x32xf32, #tpu.memory_space<vmem>>, vector<1x1x32xf32>
    %170 = vector.shape_cast %169 : vector<1x1x32xf32> to vector<1x32xf32>
    %c0_71 = arith.constant 0 : index
    %c0_72 = arith.constant 0 : index
    %c0_73 = arith.constant 0 : index
    %171 = vector.load %arg18[%c0_71, %c0_72, %c0_73] : memref<2x1x32xf32, #tpu.memory_space<vmem>>, vector<1x1x32xf32>
    %172 = vector.shape_cast %171 : vector<1x1x32xf32> to vector<1x32xf32>
    %cst_74 = arith.constant dense<0.000000e+00> : vector<32xf32>
    %173 = vector.multi_reduction <add>, %168, %cst_74 [1] : vector<32x32xf32> to vector<32xf32>
    %174 = vector.shape_cast %173 : vector<32xf32> to vector<32x1xf32>
    %cst_75 = arith.constant 3.200000e+01 : f32
    %175 = vector.broadcast %cst_75 : f32 to vector<32x1xf32>
    %176 = arith.divf %174, %175 : vector<32x1xf32>
    %177 = vector.broadcast %176 : vector<32x1xf32> to vector<32x32xf32>
    %178 = arith.subf %168, %177 : vector<32x32xf32>
    %179 = arith.mulf %178, %178 : vector<32x32xf32>
    %cst_76 = arith.constant dense<0.000000e+00> : vector<32xf32>
    %180 = vector.multi_reduction <add>, %179, %cst_76 [1] : vector<32x32xf32> to vector<32xf32>
    %181 = vector.shape_cast %180 : vector<32xf32> to vector<32x1xf32>
    %cst_77 = arith.constant 3.200000e+01 : f32
    %182 = vector.broadcast %cst_77 : f32 to vector<32x1xf32>
    %183 = arith.divf %181, %182 : vector<32x1xf32>
    %184 = vector.broadcast %176 : vector<32x1xf32> to vector<32x32xf32>
    %185 = arith.subf %168, %184 : vector<32x32xf32>
    %cst_78 = arith.constant 9.99999996E-13 : f32
    %186 = vector.broadcast %cst_78 : f32 to vector<32x1xf32>
    %187 = arith.addf %183, %186 : vector<32x1xf32>
    %188 = math.rsqrt %187 : vector<32x1xf32>
    %189 = vector.broadcast %188 : vector<32x1xf32> to vector<32x32xf32>
    %190 = arith.mulf %185, %189 : vector<32x32xf32>
    %191 = vector.broadcast %170 : vector<1x32xf32> to vector<32x32xf32>
    %192 = arith.mulf %190, %191 : vector<32x32xf32>
    %193 = vector.broadcast %172 : vector<1x32xf32> to vector<32x32xf32>
    %194 = arith.addf %192, %193 : vector<32x32xf32>
    %c1 = arith.constant 1 : index
    %c0_79 = arith.constant 0 : index
    %c0_80 = arith.constant 0 : index
    %195 = vector.load %arg7[%c1, %c0_79, %c0_80] : memref<2x32x96xf32, #tpu.memory_space<vmem>>, vector<1x32x96xf32>
    %196 = vector.shape_cast %195 : vector<1x32x96xf32> to vector<32x96xf32>
    %197 = arith.truncf %194 : vector<32x32xf32> to vector<32x32xbf16>
    %198 = arith.truncf %196 : vector<32x96xf32> to vector<32x96xbf16>
    %cst_81 = arith.constant dense<0.000000e+00> : vector<32x96xf32>
    %199 = tpu.matmul %197, %198, %cst_81 {dimension_numbers = #tpu.dot_dimension_numbers<[1], [0], [0], [1], [0, 0, 1, 1], [], []>} : vector<32x32xbf16>, vector<32x96xbf16>, vector<32x96xf32> -> vector<32x96xf32>
    %c1_82 = arith.constant 1 : index
    %c0_83 = arith.constant 0 : index
    %c0_84 = arith.constant 0 : index
    %200 = vector.load %arg8[%c1_82, %c0_83, %c0_84] : memref<2x1x96xf32, #tpu.memory_space<vmem>>, vector<1x1x96xf32>
    %201 = vector.shape_cast %200 : vector<1x1x96xf32> to vector<1x96xf32>
    %202 = vector.broadcast %201 : vector<1x96xf32> to vector<32x96xf32>
    %203 = arith.addf %199, %202 : vector<32x96xf32>
    %c1_85 = arith.constant 1 : index
    %c0_86 = arith.constant 0 : index
    %c0_87 = arith.constant 0 : index
    %204 = vector.load %arg9[%c1_85, %c0_86, %c0_87] : memref<2x32x32xf32, #tpu.memory_space<vmem>>, vector<1x32x32xf32>
    %205 = vector.shape_cast %204 : vector<1x32x32xf32> to vector<32x32xf32>
    %206 = vector.extract_strided_slice %203 {offsets = [0, 0], sizes = [32, 16], strides = [1, 1]} : vector<32x96xf32> to vector<32x16xf32>
    %207 = vector.shape_cast %206 : vector<32x16xf32> to vector<4x8x16xf32>
    %208 = vector.extract_strided_slice %203 {offsets = [0, 32], sizes = [32, 16], strides = [1, 1]} : vector<32x96xf32> to vector<32x16xf32>
    %209 = vector.shape_cast %208 : vector<32x16xf32> to vector<4x8x16xf32>
    %210 = vector.extract_strided_slice %203 {offsets = [0, 64], sizes = [32, 16], strides = [1, 1]} : vector<32x96xf32> to vector<32x16xf32>
    %211 = vector.shape_cast %210 : vector<32x16xf32> to vector<4x8x16xf32>
    %212 = arith.truncf %207 : vector<4x8x16xf32> to vector<4x8x16xbf16>
    %213 = arith.truncf %209 : vector<4x8x16xf32> to vector<4x8x16xbf16>
    "tpu.trace_start"() <{level = 10 : i32, message = "bqd,bkd->bqk"}> : () -> ()
    %cst_88 = arith.constant dense<0.000000e+00> : vector<4x8x8xf32>
    %214 = tpu.matmul %212, %213, %cst_88 {dimension_numbers = #tpu.dot_dimension_numbers<[2], [2], [1], [1], [0, 0, 0, 1, 1, 1], [0], [0]>} : vector<4x8x16xbf16>, vector<4x8x16xbf16>, vector<4x8x8xf32> -> vector<4x8x8xf32>
    "tpu.trace_stop"() : () -> ()
    %215 = vector.broadcast %35 : vector<4x1x8xf32> to vector<4x8x8xf32>
    %216 = arith.addf %214, %215 : vector<4x8x8xf32>
    %cst_89 = arith.constant dense<0xFF800000> : vector<4x8xf32>
    %217 = vector.multi_reduction <maximumf>, %216, %cst_89 [2] : vector<4x8x8xf32> to vector<4x8xf32>
    %218 = vector.shape_cast %217 : vector<4x8xf32> to vector<4x8x1xf32>
    %219 = vector.broadcast %218 : vector<4x8x1xf32> to vector<4x8x8xf32>
    %220 = arith.subf %216, %219 : vector<4x8x8xf32>
    %221 = math.exp %220 : vector<4x8x8xf32>
    %cst_90 = arith.constant dense<0.000000e+00> : vector<4x8xf32>
    %222 = vector.multi_reduction <add>, %221, %cst_90 [2] : vector<4x8x8xf32> to vector<4x8xf32>
    %223 = vector.shape_cast %222 : vector<4x8xf32> to vector<4x8x1xf32>
    %224 = tpu.reciprocal %223 {approx = true} : vector<4x8x1xf32> -> vector<4x8x1xf32>
    %225 = vector.broadcast %224 : vector<4x8x1xf32> to vector<4x8x8xf32>
    %226 = arith.mulf %221, %225 : vector<4x8x8xf32>
    %227 = arith.truncf %226 : vector<4x8x8xf32> to vector<4x8x8xbf16>
    %228 = arith.truncf %211 : vector<4x8x16xf32> to vector<4x8x16xbf16>
    "tpu.trace_start"() <{level = 10 : i32, message = "bqk,bkd->bqd"}> : () -> ()
    %cst_91 = arith.constant dense<0.000000e+00> : vector<4x8x16xf32>
    %229 = tpu.matmul %227, %228, %cst_91 {dimension_numbers = #tpu.dot_dimension_numbers<[2], [1], [1], [2], [0, 0, 0, 1, 1, 2], [0], [0]>} : vector<4x8x8xbf16>, vector<4x8x16xbf16>, vector<4x8x16xf32> -> vector<4x8x16xf32>
    "tpu.trace_stop"() : () -> ()
    %230 = vector.shape_cast %229 : vector<4x8x16xf32> to vector<32x16xf32>
    %231 = vector.extract_strided_slice %205 {offsets = [0, 0], sizes = [16, 32], strides = [1, 1]} : vector<32x32xf32> to vector<16x32xf32>
    %232 = arith.truncf %230 : vector<32x16xf32> to vector<32x16xbf16>
    %233 = arith.truncf %231 : vector<16x32xf32> to vector<16x32xbf16>
    %cst_92 = arith.constant dense<0.000000e+00> : vector<32x32xf32>
    %234 = tpu.matmul %232, %233, %cst_92 {dimension_numbers = #tpu.dot_dimension_numbers<[1], [0], [0], [1], [0, 0, 1, 1], [], []>} : vector<32x16xbf16>, vector<16x32xbf16>, vector<32x32xf32> -> vector<32x32xf32>
    %235 = vector.extract_strided_slice %203 {offsets = [0, 16], sizes = [32, 16], strides = [1, 1]} : vector<32x96xf32> to vector<32x16xf32>
    %236 = vector.shape_cast %235 : vector<32x16xf32> to vector<4x8x16xf32>
    %237 = vector.extract_strided_slice %203 {offsets = [0, 48], sizes = [32, 16], strides = [1, 1]} : vector<32x96xf32> to vector<32x16xf32>
    %238 = vector.shape_cast %237 : vector<32x16xf32> to vector<4x8x16xf32>
    %239 = vector.extract_strided_slice %203 {offsets = [0, 80], sizes = [32, 16], strides = [1, 1]} : vector<32x96xf32> to vector<32x16xf32>
    %240 = vector.shape_cast %239 : vector<32x16xf32> to vector<4x8x16xf32>
    %241 = arith.truncf %236 : vector<4x8x16xf32> to vector<4x8x16xbf16>
    %242 = arith.truncf %238 : vector<4x8x16xf32> to vector<4x8x16xbf16>
    "tpu.trace_start"() <{level = 10 : i32, message = "bqd,bkd->bqk"}> : () -> ()
    %cst_93 = arith.constant dense<0.000000e+00> : vector<4x8x8xf32>
    %243 = tpu.matmul %241, %242, %cst_93 {dimension_numbers = #tpu.dot_dimension_numbers<[2], [2], [1], [1], [0, 0, 0, 1, 1, 1], [0], [0]>} : vector<4x8x16xbf16>, vector<4x8x16xbf16>, vector<4x8x8xf32> -> vector<4x8x8xf32>
    "tpu.trace_stop"() : () -> ()
    %244 = vector.broadcast %35 : vector<4x1x8xf32> to vector<4x8x8xf32>
    %245 = arith.addf %243, %244 : vector<4x8x8xf32>
    %cst_94 = arith.constant dense<0xFF800000> : vector<4x8xf32>
    %246 = vector.multi_reduction <maximumf>, %245, %cst_94 [2] : vector<4x8x8xf32> to vector<4x8xf32>
    %247 = vector.shape_cast %246 : vector<4x8xf32> to vector<4x8x1xf32>
    %248 = vector.broadcast %247 : vector<4x8x1xf32> to vector<4x8x8xf32>
    %249 = arith.subf %245, %248 : vector<4x8x8xf32>
    %250 = math.exp %249 : vector<4x8x8xf32>
    %cst_95 = arith.constant dense<0.000000e+00> : vector<4x8xf32>
    %251 = vector.multi_reduction <add>, %250, %cst_95 [2] : vector<4x8x8xf32> to vector<4x8xf32>
    %252 = vector.shape_cast %251 : vector<4x8xf32> to vector<4x8x1xf32>
    %253 = tpu.reciprocal %252 {approx = true} : vector<4x8x1xf32> -> vector<4x8x1xf32>
    %254 = vector.broadcast %253 : vector<4x8x1xf32> to vector<4x8x8xf32>
    %255 = arith.mulf %250, %254 : vector<4x8x8xf32>
    %256 = arith.truncf %255 : vector<4x8x8xf32> to vector<4x8x8xbf16>
    %257 = arith.truncf %240 : vector<4x8x16xf32> to vector<4x8x16xbf16>
    "tpu.trace_start"() <{level = 10 : i32, message = "bqk,bkd->bqd"}> : () -> ()
    %cst_96 = arith.constant dense<0.000000e+00> : vector<4x8x16xf32>
    %258 = tpu.matmul %256, %257, %cst_96 {dimension_numbers = #tpu.dot_dimension_numbers<[2], [1], [1], [2], [0, 0, 0, 1, 1, 2], [0], [0]>} : vector<4x8x8xbf16>, vector<4x8x16xbf16>, vector<4x8x16xf32> -> vector<4x8x16xf32>
    "tpu.trace_stop"() : () -> ()
    %259 = vector.shape_cast %258 : vector<4x8x16xf32> to vector<32x16xf32>
    %260 = vector.extract_strided_slice %205 {offsets = [16, 0], sizes = [16, 32], strides = [1, 1]} : vector<32x32xf32> to vector<16x32xf32>
    %261 = arith.truncf %259 : vector<32x16xf32> to vector<32x16xbf16>
    %262 = arith.truncf %260 : vector<16x32xf32> to vector<16x32xbf16>
    %cst_97 = arith.constant dense<0.000000e+00> : vector<32x32xf32>
    %263 = tpu.matmul %261, %262, %cst_97 {dimension_numbers = #tpu.dot_dimension_numbers<[1], [0], [0], [1], [0, 0, 1, 1], [], []>} : vector<32x16xbf16>, vector<16x32xbf16>, vector<32x32xf32> -> vector<32x32xf32>
    %264 = arith.addf %234, %263 : vector<32x32xf32>
    %c1_98 = arith.constant 1 : index
    %c0_99 = arith.constant 0 : index
    %c0_100 = arith.constant 0 : index
    %265 = vector.load %arg10[%c1_98, %c0_99, %c0_100] : memref<2x1x32xf32, #tpu.memory_space<vmem>>, vector<1x1x32xf32>
    %266 = vector.shape_cast %265 : vector<1x1x32xf32> to vector<1x32xf32>
    %267 = vector.broadcast %266 : vector<1x32xf32> to vector<32x32xf32>
    %268 = arith.addf %264, %267 : vector<32x32xf32>
    %269 = arith.addf %268, %194 : vector<32x32xf32>
    %c1_101 = arith.constant 1 : index
    %c0_102 = arith.constant 0 : index
    %c0_103 = arith.constant 0 : index
    %270 = vector.load %arg11[%c1_101, %c0_102, %c0_103] : memref<2x1x32xf32, #tpu.memory_space<vmem>>, vector<1x1x32xf32>
    %271 = vector.shape_cast %270 : vector<1x1x32xf32> to vector<1x32xf32>
    %c1_104 = arith.constant 1 : index
    %c0_105 = arith.constant 0 : index
    %c0_106 = arith.constant 0 : index
    %272 = vector.load %arg12[%c1_104, %c0_105, %c0_106] : memref<2x1x32xf32, #tpu.memory_space<vmem>>, vector<1x1x32xf32>
    %273 = vector.shape_cast %272 : vector<1x1x32xf32> to vector<1x32xf32>
    %cst_107 = arith.constant dense<0.000000e+00> : vector<32xf32>
    %274 = vector.multi_reduction <add>, %269, %cst_107 [1] : vector<32x32xf32> to vector<32xf32>
    %275 = vector.shape_cast %274 : vector<32xf32> to vector<32x1xf32>
    %cst_108 = arith.constant 3.200000e+01 : f32
    %276 = vector.broadcast %cst_108 : f32 to vector<32x1xf32>
    %277 = arith.divf %275, %276 : vector<32x1xf32>
    %278 = vector.broadcast %277 : vector<32x1xf32> to vector<32x32xf32>
    %279 = arith.subf %269, %278 : vector<32x32xf32>
    %280 = arith.mulf %279, %279 : vector<32x32xf32>
    %cst_109 = arith.constant dense<0.000000e+00> : vector<32xf32>
    %281 = vector.multi_reduction <add>, %280, %cst_109 [1] : vector<32x32xf32> to vector<32xf32>
    %282 = vector.shape_cast %281 : vector<32xf32> to vector<32x1xf32>
    %cst_110 = arith.constant 3.200000e+01 : f32
    %283 = vector.broadcast %cst_110 : f32 to vector<32x1xf32>
    %284 = arith.divf %282, %283 : vector<32x1xf32>
    %285 = vector.broadcast %277 : vector<32x1xf32> to vector<32x32xf32>
    %286 = arith.subf %269, %285 : vector<32x32xf32>
    %cst_111 = arith.constant 9.99999996E-13 : f32
    %287 = vector.broadcast %cst_111 : f32 to vector<32x1xf32>
    %288 = arith.addf %284, %287 : vector<32x1xf32>
    %289 = math.rsqrt %288 : vector<32x1xf32>
    %290 = vector.broadcast %289 : vector<32x1xf32> to vector<32x32xf32>
    %291 = arith.mulf %286, %290 : vector<32x32xf32>
    %292 = vector.broadcast %271 : vector<1x32xf32> to vector<32x32xf32>
    %293 = arith.mulf %291, %292 : vector<32x32xf32>
    %294 = vector.broadcast %273 : vector<1x32xf32> to vector<32x32xf32>
    %295 = arith.addf %293, %294 : vector<32x32xf32>
    %c1_112 = arith.constant 1 : index
    %c0_113 = arith.constant 0 : index
    %c0_114 = arith.constant 0 : index
    %296 = vector.load %arg13[%c1_112, %c0_113, %c0_114] : memref<2x32x64xf32, #tpu.memory_space<vmem>>, vector<1x32x64xf32>
    %297 = vector.shape_cast %296 : vector<1x32x64xf32> to vector<32x64xf32>
    %298 = arith.truncf %295 : vector<32x32xf32> to vector<32x32xbf16>
    %299 = arith.truncf %297 : vector<32x64xf32> to vector<32x64xbf16>
    %cst_115 = arith.constant dense<0.000000e+00> : vector<32x64xf32>
    %300 = tpu.matmul %298, %299, %cst_115 {dimension_numbers = #tpu.dot_dimension_numbers<[1], [0], [0], [1], [0, 0, 1, 1], [], []>} : vector<32x32xbf16>, vector<32x64xbf16>, vector<32x64xf32> -> vector<32x64xf32>
    %c1_116 = arith.constant 1 : index
    %c0_117 = arith.constant 0 : index
    %c0_118 = arith.constant 0 : index
    %301 = vector.load %arg14[%c1_116, %c0_117, %c0_118] : memref<2x1x64xf32, #tpu.memory_space<vmem>>, vector<1x1x64xf32>
    %302 = vector.shape_cast %301 : vector<1x1x64xf32> to vector<1x64xf32>
    %303 = vector.broadcast %302 : vector<1x64xf32> to vector<32x64xf32>
    %304 = arith.addf %300, %303 : vector<32x64xf32>
    %cst_119 = arith.constant 5.000000e-01 : f32
    %305 = vector.broadcast %cst_119 : f32 to vector<32x64xf32>
    %306 = arith.mulf %305, %304 : vector<32x64xf32>
    %cst_120 = arith.constant 4.471500e-02 : f32
    %307 = vector.broadcast %cst_120 : f32 to vector<32x64xf32>
    %308 = arith.mulf %307, %304 : vector<32x64xf32>
    %309 = arith.mulf %308, %304 : vector<32x64xf32>
    %310 = arith.mulf %309, %304 : vector<32x64xf32>
    %311 = arith.addf %304, %310 : vector<32x64xf32>
    %cst_121 = arith.constant 0.797884583 : f32
    %312 = vector.broadcast %cst_121 : f32 to vector<32x64xf32>
    %313 = arith.mulf %312, %311 : vector<32x64xf32>
    %314 = math.tanh %313 : vector<32x64xf32>
    %cst_122 = arith.constant 1.000000e+00 : f32
    %315 = vector.broadcast %cst_122 : f32 to vector<32x64xf32>
    %316 = arith.addf %315, %314 : vector<32x64xf32>
    %317 = arith.mulf %306, %316 : vector<32x64xf32>
    %c1_123 = arith.constant 1 : index
    %c0_124 = arith.constant 0 : index
    %c0_125 = arith.constant 0 : index
    %318 = vector.load %arg15[%c1_123, %c0_124, %c0_125] : memref<2x64x32xf32, #tpu.memory_space<vmem>>, vector<1x64x32xf32>
    %319 = vector.shape_cast %318 : vector<1x64x32xf32> to vector<64x32xf32>
    %320 = arith.truncf %317 : vector<32x64xf32> to vector<32x64xbf16>
    %321 = arith.truncf %319 : vector<64x32xf32> to vector<64x32xbf16>
    %cst_126 = arith.constant dense<0.000000e+00> : vector<32x32xf32>
    %322 = tpu.matmul %320, %321, %cst_126 {dimension_numbers = #tpu.dot_dimension_numbers<[1], [0], [0], [1], [0, 0, 1, 1], [], []>} : vector<32x64xbf16>, vector<64x32xbf16>, vector<32x32xf32> -> vector<32x32xf32>
    %c1_127 = arith.constant 1 : index
    %c0_128 = arith.constant 0 : index
    %c0_129 = arith.constant 0 : index
    %323 = vector.load %arg16[%c1_127, %c0_128, %c0_129] : memref<2x1x32xf32, #tpu.memory_space<vmem>>, vector<1x1x32xf32>
    %324 = vector.shape_cast %323 : vector<1x1x32xf32> to vector<1x32xf32>
    %325 = vector.broadcast %324 : vector<1x32xf32> to vector<32x32xf32>
    %326 = arith.addf %322, %325 : vector<32x32xf32>
    %327 = arith.addf %326, %295 : vector<32x32xf32>
    %c1_130 = arith.constant 1 : index
    %c0_131 = arith.constant 0 : index
    %c0_132 = arith.constant 0 : index
    %328 = vector.load %arg17[%c1_130, %c0_131, %c0_132] : memref<2x1x32xf32, #tpu.memory_space<vmem>>, vector<1x1x32xf32>
    %329 = vector.shape_cast %328 : vector<1x1x32xf32> to vector<1x32xf32>
    %c1_133 = arith.constant 1 : index
    %c0_134 = arith.constant 0 : index
    %c0_135 = arith.constant 0 : index
    %330 = vector.load %arg18[%c1_133, %c0_134, %c0_135] : memref<2x1x32xf32, #tpu.memory_space<vmem>>, vector<1x1x32xf32>
    %331 = vector.shape_cast %330 : vector<1x1x32xf32> to vector<1x32xf32>
    %cst_136 = arith.constant dense<0.000000e+00> : vector<32xf32>
    %332 = vector.multi_reduction <add>, %327, %cst_136 [1] : vector<32x32xf32> to vector<32xf32>
    %333 = vector.shape_cast %332 : vector<32xf32> to vector<32x1xf32>
    %cst_137 = arith.constant 3.200000e+01 : f32
    %334 = vector.broadcast %cst_137 : f32 to vector<32x1xf32>
    %335 = arith.divf %333, %334 : vector<32x1xf32>
    %336 = vector.broadcast %335 : vector<32x1xf32> to vector<32x32xf32>
    %337 = arith.subf %327, %336 : vector<32x32xf32>
    %338 = arith.mulf %337, %337 : vector<32x32xf32>
    %cst_138 = arith.constant dense<0.000000e+00> : vector<32xf32>
    %339 = vector.multi_reduction <add>, %338, %cst_138 [1] : vector<32x32xf32> to vector<32xf32>
    %340 = vector.shape_cast %339 : vector<32xf32> to vector<32x1xf32>
    %cst_139 = arith.constant 3.200000e+01 : f32
    %341 = vector.broadcast %cst_139 : f32 to vector<32x1xf32>
    %342 = arith.divf %340, %341 : vector<32x1xf32>
    %343 = vector.broadcast %335 : vector<32x1xf32> to vector<32x32xf32>
    %344 = arith.subf %327, %343 : vector<32x32xf32>
    %cst_140 = arith.constant 9.99999996E-13 : f32
    %345 = vector.broadcast %cst_140 : f32 to vector<32x1xf32>
    %346 = arith.addf %342, %345 : vector<32x1xf32>
    %347 = math.rsqrt %346 : vector<32x1xf32>
    %348 = vector.broadcast %347 : vector<32x1xf32> to vector<32x32xf32>
    %349 = arith.mulf %344, %348 : vector<32x32xf32>
    %350 = vector.broadcast %329 : vector<1x32xf32> to vector<32x32xf32>
    %351 = arith.mulf %349, %350 : vector<32x32xf32>
    %352 = vector.broadcast %331 : vector<1x32xf32> to vector<32x32xf32>
    %353 = arith.addf %351, %352 : vector<32x32xf32>
    %354 = vector.shape_cast %353 : vector<32x32xf32> to vector<4x8x32xf32>
    %355 = vector.extract_strided_slice %354 {offsets = [0, 0, 0], sizes = [4, 1, 32], strides = [1, 1, 1]} : vector<4x8x32xf32> to vector<4x1x32xf32>
    %356 = vector.shape_cast %355 : vector<4x1x32xf32> to vector<4x32xf32>
    %c0_141 = arith.constant 0 : index
    %c0_142 = arith.constant 0 : index
    %357 = vector.load %arg19[%c0_141, %c0_142] : memref<32x32xf32, #tpu.memory_space<vmem>>, vector<32x32xf32>
    %358 = arith.truncf %356 : vector<4x32xf32> to vector<4x32xbf16>
    %359 = arith.truncf %357 : vector<32x32xf32> to vector<32x32xbf16>
    %cst_143 = arith.constant dense<0.000000e+00> : vector<4x32xf32>
    %360 = tpu.matmul %358, %359, %cst_143 {dimension_numbers = #tpu.dot_dimension_numbers<[1], [0], [0], [1], [0, 0, 1, 1], [], []>} : vector<4x32xbf16>, vector<32x32xbf16>, vector<4x32xf32> -> vector<4x32xf32>
    %c0_144 = arith.constant 0 : index
    %c0_145 = arith.constant 0 : index
    %361 = vector.load %arg20[%c0_144, %c0_145] : memref<1x32xf32, #tpu.memory_space<vmem>>, vector<1x32xf32>
    %362 = vector.broadcast %361 : vector<1x32xf32> to vector<4x32xf32>
    %363 = arith.addf %360, %362 : vector<4x32xf32>
    %364 = math.tanh %363 : vector<4x32xf32>
    %c0_146 = arith.constant 0 : index
    %c0_147 = arith.constant 0 : index
    %365 = vector.load %arg23[%c0_146, %c0_147] : memref<32x32xf32, #tpu.memory_space<vmem>>, vector<32x32xf32>
    %366 = arith.truncf %364 : vector<4x32xf32> to vector<4x32xbf16>
    %367 = arith.truncf %365 : vector<32x32xf32> to vector<32x32xbf16>
    %cst_148 = arith.constant dense<0.000000e+00> : vector<4x32xf32>
    %368 = tpu.matmul %366, %367, %cst_148 {dimension_numbers = #tpu.dot_dimension_numbers<[1], [0], [0], [1], [0, 0, 1, 1], [], []>} : vector<4x32xbf16>, vector<32x32xbf16>, vector<4x32xf32> -> vector<4x32xf32>
    %c0_149 = arith.constant 0 : index
    %c0_150 = arith.constant 0 : index
    %369 = vector.load %arg21[%c0_149, %c0_150] : memref<4x1xf32, #tpu.memory_space<vmem>>, vector<4x1xf32>
    %c0_151 = arith.constant 0 : index
    %c0_152 = arith.constant 0 : index
    %370 = vector.load %arg24[%c0_151, %c0_152] : memref<1x32xf32, #tpu.memory_space<vmem>>, vector<1x32xf32>
    %371 = vector.broadcast %369 : vector<4x1xf32> to vector<4x32xf32>
    %372 = vector.broadcast %370 : vector<1x32xf32> to vector<4x32xf32>
    %373 = arith.mulf %371, %372 : vector<4x32xf32>
    %374 = arith.addf %368, %373 : vector<4x32xf32>
    %c0_153 = arith.constant 0 : index
    %c0_154 = arith.constant 0 : index
    %375 = vector.load %arg22[%c0_153, %c0_154] : memref<4x1xf32, #tpu.memory_space<vmem>>, vector<4x1xf32>
    %c0_155 = arith.constant 0 : index
    %c0_156 = arith.constant 0 : index
    %376 = vector.load %arg25[%c0_155, %c0_156] : memref<1x32xf32, #tpu.memory_space<vmem>>, vector<1x32xf32>
    %377 = vector.broadcast %375 : vector<4x1xf32> to vector<4x32xf32>
    %378 = vector.broadcast %376 : vector<1x32xf32> to vector<4x32xf32>
    %379 = arith.mulf %377, %378 : vector<4x32xf32>
    %380 = arith.addf %374, %379 : vector<4x32xf32>
    %c0_157 = arith.constant 0 : index
    %c0_158 = arith.constant 0 : index
    %381 = vector.load %arg26[%c0_157, %c0_158] : memref<1x32xf32, #tpu.memory_space<vmem>>, vector<1x32xf32>
    %382 = vector.broadcast %381 : vector<1x32xf32> to vector<4x32xf32>
    %383 = arith.addf %380, %382 : vector<4x32xf32>
    %cst_159 = arith.constant 0.000000e+00 : f32
    %384 = vector.broadcast %cst_159 : f32 to vector<4x32xf32>
    %385 = arith.maximumf %383, %384 : vector<4x32xf32>
    %c0_160 = arith.constant 0 : index
    %c0_161 = arith.constant 0 : index
    %386 = vector.load %arg27[%c0_160, %c0_161] : memref<32x16xf32, #tpu.memory_space<vmem>>, vector<32x16xf32>
    %387 = arith.truncf %385 : vector<4x32xf32> to vector<4x32xbf16>
    %388 = arith.truncf %386 : vector<32x16xf32> to vector<32x16xbf16>
    %cst_162 = arith.constant dense<0.000000e+00> : vector<4x16xf32>
    %389 = tpu.matmul %387, %388, %cst_162 {dimension_numbers = #tpu.dot_dimension_numbers<[1], [0], [0], [1], [0, 0, 1, 1], [], []>} : vector<4x32xbf16>, vector<32x16xbf16>, vector<4x16xf32> -> vector<4x16xf32>
    %c0_163 = arith.constant 0 : index
    %c0_164 = arith.constant 0 : index
    %390 = vector.load %arg28[%c0_163, %c0_164] : memref<1x16xf32, #tpu.memory_space<vmem>>, vector<1x16xf32>
    %391 = vector.broadcast %390 : vector<1x16xf32> to vector<4x16xf32>
    %392 = arith.addf %389, %391 : vector<4x16xf32>
    %cst_165 = arith.constant 0.000000e+00 : f32
    %393 = vector.broadcast %cst_165 : f32 to vector<4x16xf32>
    %394 = arith.maximumf %392, %393 : vector<4x16xf32>
    %c0_166 = arith.constant 0 : index
    %c0_167 = arith.constant 0 : index
    %395 = vector.load %arg29[%c0_166, %c0_167] : memref<16x128xf32, #tpu.memory_space<vmem>>, vector<16x128xf32>
    %396 = arith.truncf %394 : vector<4x16xf32> to vector<4x16xbf16>
    %397 = arith.truncf %395 : vector<16x128xf32> to vector<16x128xbf16>
    %cst_168 = arith.constant dense<0.000000e+00> : vector<4x128xf32>
    %398 = tpu.matmul %396, %397, %cst_168 {dimension_numbers = #tpu.dot_dimension_numbers<[1], [0], [0], [1], [0, 0, 1, 1], [], []>} : vector<4x16xbf16>, vector<16x128xbf16>, vector<4x128xf32> -> vector<4x128xf32>
    %c0_169 = arith.constant 0 : index
    %c0_170 = arith.constant 0 : index
    %399 = vector.load %arg30[%c0_169, %c0_170] : memref<1x128xf32, #tpu.memory_space<vmem>>, vector<1x128xf32>
    %400 = vector.broadcast %399 : vector<1x128xf32> to vector<4x128xf32>
    %401 = arith.addf %398, %400 : vector<4x128xf32>
    %c0_171 = arith.constant 0 : index
    %c0_172 = arith.constant 0 : index
    %402 = vector.load %arg31[%c0_171, %c0_172] : memref<4x128xf32, #tpu.memory_space<vmem>>, vector<4x128xf32>
    tpu.vector_store %arg31[%c0_171, %c0_172], %401 {strides = array<i32>} : memref<4x128xf32, #tpu.memory_space<vmem>>, vector<4x128xf32>,
    return
  }
  func.func @transform_0(%arg0: i32) -> (i32, i32, i32) {
    %c0_i32 = arith.constant 0 : i32
    %c0_i32_0 = arith.constant 0 : i32
    %c0_i32_1 = arith.constant 0 : i32
    %c0_i32_2 = arith.constant 0 : i32
    return %c0_i32, %c0_i32_0, %c0_i32_1 : i32, i32, i32
  }
  func.func @transform_1(%arg0: i32) -> (i32, i32) {
    %c0_i32 = arith.constant 0 : i32
    %c0_i32_0 = arith.constant 0 : i32
    %c0_i32_1 = arith.constant 0 : i32
    return %c0_i32, %c0_i32_0 : i32, i32
  }
  func.func @transform_2(%arg0: i32) -> (i32, i32) {
    %c0_i32 = arith.constant 0 : i32
    %c0_i32_0 = arith.constant 0 : i32
    %c0_i32_1 = arith.constant 0 : i32
    return %c0_i32, %c0_i32_0 : i32, i32
  }
  func.func @transform_3(%arg0: i32) -> (i32, i32) {
    %c0_i32 = arith.constant 0 : i32
    %c0_i32_0 = arith.constant 0 : i32
    %c0_i32_1 = arith.constant 0 : i32
    return %c0_i32, %c0_i32_0 : i32, i32
  }
  func.func @transform_4(%arg0: i32) -> (i32, i32) {
    %c0_i32 = arith.constant 0 : i32
    %c0_i32_0 = arith.constant 0 : i32
    %c0_i32_1 = arith.constant 0 : i32
    return %c0_i32, %c0_i32_0 : i32, i32
  }
  func.func @transform_5(%arg0: i32) -> (i32, i32) {
    %c0_i32 = arith.constant 0 : i32
    %c0_i32_0 = arith.constant 0 : i32
    %c0_i32_1 = arith.constant 0 : i32
    return %c0_i32, %c0_i32_0 : i32, i32
  }
  func.func @transform_6(%arg0: i32) -> (i32, i32, i32) {
    %c0_i32 = arith.constant 0 : i32
    %c0_i32_0 = arith.constant 0 : i32
    %c0_i32_1 = arith.constant 0 : i32
    %c0_i32_2 = arith.constant 0 : i32
    return %c0_i32, %c0_i32_0, %c0_i32_1 : i32, i32, i32
  }
  func.func @transform_7(%arg0: i32) -> (i32, i32, i32) {
    %c0_i32 = arith.constant 0 : i32
    %c0_i32_0 = arith.constant 0 : i32
    %c0_i32_1 = arith.constant 0 : i32
    %c0_i32_2 = arith.constant 0 : i32
    return %c0_i32, %c0_i32_0, %c0_i32_1 : i32, i32, i32
  }
  func.func @transform_8(%arg0: i32) -> (i32, i32, i32) {
    %c0_i32 = arith.constant 0 : i32
    %c0_i32_0 = arith.constant 0 : i32
    %c0_i32_1 = arith.constant 0 : i32
    %c0_i32_2 = arith.constant 0 : i32
    return %c0_i32, %c0_i32_0, %c0_i32_1 : i32, i32, i32
  }
  func.func @transform_9(%arg0: i32) -> (i32, i32, i32) {
    %c0_i32 = arith.constant 0 : i32
    %c0_i32_0 = arith.constant 0 : i32
    %c0_i32_1 = arith.constant 0 : i32
    %c0_i32_2 = arith.constant 0 : i32
    return %c0_i32, %c0_i32_0, %c0_i32_1 : i32, i32, i32
  }
  func.func @transform_10(%arg0: i32) -> (i32, i32, i32) {
    %c0_i32 = arith.constant 0 : i32
    %c0_i32_0 = arith.constant 0 : i32
    %c0_i32_1 = arith.constant 0 : i32
    %c0_i32_2 = arith.constant 0 : i32
    return %c0_i32, %c0_i32_0, %c0_i32_1 : i32, i32, i32
  }
  func.func @transform_11(%arg0: i32) -> (i32, i32, i32) {
    %c0_i32 = arith.constant 0 : i32
    %c0_i32_0 = arith.constant 0 : i32
    %c0_i32_1 = arith.constant 0 : i32
    %c0_i32_2 = arith.constant 0 : i32
    return %c0_i32, %c0_i32_0, %c0_i32_1 : i32, i32, i32
  }
  func.func @transform_12(%arg0: i32) -> (i32, i32, i32) {
    %c0_i32 = arith.constant 0 : i32
    %c0_i32_0 = arith.constant 0 : i32
    %c0_i32_1 = arith.constant 0 : i32
    %c0_i32_2 = arith.constant 0 : i32
    return %c0_i32, %c0_i32_0, %c0_i32_1 : i32, i32, i32
  }
  func.func @transform_13(%arg0: i32) -> (i32, i32, i32) {
    %c0_i32 = arith.constant 0 : i32
    %c0_i32_0 = arith.constant 0 : i32
    %c0_i32_1 = arith.constant 0 : i32
    %c0_i32_2 = arith.constant 0 : i32
    return %c0_i32, %c0_i32_0, %c0_i32_1 : i32, i32, i32
  }
  func.func @transform_14(%arg0: i32) -> (i32, i32, i32) {
    %c0_i32 = arith.constant 0 : i32
    %c0_i32_0 = arith.constant 0 : i32
    %c0_i32_1 = arith.constant 0 : i32
    %c0_i32_2 = arith.constant 0 : i32
    return %c0_i32, %c0_i32_0, %c0_i32_1 : i32, i32, i32
  }
  func.func @transform_15(%arg0: i32) -> (i32, i32, i32) {
    %c0_i32 = arith.constant 0 : i32
    %c0_i32_0 = arith.constant 0 : i32
    %c0_i32_1 = arith.constant 0 : i32
    %c0_i32_2 = arith.constant 0 : i32
    return %c0_i32, %c0_i32_0, %c0_i32_1 : i32, i32, i32
  }
  func.func @transform_16(%arg0: i32) -> (i32, i32, i32) {
    %c0_i32 = arith.constant 0 : i32
    %c0_i32_0 = arith.constant 0 : i32
    %c0_i32_1 = arith.constant 0 : i32
    %c0_i32_2 = arith.constant 0 : i32
    return %c0_i32, %c0_i32_0, %c0_i32_1 : i32, i32, i32
  }
  func.func @transform_17(%arg0: i32) -> (i32, i32, i32) {
    %c0_i32 = arith.constant 0 : i32
    %c0_i32_0 = arith.constant 0 : i32
    %c0_i32_1 = arith.constant 0 : i32
    %c0_i32_2 = arith.constant 0 : i32
    return %c0_i32, %c0_i32_0, %c0_i32_1 : i32, i32, i32
  }
  func.func @transform_18(%arg0: i32) -> (i32, i32) {
    %c0_i32 = arith.constant 0 : i32
    %c0_i32_0 = arith.constant 0 : i32
    %c0_i32_1 = arith.constant 0 : i32
    return %c0_i32, %c0_i32_0 : i32, i32
  }
  func.func @transform_19(%arg0: i32) -> (i32, i32) {
    %c0_i32 = arith.constant 0 : i32
    %c0_i32_0 = arith.constant 0 : i32
    %c0_i32_1 = arith.constant 0 : i32
    return %c0_i32, %c0_i32_0 : i32, i32
  }
  func.func @transform_20(%arg0: i32) -> (i32, i32) {
    %c0_i32 = arith.constant 0 : i32
    %c0_i32_0 = arith.constant 0 : i32
    %c0_i32_1 = arith.constant 0 : i32
    return %c0_i32, %c0_i32_0 : i32, i32
  }
  func.func @transform_21(%arg0: i32) -> (i32, i32) {
    %c0_i32 = arith.constant 0 : i32
    %c0_i32_0 = arith.constant 0 : i32
    %c0_i32_1 = arith.constant 0 : i32
    return %c0_i32, %c0_i32_0 : i32, i32
  }
  func.func @transform_22(%arg0: i32) -> (i32, i32) {
    %c0_i32 = arith.constant 0 : i32
    %c0_i32_0 = arith.constant 0 : i32
    %c0_i32_1 = arith.constant 0 : i32
    return %c0_i32, %c0_i32_0 : i32, i32
  }
  func.func @transform_23(%arg0: i32) -> (i32, i32) {
    %c0_i32 = arith.constant 0 : i32
    %c0_i32_0 = arith.constant 0 : i32
    %c0_i32_1 = arith.constant 0 : i32
    return %c0_i32, %c0_i32_0 : i32, i32
  }
  func.func @transform_24(%arg0: i32) -> (i32, i32) {
    %c0_i32 = arith.constant 0 : i32
    %c0_i32_0 = arith.constant 0 : i32
    %c0_i32_1 = arith.constant 0 : i32
    return %c0_i32, %c0_i32_0 : i32, i32
  }
  func.func @transform_25(%arg0: i32) -> (i32, i32) {
    %c0_i32 = arith.constant 0 : i32
    %c0_i32_0 = arith.constant 0 : i32
    %c0_i32_1 = arith.constant 0 : i32
    return %c0_i32, %c0_i32_0 : i32, i32
  }
  func.func @transform_26(%arg0: i32) -> (i32, i32) {
    %c0_i32 = arith.constant 0 : i32
    %c0_i32_0 = arith.constant 0 : i32
    %c0_i32_1 = arith.constant 0 : i32
    return %c0_i32, %c0_i32_0 : i32, i32
  }
  func.func @transform_27(%arg0: i32) -> (i32, i32) {
    %c0_i32 = arith.constant 0 : i32
    %c0_i32_0 = arith.constant 0 : i32
    %c0_i32_1 = arith.constant 0 : i32
    return %c0_i32, %c0_i32_0 : i32, i32
  }
  func.func @transform_28(%arg0: i32) -> (i32, i32) {
    %c0_i32 = arith.constant 0 : i32
    %c0_i32_0 = arith.constant 0 : i32
    %c0_i32_1 = arith.constant 0 : i32
    return %c0_i32, %c0_i32_0 : i32, i32
  }
  func.func @transform_29(%arg0: i32) -> (i32, i32) {
    %c0_i32 = arith.constant 0 : i32
    %c0_i32_0 = arith.constant 0 : i32
    %c0_i32_1 = arith.constant 0 : i32
    return %c0_i32, %c0_i32_0 : i32, i32
  }
  func.func @transform_30(%arg0: i32) -> (i32, i32) {
    %c0_i32 = arith.constant 0 : i32
    %c0_i32_0 = arith.constant 0 : i32
    %c0_i32_1 = arith.constant 0 : i32
    return %c0_i32, %c0_i32_0 : i32, i32
  }
}

</mosaic_0001>

<llo_original>
// kernel: bert_review_classifier_forward.1
$region0: #{bert_review_classifier_forward.1}
  #allocation0 [shape = 'u32[]', space=smem, size = 0x4, offset = 0x4, fixed_abs, tag = 'smem constant byte address 0x4 - core index']
  #allocation1 [shape = 'u32[144,128]{1,0:T(1,128)}', space=vmem, size = 0x12000, scoped, tag = 'internal scratch']
  %s0 = inlined_call_operand.smem [shape: u32[31], index: -1, kind: input, shape index: {}]
  %s1 = sld [smem:[%s0]]
  %s2 = scalar_lea.smem %s0, 1
  %s3 = sld [smem:[%s2]]
  %s4 = scalar_lea.smem %s0, 2
  %s5 = sld [smem:[%s4]]
  %s6 = scalar_lea.smem %s0, 3
  %s7 = sld [smem:[%s6]]
  %s8 = scalar_lea.smem %s0, 4
  %s9 = sld [smem:[%s8]]
  %s10 = scalar_lea.smem %s0, 5
  %s11 = sld [smem:[%s10]]
  %s12 = scalar_lea.smem %s0, 6
  %s13 = sld [smem:[%s12]]
  %s14 = scalar_lea.smem %s0, 7
  %s15 = sld [smem:[%s14]]
  %s16 = scalar_lea.smem %s0, 8
  %s17 = sld [smem:[%s16]]
  %s18 = scalar_lea.smem %s0, 9
  %s19 = sld [smem:[%s18]]
  %s20 = scalar_lea.smem %s0, 10
  %s21 = sld [smem:[%s20]]
  %s22 = scalar_lea.smem %s0, 11
  %s23 = sld [smem:[%s22]]
  %s24 = scalar_lea.smem %s0, 12
  %s25 = sld [smem:[%s24]]
  %s26 = scalar_lea.smem %s0, 13
  %s27 = sld [smem:[%s26]]
  %s28 = scalar_lea.smem %s0, 14
  %s29 = sld [smem:[%s28]]
  %s30 = scalar_lea.smem %s0, 15
  %s31 = sld [smem:[%s30]]
  %s32 = scalar_lea.smem %s0, 16
  %s33 = sld [smem:[%s32]]
  %s34 = scalar_lea.smem %s0, 17
  %s35 = sld [smem:[%s34]]
  %s36 = scalar_lea.smem %s0, 18
  %s37 = sld [smem:[%s36]]
  %s38 = scalar_lea.smem %s0, 19
  %s39 = sld [smem:[%s38]]
  %s40 = scalar_lea.smem %s0, 20
  %s41 = sld [smem:[%s40]]
  %s42 = scalar_lea.smem %s0, 21
  %s43 = sld [smem:[%s42]]
  %s44 = scalar_lea.smem %s0, 22
  %s45 = sld [smem:[%s44]]
  %s46 = scalar_lea.smem %s0, 23
  %s47 = sld [smem:[%s46]]
  %s48 = scalar_lea.smem %s0, 24
  %s49 = sld [smem:[%s48]]
  %s50 = scalar_lea.smem %s0, 25
  %s51 = sld [smem:[%s50]]
  %s52 = scalar_lea.smem %s0, 26
  %s53 = sld [smem:[%s52]]
  %s54 = scalar_lea.smem %s0, 27
  %s55 = sld [smem:[%s54]]
  %s56 = scalar_lea.smem %s0, 28
  %s57 = sld [smem:[%s56]]
  %s58 = scalar_lea.smem %s0, 29
  %s59 = sld [smem:[%s58]]
  %s60 = scalar_lea.smem %s0, 30
  %s61 = sld [smem:[%s60]]
  %s62 = sld [smem:[#allocation0]]
  $region130: #{bert_review_classifier_forward.1} parent=0
    _
  %s64 = ssub.s32 1, %s62
  %s65 = scalar_select 0, %s64, %s62
  $region1: #{bert_review_classifier_forward.1} parent=0
    #allocation2 [shape = 'u8[2048]{0}', space=vmem, size = 0x800, scoped, tag = 'output window, operand 0, single buffered']
    #allocation3 [shape = 's32[1]{0}', space=sflag, size = 0x4, scoped, tag = 'scoped memory for bert_review_classifier_forward.1']
    %66 = vsyncpa [#allocation3], 0
    // Predicated region
    $region2: #{bert_review_classifier_forward.1} parent=1 // pred_check
      _
    $region3: #{bert_review_classifier_forward.1} parent=1 // pred_check_branch
      %68 = sbr.rel (0) target = $region5
    $region4: #{bert_review_classifier_forward.1} parent=1 // pred_region
      _
    $region5: #{bert_review_classifier_forward.1} parent=1 // pred_fallthru
      _
    // Predicated region
    $region6: #{bert_review_classifier_forward.1} parent=1 // pred_check
      _
    $region7: #{bert_review_classifier_forward.1} parent=1 // pred_check_branch
      %70 = sbr.rel (0) target = $region9
    $region8: #{bert_review_classifier_forward.1} parent=1 // pred_region
      _
    $region9: #{bert_review_classifier_forward.1} parent=1 // pred_fallthru
      _
    // Predicated region
    $region10: #{bert_review_classifier_forward.1} parent=1 // pred_check
      _
    $region11: #{bert_review_classifier_forward.1} parent=1 // pred_check_branch
      %72 = sbr.rel (0) target = $region13
    $region12: #{bert_review_classifier_forward.1} parent=1 // pred_region
      _
    $region13: #{bert_review_classifier_forward.1} parent=1 // pred_fallthru
      _
    // Predicated region
    $region14: #{bert_review_classifier_forward.1} parent=1 // pred_check
      _
    $region15: #{bert_review_classifier_forward.1} parent=1 // pred_check_branch
      %74 = sbr.rel (0) target = $region17
    $region16: #{bert_review_classifier_forward.1} parent=1 // pred_region
      _
    $region17: #{bert_review_classifier_forward.1} parent=1 // pred_fallthru
      _
    // Predicated region
    $region18: #{bert_review_classifier_forward.1} parent=1 // pred_check
      _
    $region19: #{bert_review_classifier_forward.1} parent=1 // pred_check_branch
      %76 = sbr.rel (0) target = $region21
    $region20: #{bert_review_classifier_forward.1} parent=1 // pred_region
      _
    $region21: #{bert_review_classifier_forward.1} parent=1 // pred_fallthru
      _
    // Predicated region
    $region22: #{bert_review_classifier_forward.1} parent=1 // pred_check
      _
    $region23: #{bert_review_classifier_forward.1} parent=1 // pred_check_branch
      %78 = sbr.rel (0) target = $region25
    $region24: #{bert_review_classifier_forward.1} parent=1 // pred_region
      _
    $region25: #{bert_review_classifier_forward.1} parent=1 // pred_fallthru
      _
    // Predicated region
    $region26: #{bert_review_classifier_forward.1} parent=1 // pred_check
      _
    $region27: #{bert_review_classifier_forward.1} parent=1 // pred_check_branch
      %80 = sbr.rel (0) target = $region29
    $region28: #{bert_review_classifier_forward.1} parent=1 // pred_region
      _
    $region29: #{bert_review_classifier_forward.1} parent=1 // pred_fallthru
      _
    // Predicated region
    $region30: #{bert_review_classifier_forward.1} parent=1 // pred_check
      _
    $region31: #{bert_review_classifier_forward.1} parent=1 // pred_check_branch
      %82 = sbr.rel (0) target = $region33
    $region32: #{bert_review_classifier_forward.1} parent=1 // pred_region
      _
    $region33: #{bert_review_classifier_forward.1} parent=1 // pred_fallthru
      _
    // Predicated region
    $region34: #{bert_review_classifier_forward.1} parent=1 // pred_check
      _
    $region35: #{bert_review_classifier_forward.1} parent=1 // pred_check_branch
      %84 = sbr.rel (0) target = $region37
    $region36: #{bert_review_classifier_forward.1} parent=1 // pred_region
      _
    $region37: #{bert_review_classifier_forward.1} parent=1 // pred_fallthru
      _
    // Predicated region
    $region38: #{bert_review_classifier_forward.1} parent=1 // pred_check
      _
    $region39: #{bert_review_classifier_forward.1} parent=1 // pred_check_branch
      %86 = sbr.rel (0) target = $region41
    $region40: #{bert_review_classifier_forward.1} parent=1 // pred_region
      _
    $region41: #{bert_review_classifier_forward.1} parent=1 // pred_fallthru
      _
    // Predicated region
    $region42: #{bert_review_classifier_forward.1} parent=1 // pred_check
      _
    $region43: #{bert_review_classifier_forward.1} parent=1 // pred_check_branch
      %88 = sbr.rel (0) target = $region45
    $region44: #{bert_review_classifier_forward.1} parent=1 // pred_region
      _
    $region45: #{bert_review_classifier_forward.1} parent=1 // pred_fallthru
      _
    // Predicated region
    $region46: #{bert_review_classifier_forward.1} parent=1 // pred_check
      _
    $region47: #{bert_review_classifier_forward.1} parent=1 // pred_check_branch
      %90 = sbr.rel (0) target = $region49
    $region48: #{bert_review_classifier_forward.1} parent=1 // pred_region
      _
    $region49: #{bert_review_classifier_forward.1} parent=1 // pred_fallthru
      _
    // Predicated region
    $region50: #{bert_review_classifier_forward.1} parent=1 // pred_check
      _
    $region51: #{bert_review_classifier_forward.1} parent=1 // pred_check_branch
      %92 = sbr.rel (0) target = $region53
    $region52: #{bert_review_classifier_forward.1} parent=1 // pred_region
      _
    $region53: #{bert_review_classifier_forward.1} parent=1 // pred_fallthru
      _
    // Predicated region
    $region54: #{bert_review_classifier_forward.1} parent=1 // pred_check
      _
    $region55: #{bert_review_classifier_forward.1} parent=1 // pred_check_branch
      %94 = sbr.rel (0) target = $region57
    $region56: #{bert_review_classifier_forward.1} parent=1 // pred_region
      _
    $region57: #{bert_review_classifier_forward.1} parent=1 // pred_fallthru
      _
    // Predicated region
    $region58: #{bert_review_classifier_forward.1} parent=1 // pred_check
      _
    $region59: #{bert_review_classifier_forward.1} parent=1 // pred_check_branch
      %96 = sbr.rel (0) target = $region61
    $region60: #{bert_review_classifier_forward.1} parent=1 // pred_region
      _
    $region61: #{bert_review_classifier_forward.1} parent=1 // pred_fallthru
      _
    // Predicated region
    $region62: #{bert_review_classifier_forward.1} parent=1 // pred_check
      _
    $region63: #{bert_review_classifier_forward.1} parent=1 // pred_check_branch
      %98 = sbr.rel (0) target = $region65
    $region64: #{bert_review_classifier_forward.1} parent=1 // pred_region
      _
    $region65: #{bert_review_classifier_forward.1} parent=1 // pred_fallthru
      _
    // Predicated region
    $region66: #{bert_review_classifier_forward.1} parent=1 // pred_check
      _
    $region67: #{bert_review_classifier_forward.1} parent=1 // pred_check_branch
      %100 = sbr.rel (0) target = $region69
    $region68: #{bert_review_classifier_forward.1} parent=1 // pred_region
      _
    $region69: #{bert_review_classifier_forward.1} parent=1 // pred_fallthru
      _
    // Predicated region
    $region70: #{bert_review_classifier_forward.1} parent=1 // pred_check
      _
    $region71: #{bert_review_classifier_forward.1} parent=1 // pred_check_branch
      %102 = sbr.rel (0) target = $region73
    $region72: #{bert_review_classifier_forward.1} parent=1 // pred_region
      _
    $region73: #{bert_review_classifier_forward.1} parent=1 // pred_fallthru
      _
    // Predicated region
    $region74: #{bert_review_classifier_forward.1} parent=1 // pred_check
      _
    $region75: #{bert_review_classifier_forward.1} parent=1 // pred_check_branch
      %104 = sbr.rel (0) target = $region77
    $region76: #{bert_review_classifier_forward.1} parent=1 // pred_region
      _
    $region77: #{bert_review_classifier_forward.1} parent=1 // pred_fallthru
      _
    // Predicated region
    $region78: #{bert_review_classifier_forward.1} parent=1 // pred_check
      _
    $region79: #{bert_review_classifier_forward.1} parent=1 // pred_check_branch
      %106 = sbr.rel (0) target = $region81
    $region80: #{bert_review_classifier_forward.1} parent=1 // pred_region
      _
    $region81: #{bert_review_classifier_forward.1} parent=1 // pred_fallthru
      _
    // Predicated region
    $region82: #{bert_review_classifier_forward.1} parent=1 // pred_check
      _
    $region83: #{bert_review_classifier_forward.1} parent=1 // pred_check_branch
      %108 = sbr.rel (0) target = $region85
    $region84: #{bert_review_classifier_forward.1} parent=1 // pred_region
      _
    $region85: #{bert_review_classifier_forward.1} parent=1 // pred_fallthru
      _
    // Predicated region
    $region86: #{bert_review_classifier_forward.1} parent=1 // pred_check
      _
    $region87: #{bert_review_classifier_forward.1} parent=1 // pred_check_branch
      %110 = sbr.rel (0) target = $region89
    $region88: #{bert_review_classifier_forward.1} parent=1 // pred_region
      _
    $region89: #{bert_review_classifier_forward.1} parent=1 // pred_fallthru
      _
    // Predicated region
    $region90: #{bert_review_classifier_forward.1} parent=1 // pred_check
      _
    $region91: #{bert_review_classifier_forward.1} parent=1 // pred_check_branch
      %112 = sbr.rel (0) target = $region93
    $region92: #{bert_review_classifier_forward.1} parent=1 // pred_region
      _
    $region93: #{bert_review_classifier_forward.1} parent=1 // pred_fallthru
      _
    // Predicated region
    $region94: #{bert_review_classifier_forward.1} parent=1 // pred_check
      _
    $region95: #{bert_review_classifier_forward.1} parent=1 // pred_check_branch
      %114 = sbr.rel (0) target = $region97
    $region96: #{bert_review_classifier_forward.1} parent=1 // pred_region
      _
    $region97: #{bert_review_classifier_forward.1} parent=1 // pred_fallthru
      _
    // Predicated region
    $region98: #{bert_review_classifier_forward.1} parent=1 // pred_check
      _
    $region99: #{bert_review_classifier_forward.1} parent=1 // pred_check_branch
      %116 = sbr.rel (0) target = $region101
    $region100: #{bert_review_classifier_forward.1} parent=1 // pred_region
      _
    $region101: #{bert_review_classifier_forward.1} parent=1 // pred_fallthru
      _
    // Predicated region
    $region102: #{bert_review_classifier_forward.1} parent=1 // pred_check
      _
    $region103: #{bert_review_classifier_forward.1} parent=1 // pred_check_branch
      %118 = sbr.rel (0) target = $region105
    $region104: #{bert_review_classifier_forward.1} parent=1 // pred_region
      _
    $region105: #{bert_review_classifier_forward.1} parent=1 // pred_fallthru
      _
    // Predicated region
    $region106: #{bert_review_classifier_forward.1} parent=1 // pred_check
      _
    $region107: #{bert_review_classifier_forward.1} parent=1 // pred_check_branch
      %120 = sbr.rel (0) target = $region109
    $region108: #{bert_review_classifier_forward.1} parent=1 // pred_region
      _
    $region109: #{bert_review_classifier_forward.1} parent=1 // pred_fallthru
      _
    // Predicated region
    $region110: #{bert_review_classifier_forward.1} parent=1 // pred_check
      _
    $region111: #{bert_review_classifier_forward.1} parent=1 // pred_check_branch
      %122 = sbr.rel (0) target = $region113
    $region112: #{bert_review_classifier_forward.1} parent=1 // pred_region
      _
    $region113: #{bert_review_classifier_forward.1} parent=1 // pred_fallthru
      _
    // Predicated region
    $region114: #{bert_review_classifier_forward.1} parent=1 // pred_check
      _
    $region115: #{bert_review_classifier_forward.1} parent=1 // pred_check_branch
      %124 = sbr.rel (0) target = $region117
    $region116: #{bert_review_classifier_forward.1} parent=1 // pred_region
      _
    $region117: #{bert_review_classifier_forward.1} parent=1 // pred_fallthru
      _
    // Predicated region
    $region118: #{bert_review_classifier_forward.1} parent=1 // pred_check
      _
    $region119: #{bert_review_classifier_forward.1} parent=1 // pred_check_branch
      %126 = sbr.rel (0) target = $region121
    $region120: #{bert_review_classifier_forward.1} parent=1 // pred_region
      _
    $region121: #{bert_review_classifier_forward.1} parent=1 // pred_fallthru
      _
    %v128 = vld [vmem:[%s1] sm:$0xff]
    %v129 = vld [vmem:[%s1 + $0x8] sm:$0xff]
    %v130 = vld [vmem:[%s1 + $0x10] sm:$0xff]
    %v131 = vld [vmem:[%s1 + $0x18] sm:$0xff]
    %v132 = vld [vmem:[%s3] sm:$0xff]
    %v133 = vadd.f32 %v128, %v132
    %v134 = vadd.f32 %v129, %v132
    %v135 = vadd.f32 %v130, %v132
    %v136 = vadd.f32 %v131, %v132
    %v137 = vld [vmem:[%s5] sm:$0x1]
    %v139 = vlaneseq
    %v140 = vshrl.u32 %v139, 7
    %v141 = vsub.s32 0, %v140
    %v142 = vrot.slane %v137, %v141
    %v144 = vadd.f32 %v133, %v142
    %v145 = vadd.f32 %v134, %v142
    %v146 = vadd.f32 %v135, %v142
    %v147 = vadd.f32 %v136, %v142
    %v148 = vld [vmem:[%s7] sm:$0x1]
    %v149 = vld [vmem:[%s9] sm:$0x1]
    %vm150 = vcmask 261120
    %v151 = vsel %vm150, %v144, 0.0
    %152 = vadd.xlane.f32.xlu0 %v151
    %v153 = vpop.xlane.xlu0 %152
    %v154 = vsel %vm150, %v145, 0.0
    %155 = vadd.xlane.f32.xlu0 %v154
    %v156 = vpop.xlane.xlu0 %155
    %v157 = vsel %vm150, %v146, 0.0
    %158 = vadd.xlane.f32.xlu0 %v157
    %v159 = vpop.xlane.xlu0 %158
    %v160 = vsel %vm150, %v147, 0.0
    %161 = vadd.xlane.f32.xlu0 %v160
    %v162 = vpop.xlane.xlu0 %161
    %v163 = vrcp.pop 32.0
    %v164 = vmul.f32 %v153, %v163
    %v165 = vmul.f32 %v156, %v163
    %v166 = vmul.f32 %v159, %v163
    %v167 = vmul.f32 %v162, %v163
    %v168 = vsub.f32 %v144, %v164
    %v169 = vsub.f32 %v145, %v165
    %v170 = vsub.f32 %v146, %v166
    %v171 = vsub.f32 %v147, %v167
    %v172 = vmul.f32 %v168, %v168
    %v173 = vmul.f32 %v169, %v169
    %v174 = vmul.f32 %v170, %v170
    %v175 = vmul.f32 %v171, %v171
    %v176 = vsel %vm150, %v172, 0.0
    %177 = vadd.xlane.f32.xlu0 %v176
    %v178 = vpop.xlane.xlu0 %177
    %v179 = vsel %vm150, %v173, 0.0
    %180 = vadd.xlane.f32.xlu0 %v179
    %v181 = vpop.xlane.xlu0 %180
    %v182 = vsel %vm150, %v174, 0.0
    %183 = vadd.xlane.f32.xlu0 %v182
    %v184 = vpop.xlane.xlu0 %183
    %v185 = vsel %vm150, %v175, 0.0
    %186 = vadd.xlane.f32.xlu0 %v185
    %v187 = vpop.xlane.xlu0 %186
    %v188 = vmul.f32 %v178, %v163
    %v189 = vmul.f32 %v181, %v163
    %v190 = vmul.f32 %v184, %v163
    %v191 = vmul.f32 %v187, %v163
    %v192 = vadd.f32 %v188, 1e-12
    %v193 = vadd.f32 %v189, 1e-12
    %v194 = vadd.f32 %v190, 1e-12
    %v195 = vadd.f32 %v191, 1e-12
    %v196 = vrsqrt.pop %v192
    %v197 = vrsqrt.pop %v193
    %v198 = vrsqrt.pop %v194
    %v199 = vrsqrt.pop %v195
    %v200 = vmul.f32 %v168, %v196
    %v201 = vmul.f32 %v169, %v197
    %v202 = vmul.f32 %v170, %v198
    %v203 = vmul.f32 %v171, %v199
    %v205 = vlaneseq
    %v206 = vshrl.u32 %v205, 7
    %v207 = vsub.s32 0, %v206
    %v208 = vrot.slane %v148, %v207
    %v210 = vmul.f32 %v200, %v208
    %v211 = vmul.f32 %v201, %v208
    %v212 = vmul.f32 %v202, %v208
    %v213 = vmul.f32 %v203, %v208
    %v215 = vlaneseq
    %v216 = vshrl.u32 %v215, 7
    %v217 = vsub.s32 0, %v216
    %v218 = vrot.slane %v149, %v217
    %v220 = vadd.f32 %v210, %v218
    %v221 = vadd.f32 %v211, %v218
    %v222 = vadd.f32 %v212, %v218
    %v223 = vadd.f32 %v213, %v218
    %v224 = vld [vmem:[%s11] sm:$0xf]
    %v227 = vunpack.c.l.s4 1966171168
    %v228 = vunpack.c.0.s8 %v227
    %v229 = vlaneseq
    %v230 = vshrl.u32 %v229, 7
    %v231 = vsub.s32 %v228, %v230
    %v232 = vrot.slane %v224, %v231
    %v233 = vcombine.high %v232, %v232
    %v235 = vunpack.c.l.s4 1966171168
    %v236 = vunpack.c.0.s8 %v235
    %v237 = vlaneseq
    %v238 = vshrl.u32 %v237, 7
    %v239 = vsub.s32 %v236, %v238
    %v240 = vrot.slane %v232, %v239
    %v242 = vunpack.c.l.s4 1966171168
    %v243 = vunpack.c.0.s8 %v242
    %v244 = vlaneseq
    %v245 = vshrl.u32 %v244, 7
    %v246 = vsub.s32 %v243, %v245
    %v247 = vrot.slane %v233, %v246
    %v248 = vcombine.high %v240, %v240
    %v249 = vcombine.high %v247, %v247
    %v250 = vld [vmem:[%s13] sm:$0xff]
    %v251 = vld [vmem:[%s13 + $0x8] sm:$0xff]
    %v252 = vld [vmem:[%s13 + $0x10] sm:$0xff]
    %v253 = vld [vmem:[%s13 + $0x18] sm:$0xff]
    %v254 = vpack.c.bf16 %v221, %v220
    %v255 = vpack.c.bf16 %v223, %v222
    %v256 = vpack.c.bf16 %v251, %v250
    %v257 = vpack.c.bf16 %v253, %v252
    %v258 = vld [vmem:[%s15] sm:$0x1]
    %v260 = vlaneseq
    %v261 = vshrl.u32 %v260, 7
    %v262 = vsub.s32 0, %v261
    %v263 = vrot.slane %v258, %v262
    %v266 = vsel %vm150, %v254, 0
    %v269 = vsel %vm150, %v255, 0
    %271 = vmatprep.subr.bf16.mxu0 0
    %272 = vmatpush1.bf16.msra.mxu0 %v256
    %273 = vmatprep.subr.bf16.mxu0 0
    %274 = vmatpush1.bf16.msra.mxu0 %v257
    %275 = vmatprep.subr.bf16.mxu0 0
    %276 = vmatpush1.bf16.msra.mxu0 0
    %277 = vmatprep.subr.bf16.mxu0 0
    %278 = vmatpush1.bf16.msra.mxu0 0
    %279 = vmatprep.subr.bf16.mxu0 0
    %280 = vmatpush1.bf16.msra.mxu0 0
    %281 = vmatprep.subr.bf16.mxu0 0
    %282 = vmatpush1.bf16.msra.mxu0 0
    %283 = vmatprep.subr.bf16.mxu0 0
    %284 = vmatpush1.bf16.msra.mxu0 0
    %285 = vmatprep.subr.bf16.mxu0 0
    %286 = vmatpush1.bf16.msra.mxu0 0
    %287 = vmatprep.subr.bf16.mxu0 0
    %288 = vmatpush1.bf16.msra.mxu0 0
    %289 = vmatprep.subr.bf16.mxu0 0
    %290 = vmatpush1.bf16.msra.mxu0 0
    %291 = vmatprep.subr.bf16.mxu0 0
    %292 = vmatpush1.bf16.msra.mxu0 0
    %293 = vmatprep.subr.bf16.mxu0 0
    %294 = vmatpush1.bf16.msra.mxu0 0
    %295 = vmatprep.subr.bf16.mxu0 0
    %296 = vmatpush1.bf16.msra.mxu0 0
    %297 = vmatprep.subr.bf16.mxu0 0
    %298 = vmatpush1.bf16.msra.mxu0 0
    %299 = vmatprep.subr.bf16.mxu0 0
    %300 = vmatpush1.bf16.msra.mxu0 0
    %301 = vmatprep.subr.bf16.mxu0 0
    %302 = vmatpush1.bf16.msra.mxu0 0
    %303 = vmatprep.mubr.bf16.mxu0 0
    %304 = vmatmul.mubr.bf16.gmra.mrb[0].mxu0 %v266
    %v305 = vpop.f32.mrb[0].mxu0
    %v306 = vadd.f32 %v263, %v305
    %v307 = vpop.f32.mrb[0].mxu0
    %v308 = vpop.f32.mrb[0].mxu0
    %v309 = vadd.f32 %v263, %v308
    %v310 = vpop.f32.mrb[0].mxu0
    %311 = vmatprep.mubr.bf16.mxu0 0
    %312 = vmatmul.mubr.bf16.gmra.mrb[0].mxu0 %v269
    %v313 = vpop.f32.mrb[0].mxu0
    %v314 = vadd.f32 %v263, %v313
    %v315 = vpop.f32.mrb[0].mxu0
    %v316 = vpop.f32.mrb[0].mxu0
    %v317 = vadd.f32 %v263, %v316
    %v318 = vpop.f32.mrb[0].mxu0
    %319 = vdwg.mxu0
    %v320 = vld [vmem:[%s17] sm:$0xff]
    %v321 = vld [vmem:[%s17 + $0x8] sm:$0xff]
    %v322 = vld [vmem:[%s17 + $0x10] sm:$0xff]
    %v323 = vld [vmem:[%s17 + $0x18] sm:$0xff]
    %v324 = vpack.c.bf16 %v306, %v306
    %v325 = vpack.c.bf16 %v309, %v309
    %v326 = vpack.c.bf16 %v314, %v314
    %v327 = vpack.c.bf16 %v317, %v317
    %v328 = vlaneseq
    %v329 = vshrl.u32 %v328, 7
    %v330 = vsub.s32 0, %v329
    %v331 = vrot.slane %v240, %v330
    %v332 = vlaneseq
    %v333 = vshrl.u32 %v332, 7
    %v334 = vsub.s32 0, %v333
    %v335 = vrot.slane %v247, %v334
    %v336 = vlaneseq
    %v337 = vshrl.u32 %v336, 7
    %v338 = vsub.s32 0, %v337
    %v339 = vrot.slane %v248, %v338
    %v340 = vlaneseq
    %v341 = vshrl.u32 %v340, 7
    %v342 = vsub.s32 0, %v341
    %v343 = vrot.slane %v249, %v342
    %349 = vrot.lane.b32.xlu0 %v324, 96
    %v350 = vpop.permute.xlu0 %349
    %vm351 = vcmask 130048
    %v353 = vsel %vm351, %v324, 0
    %v356 = vsel %vm351, %v350, 0
    %358 = vmatprep.subr.bf16.mxu0 0
    %359 = vmatpush1.bf16.xpose.msra.mxu0 %v356
    %360 = vmatprep.subr.bf16.mxu0 0
    %361 = vmatpush1.bf16.xpose.msra.mxu0 0
    %362 = vmatprep.subr.bf16.mxu0 0
    %363 = vmatpush1.bf16.xpose.msra.mxu0 0
    %364 = vmatprep.subr.bf16.mxu0 0
    %365 = vmatpush1.bf16.xpose.msra.mxu0 0
    %366 = vmatprep.subr.bf16.mxu0 0
    %367 = vmatpush1.bf16.xpose.msra.mxu0 0
    %368 = vmatprep.subr.bf16.mxu0 0
    %369 = vmatpush1.bf16.xpose.msra.mxu0 0
    %370 = vmatprep.subr.bf16.mxu0 0
    %371 = vmatpush1.bf16.xpose.msra.mxu0 0
    %372 = vmatprep.subr.bf16.mxu0 0
    %373 = vmatpush1.bf16.xpose.msra.mxu0 0
    %374 = vmatprep.subr.bf16.mxu0 0
    %375 = vmatpush1.bf16.xpose.msra.mxu0 0
    %376 = vmatprep.subr.bf16.mxu0 0
    %377 = vmatpush1.bf16.xpose.msra.mxu0 0
    %378 = vmatprep.subr.bf16.mxu0 0
    %379 = vmatpush1.bf16.xpose.msra.mxu0 0
    %380 = vmatprep.subr.bf16.mxu0 0
    %381 = vmatpush1.bf16.xpose.msra.mxu0 0
    %382 = vmatprep.subr.bf16.mxu0 0
    %383 = vmatpush1.bf16.xpose.msra.mxu0 0
    %384 = vmatprep.subr.bf16.mxu0 0
    %385 = vmatpush1.bf16.xpose.msra.mxu0 0
    %386 = vmatprep.subr.bf16.mxu0 0
    %387 = vmatpush1.bf16.xpose.msra.mxu0 0
    %388 = vmatprep.subr.bf16.mxu0 0
    %389 = vmatpush1.bf16.xpose.msra.mxu0 0
    %390 = vmatprep.mubr.bf16.mxu0 0
    %391 = vmatmul.mubr.bf16.gmra.mrb[0].mxu0 %v353
    %v392 = vpop.f32.mrb[0].mxu0
    %v393 = vadd.f32 %v331, %v392
    %v394 = vpop.f32.mrb[0].mxu0
    %v395 = vpop.f32.mrb[0].mxu0
    %v396 = vpop.f32.mrb[0].mxu0
    %397 = vdwg.mxu0
    %399 = vrot.lane.b32.xlu0 %v325, 96
    %v400 = vpop.permute.xlu0 %399
    %v402 = vsel %vm351, %v325, 0
    %v405 = vsel %vm351, %v400, 0
    %407 = vmatprep.subr.bf16.mxu0 0
    %408 = vmatpush1.bf16.xpose.msra.mxu0 %v405
    %409 = vmatprep.subr.bf16.mxu0 0
    %410 = vmatpush1.bf16.xpose.msra.mxu0 0
    %411 = vmatprep.subr.bf16.mxu0 0
    %412 = vmatpush1.bf16.xpose.msra.mxu0 0
    %413 = vmatprep.subr.bf16.mxu0 0
    %414 = vmatpush1.bf16.xpose.msra.mxu0 0
    %415 = vmatprep.subr.bf16.mxu0 0
    %416 = vmatpush1.bf16.xpose.msra.mxu0 0
    %417 = vmatprep.subr.bf16.mxu0 0
    %418 = vmatpush1.bf16.xpose.msra.mxu0 0
    %419 = vmatprep.subr.bf16.mxu0 0
    %420 = vmatpush1.bf16.xpose.msra.mxu0 0
    %421 = vmatprep.subr.bf16.mxu0 0
    %422 = vmatpush1.bf16.xpose.msra.mxu0 0
    %423 = vmatprep.subr.bf16.mxu0 0
    %424 = vmatpush1.bf16.xpose.msra.mxu0 0
    %425 = vmatprep.subr.bf16.mxu0 0
    %426 = vmatpush1.bf16.xpose.msra.mxu0 0
    %427 = vmatprep.subr.bf16.mxu0 0
    %428 = vmatpush1.bf16.xpose.msra.mxu0 0
    %429 = vmatprep.subr.bf16.mxu0 0
    %430 = vmatpush1.bf16.xpose.msra.mxu0 0
    %431 = vmatprep.subr.bf16.mxu0 0
    %432 = vmatpush1.bf16.xpose.msra.mxu0 0
    %433 = vmatprep.subr.bf16.mxu0 0
    %434 = vmatpush1.bf16.xpose.msra.mxu0 0
    %435 = vmatprep.subr.bf16.mxu0 0
    %436 = vmatpush1.bf16.xpose.msra.mxu0 0
    %437 = vmatprep.subr.bf16.mxu0 0
    %438 = vmatpush1.bf16.xpose.msra.mxu0 0
    %439 = vmatprep.mubr.bf16.mxu0 0
    %440 = vmatmul.mubr.bf16.gmra.mrb[0].mxu0 %v402
    %v441 = vpop.f32.mrb[0].mxu0
    %v442 = vadd.f32 %v335, %v441
    %v443 = vpop.f32.mrb[0].mxu0
    %v444 = vpop.f32.mrb[0].mxu0
    %v445 = vpop.f32.mrb[0].mxu0
    %446 = vdwg.mxu0
    %448 = vrot.lane.b32.xlu0 %v326, 96
    %v449 = vpop.permute.xlu0 %448
    %v451 = vsel %vm351, %v326, 0
    %v454 = vsel %vm351, %v449, 0
    %456 = vmatprep.subr.bf16.mxu0 0
    %457 = vmatpush1.bf16.xpose.msra.mxu0 %v454
    %458 = vmatprep.subr.bf16.mxu0 0
    %459 = vmatpush1.bf16.xpose.msra.mxu0 0
    %460 = vmatprep.subr.bf16.mxu0 0
    %461 = vmatpush1.bf16.xpose.msra.mxu0 0
    %462 = vmatprep.subr.bf16.mxu0 0
    %463 = vmatpush1.bf16.xpose.msra.mxu0 0
    %464 = vmatprep.subr.bf16.mxu0 0
    %465 = vmatpush1.bf16.xpose.msra.mxu0 0
    %466 = vmatprep.subr.bf16.mxu0 0
    %467 = vmatpush1.bf16.xpose.msra.mxu0 0
    %468 = vmatprep.subr.bf16.mxu0 0
    %469 = vmatpush1.bf16.xpose.msra.mxu0 0
    %470 = vmatprep.subr.bf16.mxu0 0
    %471 = vmatpush1.bf16.xpose.msra.mxu0 0
    %472 = vmatprep.subr.bf16.mxu0 0
    %473 = vmatpush1.bf16.xpose.msra.mxu0 0
    %474 = vmatprep.subr.bf16.mxu0 0
    %475 = vmatpush1.bf16.xpose.msra.mxu0 0
    %476 = vmatprep.subr.bf16.mxu0 0
    %477 = vmatpush1.bf16.xpose.msra.mxu0 0
    %478 = vmatprep.subr.bf16.mxu0 0
    %479 = vmatpush1.bf16.xpose.msra.mxu0 0
    %480 = vmatprep.subr.bf16.mxu0 0
    %481 = vmatpush1.bf16.xpose.msra.mxu0 0
    %482 = vmatprep.subr.bf16.mxu0 0
    %483 = vmatpush1.bf16.xpose.msra.mxu0 0
    %484 = vmatprep.subr.bf16.mxu0 0
    %485 = vmatpush1.bf16.xpose.msra.mxu0 0
    %486 = vmatprep.subr.bf16.mxu0 0
    %487 = vmatpush1.bf16.xpose.msra.mxu0 0
    %488 = vmatprep.mubr.bf16.mxu0 0
    %489 = vmatmul.mubr.bf16.gmra.mrb[0].mxu0 %v451
    %v490 = vpop.f32.mrb[0].mxu0
    %v491 = vadd.f32 %v339, %v490
    %v492 = vpop.f32.mrb[0].mxu0
    %v493 = vpop.f32.mrb[0].mxu0
    %v494 = vpop.f32.mrb[0].mxu0
    %495 = vdwg.mxu0
    %497 = vrot.lane.b32.xlu0 %v327, 96
    %v498 = vpop.permute.xlu0 %497
    %v500 = vsel %vm351, %v327, 0
    %v503 = vsel %vm351, %v498, 0
    %505 = vmatprep.subr.bf16.mxu0 0
    %506 = vmatpush1.bf16.xpose.msra.mxu0 %v503
    %507 = vmatprep.subr.bf16.mxu0 0
    %508 = vmatpush1.bf16.xpose.msra.mxu0 0
    %509 = vmatprep.subr.bf16.mxu0 0
    %510 = vmatpush1.bf16.xpose.msra.mxu0 0
    %511 = vmatprep.subr.bf16.mxu0 0
    %512 = vmatpush1.bf16.xpose.msra.mxu0 0
    %513 = vmatprep.subr.bf16.mxu0 0
    %514 = vmatpush1.bf16.xpose.msra.mxu0 0
    %515 = vmatprep.subr.bf16.mxu0 0
    %516 = vmatpush1.bf16.xpose.msra.mxu0 0
    %517 = vmatprep.subr.bf16.mxu0 0
    %518 = vmatpush1.bf16.xpose.msra.mxu0 0
    %519 = vmatprep.subr.bf16.mxu0 0
    %520 = vmatpush1.bf16.xpose.msra.mxu0 0
    %521 = vmatprep.subr.bf16.mxu0 0
    %522 = vmatpush1.bf16.xpose.msra.mxu0 0
    %523 = vmatprep.subr.bf16.mxu0 0
    %524 = vmatpush1.bf16.xpose.msra.mxu0 0
    %525 = vmatprep.subr.bf16.mxu0 0
    %526 = vmatpush1.bf16.xpose.msra.mxu0 0
    %527 = vmatprep.subr.bf16.mxu0 0
    %528 = vmatpush1.bf16.xpose.msra.mxu0 0
    %529 = vmatprep.subr.bf16.mxu0 0
    %530 = vmatpush1.bf16.xpose.msra.mxu0 0
    %531 = vmatprep.subr.bf16.mxu0 0
    %532 = vmatpush1.bf16.xpose.msra.mxu0 0
    %533 = vmatprep.subr.bf16.mxu0 0
    %534 = vmatpush1.bf16.xpose.msra.mxu0 0
    %535 = vmatprep.subr.bf16.mxu0 0
    %536 = vmatpush1.bf16.xpose.msra.mxu0 0
    %537 = vmatprep.mubr.bf16.mxu0 0
    %538 = vmatmul.mubr.bf16.gmra.mrb[0].mxu0 %v500
    %v539 = vpop.f32.mrb[0].mxu0
    %v540 = vadd.f32 %v343, %v539
    %v541 = vpop.f32.mrb[0].mxu0
    %v542 = vpop.f32.mrb[0].mxu0
    %v543 = vpop.f32.mrb[0].mxu0
    %544 = vdwg.mxu0
    %vm545 = vcmask 64512
    %v546 = vsel %vm545, %v393, -inf
    %547 = vmax.xlane.f32.xlu0 %v546
    %v548 = vpop.xlane.xlu0 %547
    %v549 = vsel %vm545, %v442, -inf
    %550 = vmax.xlane.f32.xlu0 %v549
    %v551 = vpop.xlane.xlu0 %550
    %v552 = vsel %vm545, %v491, -inf
    %553 = vmax.xlane.f32.xlu0 %v552
    %v554 = vpop.xlane.xlu0 %553
    %v555 = vsel %vm545, %v540, -inf
    %556 = vmax.xlane.f32.xlu0 %v555
    %v557 = vpop.xlane.xlu0 %556
    %v558 = vsub.f32 %v393, %v548
    %v559 = vsub.f32 %v442, %v551
    %v560 = vsub.f32 %v491, %v554
    %v561 = vsub.f32 %v540, %v557
    %v562 = vmul.f32 %v558, 1.442695
    %v563 = vpow.pop %v562
    %v564 = vmul.f32 %v559, 1.442695
    %v565 = vpow.pop %v564
    %v566 = vmul.f32 %v560, 1.442695
    %v567 = vpow.pop %v566
    %v568 = vmul.f32 %v561, 1.442695
    %v569 = vpow.pop %v568
    %v570 = vsel %vm545, %v563, 0.0
    %571 = vadd.xlane.f32.xlu0 %v570
    %v572 = vpop.xlane.xlu0 %571
    %v573 = vsel %vm545, %v565, 0.0
    %574 = vadd.xlane.f32.xlu0 %v573
    %v575 = vpop.xlane.xlu0 %574
    %v576 = vsel %vm545, %v567, 0.0
    %577 = vadd.xlane.f32.xlu0 %v576
    %v578 = vpop.xlane.xlu0 %577
    %v579 = vsel %vm545, %v569, 0.0
    %580 = vadd.xlane.f32.xlu0 %v579
    %v581 = vpop.xlane.xlu0 %580
    %v582 = vrcp.pop %v572
    %v583 = vrcp.pop %v575
    %v584 = vrcp.pop %v578
    %v585 = vrcp.pop %v581
    %v586 = vmul.f32 %v563, %v582
    %v587 = vmul.f32 %v565, %v583
    %v588 = vmul.f32 %v567, %v584
    %v589 = vmul.f32 %v569, %v585
    %v590 = vpack.c.bf16 %v586, %v586
    %v591 = vpack.c.bf16 %v587, %v587
    %v592 = vpack.c.bf16 %v588, %v588
    %v593 = vpack.c.bf16 %v589, %v589
    %594 = vrot.lane.b32.xlu0 %v324, 64
    %v595 = vpop.permute.xlu0 %594
    %v597 = vsel %vm545, %v590, 0
    %vm599 = vcmask 1043456
    %v601 = vsel %vm599, %v595, 0
    %603 = vmatprep.subr.bf16.mxu0 0
    %604 = vmatpush1.bf16.msra.mxu0 %v601
    %605 = vmatprep.subr.bf16.mxu0 0
    %606 = vmatpush1.bf16.msra.mxu0 0
    %607 = vmatprep.subr.bf16.mxu0 0
    %608 = vmatpush1.bf16.msra.mxu0 0
    %609 = vmatprep.subr.bf16.mxu0 0
    %610 = vmatpush1.bf16.msra.mxu0 0
    %611 = vmatprep.subr.bf16.mxu0 0
    %612 = vmatpush1.bf16.msra.mxu0 0
    %613 = vmatprep.subr.bf16.mxu0 0
    %614 = vmatpush1.bf16.msra.mxu0 0
    %615 = vmatprep.subr.bf16.mxu0 0
    %616 = vmatpush1.bf16.msra.mxu0 0
    %617 = vmatprep.subr.bf16.mxu0 0
    %618 = vmatpush1.bf16.msra.mxu0 0
    %619 = vmatprep.subr.bf16.mxu0 0
    %620 = vmatpush1.bf16.msra.mxu0 0
    %621 = vmatprep.subr.bf16.mxu0 0
    %622 = vmatpush1.bf16.msra.mxu0 0
    %623 = vmatprep.subr.bf16.mxu0 0
    %624 = vmatpush1.bf16.msra.mxu0 0
    %625 = vmatprep.subr.bf16.mxu0 0
    %626 = vmatpush1.bf16.msra.mxu0 0
    %627 = vmatprep.subr.bf16.mxu0 0
    %628 = vmatpush1.bf16.msra.mxu0 0
    %629 = vmatprep.subr.bf16.mxu0 0
    %630 = vmatpush1.bf16.msra.mxu0 0
    %631 = vmatprep.subr.bf16.mxu0 0
    %632 = vmatpush1.bf16.msra.mxu0 0
    %633 = vmatprep.subr.bf16.mxu0 0
    %634 = vmatpush1.bf16.msra.mxu0 0
    %635 = vmatprep.mubr.bf16.mxu0 0
    %636 = vmatmul.mubr.bf16.gmra.mrb[0].mxu0 %v597
    %v637 = vpop.f32.mrb[0].mxu0
    %v638 = vadd.f32 0.0, %v637
    %v639 = vpop.f32.mrb[0].mxu0
    %v640 = vpop.f32.mrb[0].mxu0
    %v641 = vpop.f32.mrb[0].mxu0
    %642 = vdwg.mxu0
    %643 = vrot.lane.b32.xlu0 %v325, 64
    %v644 = vpop.permute.xlu0 %643
    %v646 = vsel %vm545, %v591, 0
    %v649 = vsel %vm599, %v644, 0
    %651 = vmatprep.subr.bf16.mxu0 0
    %652 = vmatpush1.bf16.msra.mxu0 %v649
    %653 = vmatprep.subr.bf16.mxu0 0
    %654 = vmatpush1.bf16.msra.mxu0 0
    %655 = vmatprep.subr.bf16.mxu0 0
    %656 = vmatpush1.bf16.msra.mxu0 0
    %657 = vmatprep.subr.bf16.mxu0 0
    %658 = vmatpush1.bf16.msra.mxu0 0
    %659 = vmatprep.subr.bf16.mxu0 0
    %660 = vmatpush1.bf16.msra.mxu0 0
    %661 = vmatprep.subr.bf16.mxu0 0
    %662 = vmatpush1.bf16.msra.mxu0 0
    %663 = vmatprep.subr.bf16.mxu0 0
    %664 = vmatpush1.bf16.msra.mxu0 0
    %665 = vmatprep.subr.bf16.mxu0 0
    %666 = vmatpush1.bf16.msra.mxu0 0
    %667 = vmatprep.subr.bf16.mxu0 0
    %668 = vmatpush1.bf16.msra.mxu0 0
    %669 = vmatprep.subr.bf16.mxu0 0
    %670 = vmatpush1.bf16.msra.mxu0 0
    %671 = vmatprep.subr.bf16.mxu0 0
    %672 = vmatpush1.bf16.msra.mxu0 0
    %673 = vmatprep.subr.bf16.mxu0 0
    %674 = vmatpush1.bf16.msra.mxu0 0
    %675 = vmatprep.subr.bf16.mxu0 0
    %676 = vmatpush1.bf16.msra.mxu0 0
    %677 = vmatprep.subr.bf16.mxu0 0
    %678 = vmatpush1.bf16.msra.mxu0 0
    %679 = vmatprep.subr.bf16.mxu0 0
    %680 = vmatpush1.bf16.msra.mxu0 0
    %681 = vmatprep.subr.bf16.mxu0 0
    %682 = vmatpush1.bf16.msra.mxu0 0
    %683 = vmatprep.mubr.bf16.mxu0 0
    %684 = vmatmul.mubr.bf16.gmra.mrb[0].mxu0 %v646
    %v685 = vpop.f32.mrb[0].mxu0
    %v686 = vadd.f32 0.0, %v685
    %v687 = vpop.f32.mrb[0].mxu0
    %v688 = vpop.f32.mrb[0].mxu0
    %v689 = vpop.f32.mrb[0].mxu0
    %690 = vdwg.mxu0
    %691 = vrot.lane.b32.xlu0 %v326, 64
    %v692 = vpop.permute.xlu0 %691
    %v694 = vsel %vm545, %v592, 0
    %v697 = vsel %vm599, %v692, 0
    %699 = vmatprep.subr.bf16.mxu0 0
    %700 = vmatpush1.bf16.msra.mxu0 %v697
    %701 = vmatprep.subr.bf16.mxu0 0
    %702 = vmatpush1.bf16.msra.mxu0 0
    %703 = vmatprep.subr.bf16.mxu0 0
    %704 = vmatpush1.bf16.msra.mxu0 0
    %705 = vmatprep.subr.bf16.mxu0 0
    %706 = vmatpush1.bf16.msra.mxu0 0
    %707 = vmatprep.subr.bf16.mxu0 0
    %708 = vmatpush1.bf16.msra.mxu0 0
    %709 = vmatprep.subr.bf16.mxu0 0
    %710 = vmatpush1.bf16.msra.mxu0 0
    %711 = vmatprep.subr.bf16.mxu0 0
    %712 = vmatpush1.bf16.msra.mxu0 0
    %713 = vmatprep.subr.bf16.mxu0 0
    %714 = vmatpush1.bf16.msra.mxu0 0
    %715 = vmatprep.subr.bf16.mxu0 0
    %716 = vmatpush1.bf16.msra.mxu0 0
    %717 = vmatprep.subr.bf16.mxu0 0
    %718 = vmatpush1.bf16.msra.mxu0 0
    %719 = vmatprep.subr.bf16.mxu0 0
    %720 = vmatpush1.bf16.msra.mxu0 0
    %721 = vmatprep.subr.bf16.mxu0 0
    %722 = vmatpush1.bf16.msra.mxu0 0
    %723 = vmatprep.subr.bf16.mxu0 0
    %724 = vmatpush1.bf16.msra.mxu0 0
    %725 = vmatprep.subr.bf16.mxu0 0
    %726 = vmatpush1.bf16.msra.mxu0 0
    %727 = vmatprep.subr.bf16.mxu0 0
    %728 = vmatpush1.bf16.msra.mxu0 0
    %729 = vmatprep.subr.bf16.mxu0 0
    %730 = vmatpush1.bf16.msra.mxu0 0
    %731 = vmatprep.mubr.bf16.mxu0 0
    %732 = vmatmul.mubr.bf16.gmra.mrb[0].mxu0 %v694
    %v733 = vpop.f32.mrb[0].mxu0
    %v734 = vadd.f32 0.0, %v733
    %v735 = vpop.f32.mrb[0].mxu0
    %v736 = vpop.f32.mrb[0].mxu0
    %v737 = vpop.f32.mrb[0].mxu0
    %738 = vdwg.mxu0
    %739 = vrot.lane.b32.xlu0 %v327, 64
    %v740 = vpop.permute.xlu0 %739
    %v742 = vsel %vm545, %v593, 0
    %v745 = vsel %vm599, %v740, 0
    %747 = vmatprep.subr.bf16.mxu0 0
    %748 = vmatpush1.bf16.msra.mxu0 %v745
    %749 = vmatprep.subr.bf16.mxu0 0
    %750 = vmatpush1.bf16.msra.mxu0 0
    %751 = vmatprep.subr.bf16.mxu0 0
    %752 = vmatpush1.bf16.msra.mxu0 0
    %753 = vmatprep.subr.bf16.mxu0 0
    %754 = vmatpush1.bf16.msra.mxu0 0
    %755 = vmatprep.subr.bf16.mxu0 0
    %756 = vmatpush1.bf16.msra.mxu0 0
    %757 = vmatprep.subr.bf16.mxu0 0
    %758 = vmatpush1.bf16.msra.mxu0 0
    %759 = vmatprep.subr.bf16.mxu0 0
    %760 = vmatpush1.bf16.msra.mxu0 0
    %761 = vmatprep.subr.bf16.mxu0 0
    %762 = vmatpush1.bf16.msra.mxu0 0
    %763 = vmatprep.subr.bf16.mxu0 0
    %764 = vmatpush1.bf16.msra.mxu0 0
    %765 = vmatprep.subr.bf16.mxu0 0
    %766 = vmatpush1.bf16.msra.mxu0 0
    %767 = vmatprep.subr.bf16.mxu0 0
    %768 = vmatpush1.bf16.msra.mxu0 0
    %769 = vmatprep.subr.bf16.mxu0 0
    %770 = vmatpush1.bf16.msra.mxu0 0
    %771 = vmatprep.subr.bf16.mxu0 0
    %772 = vmatpush1.bf16.msra.mxu0 0
    %773 = vmatprep.subr.bf16.mxu0 0
    %774 = vmatpush1.bf16.msra.mxu0 0
    %775 = vmatprep.subr.bf16.mxu0 0
    %776 = vmatpush1.bf16.msra.mxu0 0
    %777 = vmatprep.subr.bf16.mxu0 0
    %778 = vmatpush1.bf16.msra.mxu0 0
    %779 = vmatprep.mubr.bf16.mxu0 0
    %780 = vmatmul.mubr.bf16.gmra.mrb[0].mxu0 %v742
    %v781 = vpop.f32.mrb[0].mxu0
    %v782 = vadd.f32 0.0, %v781
    %v783 = vpop.f32.mrb[0].mxu0
    %v784 = vpop.f32.mrb[0].mxu0
    %v785 = vpop.f32.mrb[0].mxu0
    %786 = vdwg.mxu0
    %v787 = vpack.c.bf16 %v686, %v638
    %v788 = vpack.c.bf16 %v782, %v734
    %v789 = vpack.c.bf16 %v321, %v320
    %790 = vrot.lane.b32.xlu0 %v324, 112
    %v791 = vpop.permute.xlu0 %790
    %792 = vrot.lane.b32.xlu0 %v324, 80
    %v793 = vpop.permute.xlu0 %792
    %v795 = vsel %vm351, %v791, 0
    %v798 = vsel %vm351, %v793, 0
    %800 = vmatprep.subr.bf16.mxu0 0
    %801 = vmatpush1.bf16.xpose.msra.mxu0 %v798
    %802 = vmatprep.subr.bf16.mxu0 0
    %803 = vmatpush1.bf16.xpose.msra.mxu0 0
    %804 = vmatprep.subr.bf16.mxu0 0
    %805 = vmatpush1.bf16.xpose.msra.mxu0 0
    %806 = vmatprep.subr.bf16.mxu0 0
    %807 = vmatpush1.bf16.xpose.msra.mxu0 0
    %808 = vmatprep.subr.bf16.mxu0 0
    %809 = vmatpush1.bf16.xpose.msra.mxu0 0
    %810 = vmatprep.subr.bf16.mxu0 0
    %811 = vmatpush1.bf16.xpose.msra.mxu0 0
    %812 = vmatprep.subr.bf16.mxu0 0
    %813 = vmatpush1.bf16.xpose.msra.mxu0 0
    %814 = vmatprep.subr.bf16.mxu0 0
    %815 = vmatpush1.bf16.xpose.msra.mxu0 0
    %816 = vmatprep.subr.bf16.mxu0 0
    %817 = vmatpush1.bf16.xpose.msra.mxu0 0
    %818 = vmatprep.subr.bf16.mxu0 0
    %819 = vmatpush1.bf16.xpose.msra.mxu0 0
    %820 = vmatprep.subr.bf16.mxu0 0
    %821 = vmatpush1.bf16.xpose.msra.mxu0 0
    %822 = vmatprep.subr.bf16.mxu0 0
    %823 = vmatpush1.bf16.xpose.msra.mxu0 0
    %824 = vmatprep.subr.bf16.mxu0 0
    %825 = vmatpush1.bf16.xpose.msra.mxu0 0
    %826 = vmatprep.subr.bf16.mxu0 0
    %827 = vmatpush1.bf16.xpose.msra.mxu0 0
    %828 = vmatprep.subr.bf16.mxu0 0
    %829 = vmatpush1.bf16.xpose.msra.mxu0 0
    %830 = vmatprep.subr.bf16.mxu0 0
    %831 = vmatpush1.bf16.xpose.msra.mxu0 0
    %832 = vmatprep.mubr.bf16.mxu0 0
    %833 = vmatmul.mubr.bf16.gmra.mrb[0].mxu0 %v795
    %v834 = vpop.f32.mrb[0].mxu0
    %v835 = vadd.f32 %v331, %v834
    %v836 = vpop.f32.mrb[0].mxu0
    %v837 = vpop.f32.mrb[0].mxu0
    %v838 = vpop.f32.mrb[0].mxu0
    %839 = vdwg.mxu0
    %840 = vrot.lane.b32.xlu0 %v325, 112
    %v841 = vpop.permute.xlu0 %840
    %842 = vrot.lane.b32.xlu0 %v325, 80
    %v843 = vpop.permute.xlu0 %842
    %v845 = vsel %vm351, %v841, 0
    %v848 = vsel %vm351, %v843, 0
    %850 = vmatprep.subr.bf16.mxu0 0
    %851 = vmatpush1.bf16.xpose.msra.mxu0 %v848
    %852 = vmatprep.subr.bf16.mxu0 0
    %853 = vmatpush1.bf16.xpose.msra.mxu0 0
    %854 = vmatprep.subr.bf16.mxu0 0
    %855 = vmatpush1.bf16.xpose.msra.mxu0 0
    %856 = vmatprep.subr.bf16.mxu0 0
    %857 = vmatpush1.bf16.xpose.msra.mxu0 0
    %858 = vmatprep.subr.bf16.mxu0 0
    %859 = vmatpush1.bf16.xpose.msra.mxu0 0
    %860 = vmatprep.subr.bf16.mxu0 0
    %861 = vmatpush1.bf16.xpose.msra.mxu0 0
    %862 = vmatprep.subr.bf16.mxu0 0
    %863 = vmatpush1.bf16.xpose.msra.mxu0 0
    %864 = vmatprep.subr.bf16.mxu0 0
    %865 = vmatpush1.bf16.xpose.msra.mxu0 0
    %866 = vmatprep.subr.bf16.mxu0 0
    %867 = vmatpush1.bf16.xpose.msra.mxu0 0
    %868 = vmatprep.subr.bf16.mxu0 0
    %869 = vmatpush1.bf16.xpose.msra.mxu0 0
    %870 = vmatprep.subr.bf16.mxu0 0
    %871 = vmatpush1.bf16.xpose.msra.mxu0 0
    %872 = vmatprep.subr.bf16.mxu0 0
    %873 = vmatpush1.bf16.xpose.msra.mxu0 0
    %874 = vmatprep.subr.bf16.mxu0 0
    %875 = vmatpush1.bf16.xpose.msra.mxu0 0
    %876 = vmatprep.subr.bf16.mxu0 0
    %877 = vmatpush1.bf16.xpose.msra.mxu0 0
    %878 = vmatprep.subr.bf16.mxu0 0
    %879 = vmatpush1.bf16.xpose.msra.mxu0 0
    %880 = vmatprep.subr.bf16.mxu0 0
    %881 = vmatpush1.bf16.xpose.msra.mxu0 0
    %882 = vmatprep.mubr.bf16.mxu0 0
    %883 = vmatmul.mubr.bf16.gmra.mrb[0].mxu0 %v845
    %v884 = vpop.f32.mrb[0].mxu0
    %v885 = vadd.f32 %v335, %v884
    %v886 = vpop.f32.mrb[0].mxu0
    %v887 = vpop.f32.mrb[0].mxu0
    %v888 = vpop.f32.mrb[0].mxu0
    %889 = vdwg.mxu0
    %890 = vrot.lane.b32.xlu0 %v326, 112
    %v891 = vpop.permute.xlu0 %890
    %892 = vrot.lane.b32.xlu0 %v326, 80
    %v893 = vpop.permute.xlu0 %892
    %v895 = vsel %vm351, %v891, 0
    %v898 = vsel %vm351, %v893, 0
    %900 = vmatprep.subr.bf16.mxu0 0
    %901 = vmatpush1.bf16.xpose.msra.mxu0 %v898
    %902 = vmatprep.subr.bf16.mxu0 0
    %903 = vmatpush1.bf16.xpose.msra.mxu0 0
    %904 = vmatprep.subr.bf16.mxu0 0
    %905 = vmatpush1.bf16.xpose.msra.mxu0 0
    %906 = vmatprep.subr.bf16.mxu0 0
    %907 = vmatpush1.bf16.xpose.msra.mxu0 0
    %908 = vmatprep.subr.bf16.mxu0 0
    %909 = vmatpush1.bf16.xpose.msra.mxu0 0
    %910 = vmatprep.subr.bf16.mxu0 0
    %911 = vmatpush1.bf16.xpose.msra.mxu0 0
    %912 = vmatprep.subr.bf16.mxu0 0
    %913 = vmatpush1.bf16.xpose.msra.mxu0 0
    %914 = vmatprep.subr.bf16.mxu0 0
    %915 = vmatpush1.bf16.xpose.msra.mxu0 0
    %916 = vmatprep.subr.bf16.mxu0 0
    %917 = vmatpush1.bf16.xpose.msra.mxu0 0
    %918 = vmatprep.subr.bf16.mxu0 0
    %919 = vmatpush1.bf16.xpose.msra.mxu0 0
    %920 = vmatprep.subr.bf16.mxu0 0
    %921 = vmatpush1.bf16.xpose.msra.mxu0 0
    %922 = vmatprep.subr.bf16.mxu0 0
    %923 = vmatpush1.bf16.xpose.msra.mxu0 0
    %924 = vmatprep.subr.bf16.mxu0 0
    %925 = vmatpush1.bf16.xpose.msra.mxu0 0
    %926 = vmatprep.subr.bf16.mxu0 0
    %927 = vmatpush1.bf16.xpose.msra.mxu0 0
    %928 = vmatprep.subr.bf16.mxu0 0
    %929 = vmatpush1.bf16.xpose.msra.mxu0 0
    %930 = vmatprep.subr.bf16.mxu0 0
    %931 = vmatpush1.bf16.xpose.msra.mxu0 0
    %932 = vmatprep.mubr.bf16.mxu0 0
    %933 = vmatmul.mubr.bf16.gmra.mrb[0].mxu0 %v895
    %v934 = vpop.f32.mrb[0].mxu0
    %v935 = vadd.f32 %v339, %v934
    %v936 = vpop.f32.mrb[0].mxu0
    %v937 = vpop.f32.mrb[0].mxu0
    %v938 = vpop.f32.mrb[0].mxu0
    %939 = vdwg.mxu0
    %940 = vrot.lane.b32.xlu0 %v327, 112
    %v941 = vpop.permute.xlu0 %940
    %942 = vrot.lane.b32.xlu0 %v327, 80
    %v943 = vpop.permute.xlu0 %942
    %v945 = vsel %vm351, %v941, 0
    %v948 = vsel %vm351, %v943, 0
    %950 = vmatprep.subr.bf16.mxu0 0
    %951 = vmatpush1.bf16.xpose.msra.mxu0 %v948
    %952 = vmatprep.subr.bf16.mxu0 0
    %953 = vmatpush1.bf16.xpose.msra.mxu0 0
    %954 = vmatprep.subr.bf16.mxu0 0
    %955 = vmatpush1.bf16.xpose.msra.mxu0 0
    %956 = vmatprep.subr.bf16.mxu0 0
    %957 = vmatpush1.bf16.xpose.msra.mxu0 0
    %958 = vmatprep.subr.bf16.mxu0 0
    %959 = vmatpush1.bf16.xpose.msra.mxu0 0
    %960 = vmatprep.subr.bf16.mxu0 0
    %961 = vmatpush1.bf16.xpose.msra.mxu0 0
    %962 = vmatprep.subr.bf16.mxu0 0
    %963 = vmatpush1.bf16.xpose.msra.mxu0 0
    %964 = vmatprep.subr.bf16.mxu0 0
    %965 = vmatpush1.bf16.xpose.msra.mxu0 0
    %966 = vmatprep.subr.bf16.mxu0 0
    %967 = vmatpush1.bf16.xpose.msra.mxu0 0
    %968 = vmatprep.subr.bf16.mxu0 0
    %969 = vmatpush1.bf16.xpose.msra.mxu0 0
    %970 = vmatprep.subr.bf16.mxu0 0
    %971 = vmatpush1.bf16.xpose.msra.mxu0 0
    %972 = vmatprep.subr.bf16.mxu0 0
    %973 = vmatpush1.bf16.xpose.msra.mxu0 0
    %974 = vmatprep.subr.bf16.mxu0 0
    %975 = vmatpush1.bf16.xpose.msra.mxu0 0
    %976 = vmatprep.subr.bf16.mxu0 0
    %977 = vmatpush1.bf16.xpose.msra.mxu0 0
    %978 = vmatprep.subr.bf16.mxu0 0
    %979 = vmatpush1.bf16.xpose.msra.mxu0 0
    %980 = vmatprep.subr.bf16.mxu0 0
    %981 = vmatpush1.bf16.xpose.msra.mxu0 0
    %982 = vmatprep.mubr.bf16.mxu0 0
    %983 = vmatmul.mubr.bf16.gmra.mrb[0].mxu0 %v945
    %v984 = vpop.f32.mrb[0].mxu0
    %v985 = vadd.f32 %v343, %v984
    %v986 = vpop.f32.mrb[0].mxu0
    %v987 = vpop.f32.mrb[0].mxu0
    %v988 = vpop.f32.mrb[0].mxu0
    %989 = vdwg.mxu0
    %v990 = vsel %vm545, %v835, -inf
    %991 = vmax.xlane.f32.xlu0 %v990
    %v992 = vpop.xlane.xlu0 %991
    %v993 = vsel %vm545, %v885, -inf
    %994 = vmax.xlane.f32.xlu0 %v993
    %v995 = vpop.xlane.xlu0 %994
    %v996 = vsel %vm545, %v935, -inf
    %997 = vmax.xlane.f32.xlu0 %v996
    %v998 = vpop.xlane.xlu0 %997
    %v999 = vsel %vm545, %v985, -inf
    %1000 = vmax.xlane.f32.xlu0 %v999
    %v1001 = vpop.xlane.xlu0 %1000
    %v1002 = vsub.f32 %v835, %v992
    %v1003 = vsub.f32 %v885, %v995
    %v1004 = vsub.f32 %v935, %v998
    %v1005 = vsub.f32 %v985, %v1001
    %v1006 = vmul.f32 %v1002, 1.442695
    %v1007 = vpow.pop %v1006
    %v1008 = vmul.f32 %v1003, 1.442695
    %v1009 = vpow.pop %v1008
    %v1010 = vmul.f32 %v1004, 1.442695
    %v1011 = vpow.pop %v1010
    %v1012 = vmul.f32 %v1005, 1.442695
    %v1013 = vpow.pop %v1012
    %v1014 = vsel %vm545, %v1007, 0.0
    %1015 = vadd.xlane.f32.xlu0 %v1014
    %v1016 = vpop.xlane.xlu0 %1015
    %v1017 = vsel %vm545, %v1009, 0.0
    %1018 = vadd.xlane.f32.xlu0 %v1017
    %v1019 = vpop.xlane.xlu0 %1018
    %v1020 = vsel %vm545, %v1011, 0.0
    %1021 = vadd.xlane.f32.xlu0 %v1020
    %v1022 = vpop.xlane.xlu0 %1021
    %v1023 = vsel %vm545, %v1013, 0.0
    %1024 = vadd.xlane.f32.xlu0 %v1023
    %v1025 = vpop.xlane.xlu0 %1024
    %v1026 = vrcp.pop %v1016
    %v1027 = vrcp.pop %v1019
    %v1028 = vrcp.pop %v1022
    %v1029 = vrcp.pop %v1025
    %v1030 = vmul.f32 %v1007, %v1026
    %v1031 = vmul.f32 %v1009, %v1027
    %v1032 = vmul.f32 %v1011, %v1028
    %v1033 = vmul.f32 %v1013, %v1029
    %v1034 = vpack.c.bf16 %v1030, %v1030
    %v1035 = vpack.c.bf16 %v1031, %v1031
    %v1036 = vpack.c.bf16 %v1032, %v1032
    %v1037 = vpack.c.bf16 %v1033, %v1033
    %1038 = vrot.lane.b32.xlu0 %v324, 48
    %v1039 = vpop.permute.xlu0 %1038
    %v1041 = vsel %vm545, %v1034, 0
    %v1044 = vsel %vm599, %v1039, 0
    %1046 = vmatprep.subr.bf16.mxu0 0
    %1047 = vmatpush1.bf16.msra.mxu0 %v1044
    %1048 = vmatprep.subr.bf16.mxu0 0
    %1049 = vmatpush1.bf16.msra.mxu0 0
    %1050 = vmatprep.subr.bf16.mxu0 0
    %1051 = vmatpush1.bf16.msra.mxu0 0
    %1052 = vmatprep.subr.bf16.mxu0 0
    %1053 = vmatpush1.bf16.msra.mxu0 0
    %1054 = vmatprep.subr.bf16.mxu0 0
    %1055 = vmatpush1.bf16.msra.mxu0 0
    %1056 = vmatprep.subr.bf16.mxu0 0
    %1057 = vmatpush1.bf16.msra.mxu0 0
    %1058 = vmatprep.subr.bf16.mxu0 0
    %1059 = vmatpush1.bf16.msra.mxu0 0
    %1060 = vmatprep.subr.bf16.mxu0 0
    %1061 = vmatpush1.bf16.msra.mxu0 0
    %1062 = vmatprep.subr.bf16.mxu0 0
    %1063 = vmatpush1.bf16.msra.mxu0 0
    %1064 = vmatprep.subr.bf16.mxu0 0
    %1065 = vmatpush1.bf16.msra.mxu0 0
    %1066 = vmatprep.subr.bf16.mxu0 0
    %1067 = vmatpush1.bf16.msra.mxu0 0
    %1068 = vmatprep.subr.bf16.mxu0 0
    %1069 = vmatpush1.bf16.msra.mxu0 0
    %1070 = vmatprep.subr.bf16.mxu0 0
    %1071 = vmatpush1.bf16.msra.mxu0 0
    %1072 = vmatprep.subr.bf16.mxu0 0
    %1073 = vmatpush1.bf16.msra.mxu0 0
    %1074 = vmatprep.subr.bf16.mxu0 0
    %1075 = vmatpush1.bf16.msra.mxu0 0
    %1076 = vmatprep.subr.bf16.mxu0 0
    %1077 = vmatpush1.bf16.msra.mxu0 0
    %1078 = vmatprep.mubr.bf16.mxu0 0
    %1079 = vmatmul.mubr.bf16.gmra.mrb[0].mxu0 %v1041
    %v1080 = vpop.f32.mrb[0].mxu0
    %v1081 = vadd.f32 0.0, %v1080
    %v1082 = vpop.f32.mrb[0].mxu0
    %v1083 = vpop.f32.mrb[0].mxu0
    %v1084 = vpop.f32.mrb[0].mxu0
    %1085 = vdwg.mxu0
    %1086 = vrot.lane.b32.xlu0 %v325, 48
    %v1087 = vpop.permute.xlu0 %1086
    %v1089 = vsel %vm545, %v1035, 0
    %v1092 = vsel %vm599, %v1087, 0
    %1094 = vmatprep.subr.bf16.mxu0 0
    %1095 = vmatpush1.bf16.msra.mxu0 %v1092
    %1096 = vmatprep.subr.bf16.mxu0 0
    %1097 = vmatpush1.bf16.msra.mxu0 0
    %1098 = vmatprep.subr.bf16.mxu0 0
    %1099 = vmatpush1.bf16.msra.mxu0 0
    %1100 = vmatprep.subr.bf16.mxu0 0
    %1101 = vmatpush1.bf16.msra.mxu0 0
    %1102 = vmatprep.subr.bf16.mxu0 0
    %1103 = vmatpush1.bf16.msra.mxu0 0
    %1104 = vmatprep.subr.bf16.mxu0 0
    %1105 = vmatpush1.bf16.msra.mxu0 0
    %1106 = vmatprep.subr.bf16.mxu0 0
    %1107 = vmatpush1.bf16.msra.mxu0 0
    %1108 = vmatprep.subr.bf16.mxu0 0
    %1109 = vmatpush1.bf16.msra.mxu0 0
    %1110 = vmatprep.subr.bf16.mxu0 0
    %1111 = vmatpush1.bf16.msra.mxu0 0
    %1112 = vmatprep.subr.bf16.mxu0 0
    %1113 = vmatpush1.bf16.msra.mxu0 0
    %1114 = vmatprep.subr.bf16.mxu0 0
    %1115 = vmatpush1.bf16.msra.mxu0 0
    %1116 = vmatprep.subr.bf16.mxu0 0
    %1117 = vmatpush1.bf16.msra.mxu0 0
    %1118 = vmatprep.subr.bf16.mxu0 0
    %1119 = vmatpush1.bf16.msra.mxu0 0
    %1120 = vmatprep.subr.bf16.mxu0 0
    %1121 = vmatpush1.bf16.msra.mxu0 0
    %1122 = vmatprep.subr.bf16.mxu0 0
    %1123 = vmatpush1.bf16.msra.mxu0 0
    %1124 = vmatprep.subr.bf16.mxu0 0
    %1125 = vmatpush1.bf16.msra.mxu0 0
    %1126 = vmatprep.mubr.bf16.mxu0 0
    %1127 = vmatmul.mubr.bf16.gmra.mrb[0].mxu0 %v1089
    %v1128 = vpop.f32.mrb[0].mxu0
    %v1129 = vadd.f32 0.0, %v1128
    %v1130 = vpop.f32.mrb[0].mxu0
    %v1131 = vpop.f32.mrb[0].mxu0
    %v1132 = vpop.f32.mrb[0].mxu0
    %1133 = vdwg.mxu0
    %1134 = vrot.lane.b32.xlu0 %v326, 48
    %v1135 = vpop.permute.xlu0 %1134
    %v1137 = vsel %vm545, %v1036, 0
    %v1140 = vsel %vm599, %v1135, 0
    %1142 = vmatprep.subr.bf16.mxu0 0
    %1143 = vmatpush1.bf16.msra.mxu0 %v1140
    %1144 = vmatprep.subr.bf16.mxu0 0
    %1145 = vmatpush1.bf16.msra.mxu0 0
    %1146 = vmatprep.subr.bf16.mxu0 0
    %1147 = vmatpush1.bf16.msra.mxu0 0
    %1148 = vmatprep.subr.bf16.mxu0 0
    %1149 = vmatpush1.bf16.msra.mxu0 0
    %1150 = vmatprep.subr.bf16.mxu0 0
    %1151 = vmatpush1.bf16.msra.mxu0 0
    %1152 = vmatprep.subr.bf16.mxu0 0
    %1153 = vmatpush1.bf16.msra.mxu0 0
    %1154 = vmatprep.subr.bf16.mxu0 0
    %1155 = vmatpush1.bf16.msra.mxu0 0
    %1156 = vmatprep.subr.bf16.mxu0 0
    %1157 = vmatpush1.bf16.msra.mxu0 0
    %1158 = vmatprep.subr.bf16.mxu0 0
    %1159 = vmatpush1.bf16.msra.mxu0 0
    %1160 = vmatprep.subr.bf16.mxu0 0
    %1161 = vmatpush1.bf16.msra.mxu0 0
    %1162 = vmatprep.subr.bf16.mxu0 0
    %1163 = vmatpush1.bf16.msra.mxu0 0
    %1164 = vmatprep.subr.bf16.mxu0 0
    %1165 = vmatpush1.bf16.msra.mxu0 0
    %1166 = vmatprep.subr.bf16.mxu0 0
    %1167 = vmatpush1.bf16.msra.mxu0 0
    %1168 = vmatprep.subr.bf16.mxu0 0
    %1169 = vmatpush1.bf16.msra.mxu0 0
    %1170 = vmatprep.subr.bf16.mxu0 0
    %1171 = vmatpush1.bf16.msra.mxu0 0
    %1172 = vmatprep.subr.bf16.mxu0 0
    %1173 = vmatpush1.bf16.msra.mxu0 0
    %1174 = vmatprep.mubr.bf16.mxu0 0
    %1175 = vmatmul.mubr.bf16.gmra.mrb[0].mxu0 %v1137
    %v1176 = vpop.f32.mrb[0].mxu0
    %v1177 = vadd.f32 0.0, %v1176
    %v1178 = vpop.f32.mrb[0].mxu0
    %v1179 = vpop.f32.mrb[0].mxu0
    %v1180 = vpop.f32.mrb[0].mxu0
    %1181 = vdwg.mxu0
    %1182 = vrot.lane.b32.xlu0 %v327, 48
    %v1183 = vpop.permute.xlu0 %1182
    %v1185 = vsel %vm545, %v1037, 0
    %v1188 = vsel %vm599, %v1183, 0
    %1190 = vmatprep.subr.bf16.mxu0 0
    %1191 = vmatpush1.bf16.msra.mxu0 %v1188
    %1192 = vmatprep.subr.bf16.mxu0 0
    %1193 = vmatpush1.bf16.msra.mxu0 0
    %1194 = vmatprep.subr.bf16.mxu0 0
    %1195 = vmatpush1.bf16.msra.mxu0 0
    %1196 = vmatprep.subr.bf16.mxu0 0
    %1197 = vmatpush1.bf16.msra.mxu0 0
    %1198 = vmatprep.subr.bf16.mxu0 0
    %1199 = vmatpush1.bf16.msra.mxu0 0
    %1200 = vmatprep.subr.bf16.mxu0 0
    %1201 = vmatpush1.bf16.msra.mxu0 0
    %1202 = vmatprep.subr.bf16.mxu0 0
    %1203 = vmatpush1.bf16.msra.mxu0 0
    %1204 = vmatprep.subr.bf16.mxu0 0
    %1205 = vmatpush1.bf16.msra.mxu0 0
    %1206 = vmatprep.subr.bf16.mxu0 0
    %1207 = vmatpush1.bf16.msra.mxu0 0
    %1208 = vmatprep.subr.bf16.mxu0 0
    %1209 = vmatpush1.bf16.msra.mxu0 0
    %1210 = vmatprep.subr.bf16.mxu0 0
    %1211 = vmatpush1.bf16.msra.mxu0 0
    %1212 = vmatprep.subr.bf16.mxu0 0
    %1213 = vmatpush1.bf16.msra.mxu0 0
    %1214 = vmatprep.subr.bf16.mxu0 0
    %1215 = vmatpush1.bf16.msra.mxu0 0
    %1216 = vmatprep.subr.bf16.mxu0 0
    %1217 = vmatpush1.bf16.msra.mxu0 0
    %1218 = vmatprep.subr.bf16.mxu0 0
    %1219 = vmatpush1.bf16.msra.mxu0 0
    %1220 = vmatprep.subr.bf16.mxu0 0
    %1221 = vmatpush1.bf16.msra.mxu0 0
    %1222 = vmatprep.mubr.bf16.mxu0 0
    %1223 = vmatmul.mubr.bf16.gmra.mrb[0].mxu0 %v1185
    %v1224 = vpop.f32.mrb[0].mxu0
    %v1225 = vadd.f32 0.0, %v1224
    %v1226 = vpop.f32.mrb[0].mxu0
    %v1227 = vpop.f32.mrb[0].mxu0
    %v1228 = vpop.f32.mrb[0].mxu0
    %1229 = vdwg.mxu0
    %v1230 = vpack.c.bf16 %v1129, %v1081
    %v1231 = vpack.c.bf16 %v1225, %v1177
    %v1232 = vpack.c.bf16 %v323, %v322
    %v1234 = vsel %vm351, %v1230, 0
    %v1237 = vsel %vm351, %v1231, 0
    %1239 = vmatprep.subr.bf16.mxu0 0
    %1240 = vmatpush1.bf16.msra.mxu0 %v1232
    %1241 = vmatprep.subr.bf16.mxu0 0
    %1242 = vmatpush1.bf16.msra.mxu0 0
    %1243 = vmatprep.subr.bf16.mxu0 0
    %1244 = vmatpush1.bf16.msra.mxu0 0
    %1245 = vmatprep.subr.bf16.mxu0 0
    %1246 = vmatpush1.bf16.msra.mxu0 0
    %1247 = vmatprep.subr.bf16.mxu0 0
    %1248 = vmatpush1.bf16.msra.mxu0 0
    %1249 = vmatprep.subr.bf16.mxu0 0
    %1250 = vmatpush1.bf16.msra.mxu0 0
    %1251 = vmatprep.subr.bf16.mxu0 0
    %1252 = vmatpush1.bf16.msra.mxu0 0
    %1253 = vmatprep.subr.bf16.mxu0 0
    %1254 = vmatpush1.bf16.msra.mxu0 0
    %1255 = vmatprep.subr.bf16.mxu0 0
    %1256 = vmatpush1.bf16.msra.mxu0 0
    %1257 = vmatprep.subr.bf16.mxu0 0
    %1258 = vmatpush1.bf16.msra.mxu0 0
    %1259 = vmatprep.subr.bf16.mxu0 0
    %1260 = vmatpush1.bf16.msra.mxu0 0
    %1261 = vmatprep.subr.bf16.mxu0 0
    %1262 = vmatpush1.bf16.msra.mxu0 0
    %1263 = vmatprep.subr.bf16.mxu0 0
    %1264 = vmatpush1.bf16.msra.mxu0 0
    %1265 = vmatprep.subr.bf16.mxu0 0
    %1266 = vmatpush1.bf16.msra.mxu0 0
    %1267 = vmatprep.subr.bf16.mxu0 0
    %1268 = vmatpush1.bf16.msra.mxu0 0
    %1269 = vmatprep.subr.bf16.mxu0 0
    %1270 = vmatpush1.bf16.msra.mxu0 0
    %1271 = vmatprep.mubr.bf16.mxu0 0
    %1272 = vmatmul.mubr.bf16.gmra.mrb[0].mxu0 %v1234
    %v1273 = vpop.f32.mrb[0].mxu0
    %v1274 = vadd.f32 0.0, %v1273
    %v1275 = vpop.f32.mrb[0].mxu0
    %v1276 = vpop.f32.mrb[0].mxu0
    %v1277 = vadd.f32 0.0, %v1276
    %v1278 = vpop.f32.mrb[0].mxu0
    %1279 = vmatprep.mubr.bf16.mxu0 0
    %1280 = vmatmul.mubr.bf16.gmra.mrb[0].mxu0 %v1237
    %v1281 = vpop.f32.mrb[0].mxu0
    %v1282 = vadd.f32 0.0, %v1281
    %v1283 = vpop.f32.mrb[0].mxu0
    %v1284 = vpop.f32.mrb[0].mxu0
    %v1285 = vadd.f32 0.0, %v1284
    %v1286 = vpop.f32.mrb[0].mxu0
    %1287 = vdwg.mxu0
    %v1289 = vsel %vm351, %v787, 0
    %v1292 = vsel %vm351, %v788, 0
    %1294 = vmatprep.subr.bf16.mxu0 0
    %1295 = vmatpush1.bf16.msra.mxu0 %v789
    %1296 = vmatprep.subr.bf16.mxu0 0
    %1297 = vmatpush1.bf16.msra.mxu0 0
    %1298 = vmatprep.subr.bf16.mxu0 0
    %1299 = vmatpush1.bf16.msra.mxu0 0
    %1300 = vmatprep.subr.bf16.mxu0 0
    %1301 = vmatpush1.bf16.msra.mxu0 0
    %1302 = vmatprep.subr.bf16.mxu0 0
    %1303 = vmatpush1.bf16.msra.mxu0 0
    %1304 = vmatprep.subr.bf16.mxu0 0
    %1305 = vmatpush1.bf16.msra.mxu0 0
    %1306 = vmatprep.subr.bf16.mxu0 0
    %1307 = vmatpush1.bf16.msra.mxu0 0
    %1308 = vmatprep.subr.bf16.mxu0 0
    %1309 = vmatpush1.bf16.msra.mxu0 0
    %1310 = vmatprep.subr.bf16.mxu0 0
    %1311 = vmatpush1.bf16.msra.mxu0 0
    %1312 = vmatprep.subr.bf16.mxu0 0
    %1313 = vmatpush1.bf16.msra.mxu0 0
    %1314 = vmatprep.subr.bf16.mxu0 0
    %1315 = vmatpush1.bf16.msra.mxu0 0
    %1316 = vmatprep.subr.bf16.mxu0 0
    %1317 = vmatpush1.bf16.msra.mxu0 0
    %1318 = vmatprep.subr.bf16.mxu0 0
    %1319 = vmatpush1.bf16.msra.mxu0 0
    %1320 = vmatprep.subr.bf16.mxu0 0
    %1321 = vmatpush1.bf16.msra.mxu0 0
    %1322 = vmatprep.subr.bf16.mxu0 0
    %1323 = vmatpush1.bf16.msra.mxu0 0
    %1324 = vmatprep.subr.bf16.mxu0 0
    %1325 = vmatpush1.bf16.msra.mxu0 0
    %1326 = vmatprep.mubr.bf16.mxu0 0
    %1327 = vmatmul.mubr.bf16.gmra.mrb[0].mxu0 %v1289
    %v1328 = vpop.f32.mrb[0].mxu0
    %v1329 = vadd.f32 %v1274, %v1328
    %v1330 = vpop.f32.mrb[0].mxu0
    %v1331 = vpop.f32.mrb[0].mxu0
    %v1332 = vadd.f32 %v1277, %v1331
    %v1333 = vpop.f32.mrb[0].mxu0
    %1334 = vmatprep.mubr.bf16.mxu0 0
    %1335 = vmatmul.mubr.bf16.gmra.mrb[0].mxu0 %v1292
    %v1336 = vpop.f32.mrb[0].mxu0
    %v1337 = vadd.f32 %v1282, %v1336
    %v1338 = vpop.f32.mrb[0].mxu0
    %v1339 = vpop.f32.mrb[0].mxu0
    %v1340 = vadd.f32 %v1285, %v1339
    %v1341 = vpop.f32.mrb[0].mxu0
    %1342 = vdwg.mxu0
    %v1343 = vld [vmem:[%s19] sm:$0x1]
    %v1345 = vlaneseq
    %v1346 = vshrl.u32 %v1345, 7
    %v1347 = vsub.s32 0, %v1346
    %v1348 = vrot.slane %v1343, %v1347
    %v1350 = vadd.f32 %v1329, %v1348
    %v1351 = vadd.f32 %v1332, %v1348
    %v1352 = vadd.f32 %v1337, %v1348
    %v1353 = vadd.f32 %v1340, %v1348
    %v1354 = vadd.f32 %v1350, %v220
    %v1355 = vadd.f32 %v1351, %v221
    %v1356 = vadd.f32 %v1352, %v222
    %v1357 = vadd.f32 %v1353, %v223
    %v1358 = vld [vmem:[%s21] sm:$0x1]
    %v1359 = vld [vmem:[%s23] sm:$0x1]
    %v1360 = vsel %vm150, %v1354, 0.0
    %1361 = vadd.xlane.f32.xlu0 %v1360
    %v1362 = vpop.xlane.xlu0 %1361
    %v1363 = vsel %vm150, %v1355, 0.0
    %1364 = vadd.xlane.f32.xlu0 %v1363
    %v1365 = vpop.xlane.xlu0 %1364
    %v1366 = vsel %vm150, %v1356, 0.0
    %1367 = vadd.xlane.f32.xlu0 %v1366
    %v1368 = vpop.xlane.xlu0 %1367
    %v1369 = vsel %vm150, %v1357, 0.0
    %1370 = vadd.xlane.f32.xlu0 %v1369
    %v1371 = vpop.xlane.xlu0 %1370
    %v1372 = vmul.f32 %v1362, %v163
    %v1373 = vmul.f32 %v1365, %v163
    %v1374 = vmul.f32 %v1368, %v163
    %v1375 = vmul.f32 %v1371, %v163
    %v1376 = vsub.f32 %v1354, %v1372
    %v1377 = vsub.f32 %v1355, %v1373
    %v1378 = vsub.f32 %v1356, %v1374
    %v1379 = vsub.f32 %v1357, %v1375
    %v1380 = vmul.f32 %v1376, %v1376
    %v1381 = vmul.f32 %v1377, %v1377
    %v1382 = vmul.f32 %v1378, %v1378
    %v1383 = vmul.f32 %v1379, %v1379
    %v1384 = vsel %vm150, %v1380, 0.0
    %1385 = vadd.xlane.f32.xlu0 %v1384
    %v1386 = vpop.xlane.xlu0 %1385
    %v1387 = vsel %vm150, %v1381, 0.0
    %1388 = vadd.xlane.f32.xlu0 %v1387
    %v1389 = vpop.xlane.xlu0 %1388
    %v1390 = vsel %vm150, %v1382, 0.0
    %1391 = vadd.xlane.f32.xlu0 %v1390
    %v1392 = vpop.xlane.xlu0 %1391
    %v1393 = vsel %vm150, %v1383, 0.0
    %1394 = vadd.xlane.f32.xlu0 %v1393
    %v1395 = vpop.xlane.xlu0 %1394
    %v1396 = vmul.f32 %v1386, %v163
    %v1397 = vmul.f32 %v1389, %v163
    %v1398 = vmul.f32 %v1392, %v163
    %v1399 = vmul.f32 %v1395, %v163
    %v1400 = vadd.f32 %v1396, 1e-12
    %v1401 = vadd.f32 %v1397, 1e-12
    %v1402 = vadd.f32 %v1398, 1e-12
    %v1403 = vadd.f32 %v1399, 1e-12
    %v1404 = vrsqrt.pop %v1400
    %v1405 = vrsqrt.pop %v1401
    %v1406 = vrsqrt.pop %v1402
    %v1407 = vrsqrt.pop %v1403
    %v1408 = vmul.f32 %v1376, %v1404
    %v1409 = vmul.f32 %v1377, %v1405
    %v1410 = vmul.f32 %v1378, %v1406
    %v1411 = vmul.f32 %v1379, %v1407
    %v1413 = vlaneseq
    %v1414 = vshrl.u32 %v1413, 7
    %v1415 = vsub.s32 0, %v1414
    %v1416 = vrot.slane %v1358, %v1415
    %v1418 = vmul.f32 %v1408, %v1416
    %v1419 = vmul.f32 %v1409, %v1416
    %v1420 = vmul.f32 %v1410, %v1416
    %v1421 = vmul.f32 %v1411, %v1416
    %v1423 = vlaneseq
    %v1424 = vshrl.u32 %v1423, 7
    %v1425 = vsub.s32 0, %v1424
    %v1426 = vrot.slane %v1359, %v1425
    %v1428 = vadd.f32 %v1418, %v1426
    %v1429 = vadd.f32 %v1419, %v1426
    %v1430 = vadd.f32 %v1420, %v1426
    %v1431 = vadd.f32 %v1421, %v1426
    %v1432 = vld [vmem:[%s25] sm:$0xff]
    %v1433 = vld [vmem:[%s25 + $0x8] sm:$0xff]
    %v1434 = vld [vmem:[%s25 + $0x10] sm:$0xff]
    %v1435 = vld [vmem:[%s25 + $0x18] sm:$0xff]
    %v1436 = vpack.c.bf16 %v1429, %v1428
    %v1437 = vpack.c.bf16 %v1431, %v1430
    %v1438 = vpack.c.bf16 %v1433, %v1432
    %v1439 = vpack.c.bf16 %v1435, %v1434
    %v1440 = vld [vmem:[%s27] sm:$0x1]
    %v1442 = vlaneseq
    %v1443 = vshrl.u32 %v1442, 7
    %v1444 = vsub.s32 0, %v1443
    %v1445 = vrot.slane %v1440, %v1444
    %v1448 = vsel %vm150, %v1436, 0
    %v1451 = vsel %vm150, %v1437, 0
    %1453 = vmatprep.subr.bf16.mxu0 0
    %1454 = vmatpush1.bf16.msra.mxu0 %v1438
    %1455 = vmatprep.subr.bf16.mxu0 0
    %1456 = vmatpush1.bf16.msra.mxu0 %v1439
    %1457 = vmatprep.subr.bf16.mxu0 0
    %1458 = vmatpush1.bf16.msra.mxu0 0
    %1459 = vmatprep.subr.bf16.mxu0 0
    %1460 = vmatpush1.bf16.msra.mxu0 0
    %1461 = vmatprep.subr.bf16.mxu0 0
    %1462 = vmatpush1.bf16.msra.mxu0 0
    %1463 = vmatprep.subr.bf16.mxu0 0
    %1464 = vmatpush1.bf16.msra.mxu0 0
    %1465 = vmatprep.subr.bf16.mxu0 0
    %1466 = vmatpush1.bf16.msra.mxu0 0
    %1467 = vmatprep.subr.bf16.mxu0 0
    %1468 = vmatpush1.bf16.msra.mxu0 0
    %1469 = vmatprep.subr.bf16.mxu0 0
    %1470 = vmatpush1.bf16.msra.mxu0 0
    %1471 = vmatprep.subr.bf16.mxu0 0
    %1472 = vmatpush1.bf16.msra.mxu0 0
    %1473 = vmatprep.subr.bf16.mxu0 0
    %1474 = vmatpush1.bf16.msra.mxu0 0
    %1475 = vmatprep.subr.bf16.mxu0 0
    %1476 = vmatpush1.bf16.msra.mxu0 0
    %1477 = vmatprep.subr.bf16.mxu0 0
    %1478 = vmatpush1.bf16.msra.mxu0 0
    %1479 = vmatprep.subr.bf16.mxu0 0
    %1480 = vmatpush1.bf16.msra.mxu0 0
    %1481 = vmatprep.subr.bf16.mxu0 0
    %1482 = vmatpush1.bf16.msra.mxu0 0
    %1483 = vmatprep.subr.bf16.mxu0 0
    %1484 = vmatpush1.bf16.msra.mxu0 0
    %1485 = vmatprep.mubr.bf16.mxu0 0
    %1486 = vmatmul.mubr.bf16.gmra.mrb[0].mxu0 %v1448
    %v1487 = vpop.f32.mrb[0].mxu0
    %v1488 = vadd.f32 %v1445, %v1487
    %v1489 = vpop.f32.mrb[0].mxu0
    %v1490 = vpop.f32.mrb[0].mxu0
    %v1491 = vadd.f32 %v1445, %v1490
    %v1492 = vpop.f32.mrb[0].mxu0
    %1493 = vmatprep.mubr.bf16.mxu0 0
    %1494 = vmatmul.mubr.bf16.gmra.mrb[0].mxu0 %v1451
    %v1495 = vpop.f32.mrb[0].mxu0
    %v1496 = vadd.f32 %v1445, %v1495
    %v1497 = vpop.f32.mrb[0].mxu0
    %v1498 = vpop.f32.mrb[0].mxu0
    %v1499 = vadd.f32 %v1445, %v1498
    %v1500 = vpop.f32.mrb[0].mxu0
    %1501 = vdwg.mxu0
    %v1502 = vmul.f32 %v1488, 0.5
    %v1503 = vmul.f32 %v1491, 0.5
    %v1504 = vmul.f32 %v1496, 0.5
    %v1505 = vmul.f32 %v1499, 0.5
    %v1506 = vmul.f32 %v1488, 0.044715
    %v1507 = vmul.f32 %v1491, 0.044715
    %v1508 = vmul.f32 %v1496, 0.044715
    %v1509 = vmul.f32 %v1499, 0.044715
    %v1510 = vmul.f32 %v1506, %v1488
    %v1511 = vmul.f32 %v1507, %v1491
    %v1512 = vmul.f32 %v1508, %v1496
    %v1513 = vmul.f32 %v1509, %v1499
    %v1514 = vmul.f32 %v1510, %v1488
    %v1515 = vmul.f32 %v1511, %v1491
    %v1516 = vmul.f32 %v1512, %v1496
    %v1517 = vmul.f32 %v1513, %v1499
    %v1518 = vadd.f32 %v1488, %v1514
    %v1519 = vadd.f32 %v1491, %v1515
    %v1520 = vadd.f32 %v1496, %v1516
    %v1521 = vadd.f32 %v1499, %v1517
    %v1522 = vmul.f32 %v1518, 0.7978846
    %v1523 = vmul.f32 %v1519, 0.7978846
    %v1524 = vmul.f32 %v1520, 0.7978846
    %v1525 = vmul.f32 %v1521, 0.7978846
    %v1526 = vtanh.pop %v1522
    %v1527 = vtanh.pop %v1523
    %v1528 = vtanh.pop %v1524
    %v1529 = vtanh.pop %v1525
    %v1530 = vadd.f32 %v1526, 1.0
    %v1531 = vadd.f32 %v1527, 1.0
    %v1532 = vadd.f32 %v1528, 1.0
    %v1533 = vadd.f32 %v1529, 1.0
    %v1534 = vmul.f32 %v1502, %v1530
    %v1535 = vmul.f32 %v1503, %v1531
    %v1536 = vmul.f32 %v1504, %v1532
    %v1537 = vmul.f32 %v1505, %v1533
    %v1538 = vld [vmem:[%s29] sm:$0xff]
    %v1539 = vld [vmem:[%s29 + $0x8] sm:$0xff]
    %v1540 = vld [vmem:[%s29 + $0x10] sm:$0xff]
    %v1541 = vld [vmem:[%s29 + $0x18] sm:$0xff]
    %v1542 = vld [vmem:[%s29 + $0x20] sm:$0xff]
    %v1543 = vld [vmem:[%s29 + $0x28] sm:$0xff]
    %v1544 = vld [vmem:[%s29 + $0x30] sm:$0xff]
    %v1545 = vld [vmem:[%s29 + $0x38] sm:$0xff]
    %v1546 = vpack.c.bf16 %v1535, %v1534
    %v1547 = vpack.c.bf16 %v1537, %v1536
    %v1548 = vpack.c.bf16 %v1539, %v1538
    %v1549 = vpack.c.bf16 %v1541, %v1540
    %v1550 = vpack.c.bf16 %v1543, %v1542
    %v1551 = vpack.c.bf16 %v1545, %v1544
    %v1552 = vld [vmem:[%s31] sm:$0x1]
    %v1554 = vlaneseq
    %v1555 = vshrl.u32 %v1554, 7
    %v1556 = vsub.s32 0, %v1555
    %v1557 = vrot.slane %v1552, %v1556
    %vm1559 = vcmask 523264
    %v1561 = vsel %vm1559, %v1546, 0
    %v1564 = vsel %vm1559, %v1547, 0
    %1566 = vmatprep.subr.bf16.mxu0 0
    %1567 = vmatpush1.bf16.msra.mxu0 %v1548
    %1568 = vmatprep.subr.bf16.mxu0 0
    %1569 = vmatpush1.bf16.msra.mxu0 %v1549
    %1570 = vmatprep.subr.bf16.mxu0 0
    %1571 = vmatpush1.bf16.msra.mxu0 %v1550
    %1572 = vmatprep.subr.bf16.mxu0 0
    %1573 = vmatpush1.bf16.msra.mxu0 %v1551
    %1574 = vmatprep.subr.bf16.mxu0 0
    %1575 = vmatpush1.bf16.msra.mxu0 0
    %1576 = vmatprep.subr.bf16.mxu0 0
    %1577 = vmatpush1.bf16.msra.mxu0 0
    %1578 = vmatprep.subr.bf16.mxu0 0
    %1579 = vmatpush1.bf16.msra.mxu0 0
    %1580 = vmatprep.subr.bf16.mxu0 0
    %1581 = vmatpush1.bf16.msra.mxu0 0
    %1582 = vmatprep.subr.bf16.mxu0 0
    %1583 = vmatpush1.bf16.msra.mxu0 0
    %1584 = vmatprep.subr.bf16.mxu0 0
    %1585 = vmatpush1.bf16.msra.mxu0 0
    %1586 = vmatprep.subr.bf16.mxu0 0
    %1587 = vmatpush1.bf16.msra.mxu0 0
    %1588 = vmatprep.subr.bf16.mxu0 0
    %1589 = vmatpush1.bf16.msra.mxu0 0
    %1590 = vmatprep.subr.bf16.mxu0 0
    %1591 = vmatpush1.bf16.msra.mxu0 0
    %1592 = vmatprep.subr.bf16.mxu0 0
    %1593 = vmatpush1.bf16.msra.mxu0 0
    %1594 = vmatprep.subr.bf16.mxu0 0
    %1595 = vmatpush1.bf16.msra.mxu0 0
    %1596 = vmatprep.subr.bf16.mxu0 0
    %1597 = vmatpush1.bf16.msra.mxu0 0
    %1598 = vmatprep.mubr.bf16.mxu0 0
    %1599 = vmatmul.mubr.bf16.gmra.mrb[0].mxu0 %v1561
    %v1600 = vpop.f32.mrb[0].mxu0
    %v1601 = vadd.f32 %v1557, %v1600
    %v1602 = vpop.f32.mrb[0].mxu0
    %v1603 = vpop.f32.mrb[0].mxu0
    %v1604 = vadd.f32 %v1557, %v1603
    %v1605 = vpop.f32.mrb[0].mxu0
    %1606 = vmatprep.mubr.bf16.mxu0 0
    %1607 = vmatmul.mubr.bf16.gmra.mrb[0].mxu0 %v1564
    %v1608 = vpop.f32.mrb[0].mxu0
    %v1609 = vadd.f32 %v1557, %v1608
    %v1610 = vpop.f32.mrb[0].mxu0
    %v1611 = vpop.f32.mrb[0].mxu0
    %v1612 = vadd.f32 %v1557, %v1611
    %v1613 = vpop.f32.mrb[0].mxu0
    %1614 = vdwg.mxu0
    %v1615 = vadd.f32 %v1601, %v1428
    %v1616 = vadd.f32 %v1604, %v1429
    %v1617 = vadd.f32 %v1609, %v1430
    %v1618 = vadd.f32 %v1612, %v1431
    %v1619 = vld [vmem:[%s33] sm:$0x1]
    %v1620 = vld [vmem:[%s35] sm:$0x1]
    %v1621 = vsel %vm150, %v1615, 0.0
    %1622 = vadd.xlane.f32.xlu0 %v1621
    %v1623 = vpop.xlane.xlu0 %1622
    %v1624 = vsel %vm150, %v1616, 0.0
    %1625 = vadd.xlane.f32.xlu0 %v1624
    %v1626 = vpop.xlane.xlu0 %1625
    %v1627 = vsel %vm150, %v1617, 0.0
    %1628 = vadd.xlane.f32.xlu0 %v1627
    %v1629 = vpop.xlane.xlu0 %1628
    %v1630 = vsel %vm150, %v1618, 0.0
    %1631 = vadd.xlane.f32.xlu0 %v1630
    %v1632 = vpop.xlane.xlu0 %1631
    %v1633 = vmul.f32 %v1623, %v163
    %v1634 = vmul.f32 %v1626, %v163
    %v1635 = vmul.f32 %v1629, %v163
    %v1636 = vmul.f32 %v1632, %v163
    %v1637 = vsub.f32 %v1615, %v1633
    %v1638 = vsub.f32 %v1616, %v1634
    %v1639 = vsub.f32 %v1617, %v1635
    %v1640 = vsub.f32 %v1618, %v1636
    %v1641 = vmul.f32 %v1637, %v1637
    %v1642 = vmul.f32 %v1638, %v1638
    %v1643 = vmul.f32 %v1639, %v1639
    %v1644 = vmul.f32 %v1640, %v1640
    %v1645 = vsel %vm150, %v1641, 0.0
    %1646 = vadd.xlane.f32.xlu0 %v1645
    %v1647 = vpop.xlane.xlu0 %1646
    %v1648 = vsel %vm150, %v1642, 0.0
    %1649 = vadd.xlane.f32.xlu0 %v1648
    %v1650 = vpop.xlane.xlu0 %1649
    %v1651 = vsel %vm150, %v1643, 0.0
    %1652 = vadd.xlane.f32.xlu0 %v1651
    %v1653 = vpop.xlane.xlu0 %1652
    %v1654 = vsel %vm150, %v1644, 0.0
    %1655 = vadd.xlane.f32.xlu0 %v1654
    %v1656 = vpop.xlane.xlu0 %1655
    %v1657 = vmul.f32 %v1647, %v163
    %v1658 = vmul.f32 %v1650, %v163
    %v1659 = vmul.f32 %v1653, %v163
    %v1660 = vmul.f32 %v1656, %v163
    %v1661 = vadd.f32 %v1657, 1e-12
    %v1662 = vadd.f32 %v1658, 1e-12
    %v1663 = vadd.f32 %v1659, 1e-12
    %v1664 = vadd.f32 %v1660, 1e-12
    %v1665 = vrsqrt.pop %v1661
    %v1666 = vrsqrt.pop %v1662
    %v1667 = vrsqrt.pop %v1663
    %v1668 = vrsqrt.pop %v1664
    %v1669 = vmul.f32 %v1637, %v1665
    %v1670 = vmul.f32 %v1638, %v1666
    %v1671 = vmul.f32 %v1639, %v1667
    %v1672 = vmul.f32 %v1640, %v1668
    %v1674 = vlaneseq
    %v1675 = vshrl.u32 %v1674, 7
    %v1676 = vsub.s32 0, %v1675
    %v1677 = vrot.slane %v1619, %v1676
    %v1679 = vmul.f32 %v1669, %v1677
    %v1680 = vmul.f32 %v1670, %v1677
    %v1681 = vmul.f32 %v1671, %v1677
    %v1682 = vmul.f32 %v1672, %v1677
    %v1684 = vlaneseq
    %v1685 = vshrl.u32 %v1684, 7
    %v1686 = vsub.s32 0, %v1685
    %v1687 = vrot.slane %v1620, %v1686
    %v1689 = vadd.f32 %v1679, %v1687
    %v1690 = vadd.f32 %v1680, %v1687
    %v1691 = vadd.f32 %v1681, %v1687
    %v1692 = vadd.f32 %v1682, %v1687
    %s1693 = scalar_lea.vmem %s13, 32
    %v1694 = vld [vmem:[%s1693] sm:$0xff]
    %v1695 = vld [vmem:[%s1693 + $0x8] sm:$0xff]
    %v1696 = vld [vmem:[%s1693 + $0x10] sm:$0xff]
    %v1697 = vld [vmem:[%s1693 + $0x18] sm:$0xff]
    %v1698 = vpack.c.bf16 %v1690, %v1689
    %v1699 = vpack.c.bf16 %v1692, %v1691
    %v1700 = vpack.c.bf16 %v1695, %v1694
    %v1701 = vpack.c.bf16 %v1697, %v1696
    %s1702 = scalar_lea.vmem %s15, 1
    %v1703 = vld [vmem:[%s1702] sm:$0x1]
    %v1705 = vlaneseq
    %v1706 = vshrl.u32 %v1705, 7
    %v1707 = vsub.s32 0, %v1706
    %v1708 = vrot.slane %v1703, %v1707
    %v1711 = vsel %vm150, %v1698, 0
    %v1714 = vsel %vm150, %v1699, 0
    %1716 = vmatprep.subr.bf16.mxu0 0
    %1717 = vmatpush1.bf16.msra.mxu0 %v1700
    %1718 = vmatprep.subr.bf16.mxu0 0
    %1719 = vmatpush1.bf16.msra.mxu0 %v1701
    %1720 = vmatprep.subr.bf16.mxu0 0
    %1721 = vmatpush1.bf16.msra.mxu0 0
    %1722 = vmatprep.subr.bf16.mxu0 0
    %1723 = vmatpush1.bf16.msra.mxu0 0
    %1724 = vmatprep.subr.bf16.mxu0 0
    %1725 = vmatpush1.bf16.msra.mxu0 0
    %1726 = vmatprep.subr.bf16.mxu0 0
    %1727 = vmatpush1.bf16.msra.mxu0 0
    %1728 = vmatprep.subr.bf16.mxu0 0
    %1729 = vmatpush1.bf16.msra.mxu0 0
    %1730 = vmatprep.subr.bf16.mxu0 0
    %1731 = vmatpush1.bf16.msra.mxu0 0
    %1732 = vmatprep.subr.bf16.mxu0 0
    %1733 = vmatpush1.bf16.msra.mxu0 0
    %1734 = vmatprep.subr.bf16.mxu0 0
    %1735 = vmatpush1.bf16.msra.mxu0 0
    %1736 = vmatprep.subr.bf16.mxu0 0
    %1737 = vmatpush1.bf16.msra.mxu0 0
    %1738 = vmatprep.subr.bf16.mxu0 0
    %1739 = vmatpush1.bf16.msra.mxu0 0
    %1740 = vmatprep.subr.bf16.mxu0 0
    %1741 = vmatpush1.bf16.msra.mxu0 0
    %1742 = vmatprep.subr.bf16.mxu0 0
    %1743 = vmatpush1.bf16.msra.mxu0 0
    %1744 = vmatprep.subr.bf16.mxu0 0
    %1745 = vmatpush1.bf16.msra.mxu0 0
    %1746 = vmatprep.subr.bf16.mxu0 0
    %1747 = vmatpush1.bf16.msra.mxu0 0
    %1748 = vmatprep.mubr.bf16.mxu0 0
    %1749 = vmatmul.mubr.bf16.gmra.mrb[0].mxu0 %v1711
    %v1750 = vpop.f32.mrb[0].mxu0
    %v1751 = vadd.f32 %v1708, %v1750
    %v1752 = vpop.f32.mrb[0].mxu0
    %v1753 = vpop.f32.mrb[0].mxu0
    %v1754 = vadd.f32 %v1708, %v1753
    %v1755 = vpop.f32.mrb[0].mxu0
    %1756 = vmatprep.mubr.bf16.mxu0 0
    %1757 = vmatmul.mubr.bf16.gmra.mrb[0].mxu0 %v1714
    %v1758 = vpop.f32.mrb[0].mxu0
    %v1759 = vadd.f32 %v1708, %v1758
    %v1760 = vpop.f32.mrb[0].mxu0
    %v1761 = vpop.f32.mrb[0].mxu0
    %v1762 = vadd.f32 %v1708, %v1761
    %v1763 = vpop.f32.mrb[0].mxu0
    %1764 = vdwg.mxu0
    %s1765 = scalar_lea.vmem %s17, 32
    %v1766 = vld [vmem:[%s1765] sm:$0xff]
    %v1767 = vld [vmem:[%s1765 + $0x8] sm:$0xff]
    %v1768 = vld [vmem:[%s1765 + $0x10] sm:$0xff]
    %v1769 = vld [vmem:[%s1765 + $0x18] sm:$0xff]
    %v1770 = vpack.c.bf16 %v1751, %v1751
    %v1771 = vpack.c.bf16 %v1754, %v1754
    %v1772 = vpack.c.bf16 %v1759, %v1759
    %v1773 = vpack.c.bf16 %v1762, %v1762
    %1775 = vrot.lane.b32.xlu0 %v1770, 96
    %v1776 = vpop.permute.xlu0 %1775
    %v1778 = vsel %vm351, %v1770, 0
    %v1781 = vsel %vm351, %v1776, 0
    %1783 = vmatprep.subr.bf16.mxu0 0
    %1784 = vmatpush1.bf16.xpose.msra.mxu0 %v1781
    %1785 = vmatprep.subr.bf16.mxu0 0
    %1786 = vmatpush1.bf16.xpose.msra.mxu0 0
    %1787 = vmatprep.subr.bf16.mxu0 0
    %1788 = vmatpush1.bf16.xpose.msra.mxu0 0
    %1789 = vmatprep.subr.bf16.mxu0 0
    %1790 = vmatpush1.bf16.xpose.msra.mxu0 0
    %1791 = vmatprep.subr.bf16.mxu0 0
    %1792 = vmatpush1.bf16.xpose.msra.mxu0 0
    %1793 = vmatprep.subr.bf16.mxu0 0
    %1794 = vmatpush1.bf16.xpose.msra.mxu0 0
    %1795 = vmatprep.subr.bf16.mxu0 0
    %1796 = vmatpush1.bf16.xpose.msra.mxu0 0
    %1797 = vmatprep.subr.bf16.mxu0 0
    %1798 = vmatpush1.bf16.xpose.msra.mxu0 0
    %1799 = vmatprep.subr.bf16.mxu0 0
    %1800 = vmatpush1.bf16.xpose.msra.mxu0 0
    %1801 = vmatprep.subr.bf16.mxu0 0
    %1802 = vmatpush1.bf16.xpose.msra.mxu0 0
    %1803 = vmatprep.subr.bf16.mxu0 0
    %1804 = vmatpush1.bf16.xpose.msra.mxu0 0
    %1805 = vmatprep.subr.bf16.mxu0 0
    %1806 = vmatpush1.bf16.xpose.msra.mxu0 0
    %1807 = vmatprep.subr.bf16.mxu0 0
    %1808 = vmatpush1.bf16.xpose.msra.mxu0 0
    %1809 = vmatprep.subr.bf16.mxu0 0
    %1810 = vmatpush1.bf16.xpose.msra.mxu0 0
    %1811 = vmatprep.subr.bf16.mxu0 0
    %1812 = vmatpush1.bf16.xpose.msra.mxu0 0
    %1813 = vmatprep.subr.bf16.mxu0 0
    %1814 = vmatpush1.bf16.xpose.msra.mxu0 0
    %1815 = vmatprep.mubr.bf16.mxu0 0
    %1816 = vmatmul.mubr.bf16.gmra.mrb[0].mxu0 %v1778
    %v1817 = vpop.f32.mrb[0].mxu0
    %v1818 = vadd.f32 %v331, %v1817
    %v1819 = vpop.f32.mrb[0].mxu0
    %v1820 = vpop.f32.mrb[0].mxu0
    %v1821 = vpop.f32.mrb[0].mxu0
    %1822 = vdwg.mxu0
    %1824 = vrot.lane.b32.xlu0 %v1771, 96
    %v1825 = vpop.permute.xlu0 %1824
    %v1827 = vsel %vm351, %v1771, 0
    %v1830 = vsel %vm351, %v1825, 0
    %1832 = vmatprep.subr.bf16.mxu0 0
    %1833 = vmatpush1.bf16.xpose.msra.mxu0 %v1830
    %1834 = vmatprep.subr.bf16.mxu0 0
    %1835 = vmatpush1.bf16.xpose.msra.mxu0 0
    %1836 = vmatprep.subr.bf16.mxu0 0
    %1837 = vmatpush1.bf16.xpose.msra.mxu0 0
    %1838 = vmatprep.subr.bf16.mxu0 0
    %1839 = vmatpush1.bf16.xpose.msra.mxu0 0
    %1840 = vmatprep.subr.bf16.mxu0 0
    %1841 = vmatpush1.bf16.xpose.msra.mxu0 0
    %1842 = vmatprep.subr.bf16.mxu0 0
    %1843 = vmatpush1.bf16.xpose.msra.mxu0 0
    %1844 = vmatprep.subr.bf16.mxu0 0
    %1845 = vmatpush1.bf16.xpose.msra.mxu0 0
    %1846 = vmatprep.subr.bf16.mxu0 0
    %1847 = vmatpush1.bf16.xpose.msra.mxu0 0
    %1848 = vmatprep.subr.bf16.mxu0 0
    %1849 = vmatpush1.bf16.xpose.msra.mxu0 0
    %1850 = vmatprep.subr.bf16.mxu0 0
    %1851 = vmatpush1.bf16.xpose.msra.mxu0 0
    %1852 = vmatprep.subr.bf16.mxu0 0
    %1853 = vmatpush1.bf16.xpose.msra.mxu0 0
    %1854 = vmatprep.subr.bf16.mxu0 0
    %1855 = vmatpush1.bf16.xpose.msra.mxu0 0
    %1856 = vmatprep.subr.bf16.mxu0 0
    %1857 = vmatpush1.bf16.xpose.msra.mxu0 0
    %1858 = vmatprep.subr.bf16.mxu0 0
    %1859 = vmatpush1.bf16.xpose.msra.mxu0 0
    %1860 = vmatprep.subr.bf16.mxu0 0
    %1861 = vmatpush1.bf16.xpose.msra.mxu0 0
    %1862 = vmatprep.subr.bf16.mxu0 0
    %1863 = vmatpush1.bf16.xpose.msra.mxu0 0
    %1864 = vmatprep.mubr.bf16.mxu0 0
    %1865 = vmatmul.mubr.bf16.gmra.mrb[0].mxu0 %v1827
    %v1866 = vpop.f32.mrb[0].mxu0
    %v1867 = vadd.f32 %v335, %v1866
    %v1868 = vpop.f32.mrb[0].mxu0
    %v1869 = vpop.f32.mrb[0].mxu0
    %v1870 = vpop.f32.mrb[0].mxu0
    %1871 = vdwg.mxu0
    %1873 = vrot.lane.b32.xlu0 %v1772, 96
    %v1874 = vpop.permute.xlu0 %1873
    %v1876 = vsel %vm351, %v1772, 0
    %v1879 = vsel %vm351, %v1874, 0
    %1881 = vmatprep.subr.bf16.mxu0 0
    %1882 = vmatpush1.bf16.xpose.msra.mxu0 %v1879
    %1883 = vmatprep.subr.bf16.mxu0 0
    %1884 = vmatpush1.bf16.xpose.msra.mxu0 0
    %1885 = vmatprep.subr.bf16.mxu0 0
    %1886 = vmatpush1.bf16.xpose.msra.mxu0 0
    %1887 = vmatprep.subr.bf16.mxu0 0
    %1888 = vmatpush1.bf16.xpose.msra.mxu0 0
    %1889 = vmatprep.subr.bf16.mxu0 0
    %1890 = vmatpush1.bf16.xpose.msra.mxu0 0
    %1891 = vmatprep.subr.bf16.mxu0 0
    %1892 = vmatpush1.bf16.xpose.msra.mxu0 0
    %1893 = vmatprep.subr.bf16.mxu0 0
    %1894 = vmatpush1.bf16.xpose.msra.mxu0 0
    %1895 = vmatprep.subr.bf16.mxu0 0
    %1896 = vmatpush1.bf16.xpose.msra.mxu0 0
    %1897 = vmatprep.subr.bf16.mxu0 0
    %1898 = vmatpush1.bf16.xpose.msra.mxu0 0
    %1899 = vmatprep.subr.bf16.mxu0 0
    %1900 = vmatpush1.bf16.xpose.msra.mxu0 0
    %1901 = vmatprep.subr.bf16.mxu0 0
    %1902 = vmatpush1.bf16.xpose.msra.mxu0 0
    %1903 = vmatprep.subr.bf16.mxu0 0
    %1904 = vmatpush1.bf16.xpose.msra.mxu0 0
    %1905 = vmatprep.subr.bf16.mxu0 0
    %1906 = vmatpush1.bf16.xpose.msra.mxu0 0
    %1907 = vmatprep.subr.bf16.mxu0 0
    %1908 = vmatpush1.bf16.xpose.msra.mxu0 0
    %1909 = vmatprep.subr.bf16.mxu0 0
    %1910 = vmatpush1.bf16.xpose.msra.mxu0 0
    %1911 = vmatprep.subr.bf16.mxu0 0
    %1912 = vmatpush1.bf16.xpose.msra.mxu0 0
    %1913 = vmatprep.mubr.bf16.mxu0 0
    %1914 = vmatmul.mubr.bf16.gmra.mrb[0].mxu0 %v1876
    %v1915 = vpop.f32.mrb[0].mxu0
    %v1916 = vadd.f32 %v339, %v1915
    %v1917 = vpop.f32.mrb[0].mxu0
    %v1918 = vpop.f32.mrb[0].mxu0
    %v1919 = vpop.f32.mrb[0].mxu0
    %1920 = vdwg.mxu0
    %1922 = vrot.lane.b32.xlu0 %v1773, 96
    %v1923 = vpop.permute.xlu0 %1922
    %v1925 = vsel %vm351, %v1773, 0
    %v1928 = vsel %vm351, %v1923, 0
    %1930 = vmatprep.subr.bf16.mxu0 0
    %1931 = vmatpush1.bf16.xpose.msra.mxu0 %v1928
    %1932 = vmatprep.subr.bf16.mxu0 0
    %1933 = vmatpush1.bf16.xpose.msra.mxu0 0
    %1934 = vmatprep.subr.bf16.mxu0 0
    %1935 = vmatpush1.bf16.xpose.msra.mxu0 0
    %1936 = vmatprep.subr.bf16.mxu0 0
    %1937 = vmatpush1.bf16.xpose.msra.mxu0 0
    %1938 = vmatprep.subr.bf16.mxu0 0
    %1939 = vmatpush1.bf16.xpose.msra.mxu0 0
    %1940 = vmatprep.subr.bf16.mxu0 0
    %1941 = vmatpush1.bf16.xpose.msra.mxu0 0
    %1942 = vmatprep.subr.bf16.mxu0 0
    %1943 = vmatpush1.bf16.xpose.msra.mxu0 0
    %1944 = vmatprep.subr.bf16.mxu0 0
    %1945 = vmatpush1.bf16.xpose.msra.mxu0 0
    %1946 = vmatprep.subr.bf16.mxu0 0
    %1947 = vmatpush1.bf16.xpose.msra.mxu0 0
    %1948 = vmatprep.subr.bf16.mxu0 0
    %1949 = vmatpush1.bf16.xpose.msra.mxu0 0
    %1950 = vmatprep.subr.bf16.mxu0 0
    %1951 = vmatpush1.bf16.xpose.msra.mxu0 0
    %1952 = vmatprep.subr.bf16.mxu0 0
    %1953 = vmatpush1.bf16.xpose.msra.mxu0 0
    %1954 = vmatprep.subr.bf16.mxu0 0
    %1955 = vmatpush1.bf16.xpose.msra.mxu0 0
    %1956 = vmatprep.subr.bf16.mxu0 0
    %1957 = vmatpush1.bf16.xpose.msra.mxu0 0
    %1958 = vmatprep.subr.bf16.mxu0 0
    %1959 = vmatpush1.bf16.xpose.msra.mxu0 0
    %1960 = vmatprep.subr.bf16.mxu0 0
    %1961 = vmatpush1.bf16.xpose.msra.mxu0 0
    %1962 = vmatprep.mubr.bf16.mxu0 0
    %1963 = vmatmul.mubr.bf16.gmra.mrb[0].mxu0 %v1925
    %v1964 = vpop.f32.mrb[0].mxu0
    %v1965 = vadd.f32 %v343, %v1964
    %v1966 = vpop.f32.mrb[0].mxu0
    %v1967 = vpop.f32.mrb[0].mxu0
    %v1968 = vpop.f32.mrb[0].mxu0
    %1969 = vdwg.mxu0
    %v1970 = vsel %vm545, %v1818, -inf
    %1971 = vmax.xlane.f32.xlu0 %v1970
    %v1972 = vpop.xlane.xlu0 %1971
    %v1973 = vsel %vm545, %v1867, -inf
    %1974 = vmax.xlane.f32.xlu0 %v1973
    %v1975 = vpop.xlane.xlu0 %1974
    %v1976 = vsel %vm545, %v1916, -inf
    %1977 = vmax.xlane.f32.xlu0 %v1976
    %v1978 = vpop.xlane.xlu0 %1977
    %v1979 = vsel %vm545, %v1965, -inf
    %1980 = vmax.xlane.f32.xlu0 %v1979
    %v1981 = vpop.xlane.xlu0 %1980
    %v1982 = vsub.f32 %v1818, %v1972
    %v1983 = vsub.f32 %v1867, %v1975
    %v1984 = vsub.f32 %v1916, %v1978
    %v1985 = vsub.f32 %v1965, %v1981
    %v1986 = vmul.f32 %v1982, 1.442695
    %v1987 = vpow.pop %v1986
    %v1988 = vmul.f32 %v1983, 1.442695
    %v1989 = vpow.pop %v1988
    %v1990 = vmul.f32 %v1984, 1.442695
    %v1991 = vpow.pop %v1990
    %v1992 = vmul.f32 %v1985, 1.442695
    %v1993 = vpow.pop %v1992
    %v1994 = vsel %vm545, %v1987, 0.0
    %1995 = vadd.xlane.f32.xlu0 %v1994
    %v1996 = vpop.xlane.xlu0 %1995
    %v1997 = vsel %vm545, %v1989, 0.0
    %1998 = vadd.xlane.f32.xlu0 %v1997
    %v1999 = vpop.xlane.xlu0 %1998
    %v2000 = vsel %vm545, %v1991, 0.0
    %2001 = vadd.xlane.f32.xlu0 %v2000
    %v2002 = vpop.xlane.xlu0 %2001
    %v2003 = vsel %vm545, %v1993, 0.0
    %2004 = vadd.xlane.f32.xlu0 %v2003
    %v2005 = vpop.xlane.xlu0 %2004
    %v2006 = vrcp.pop %v1996
    %v2007 = vrcp.pop %v1999
    %v2008 = vrcp.pop %v2002
    %v2009 = vrcp.pop %v2005
    %v2010 = vmul.f32 %v1987, %v2006
    %v2011 = vmul.f32 %v1989, %v2007
    %v2012 = vmul.f32 %v1991, %v2008
    %v2013 = vmul.f32 %v1993, %v2009
    %v2014 = vpack.c.bf16 %v2010, %v2010
    %v2015 = vpack.c.bf16 %v2011, %v2011
    %v2016 = vpack.c.bf16 %v2012, %v2012
    %v2017 = vpack.c.bf16 %v2013, %v2013
    %2018 = vrot.lane.b32.xlu0 %v1770, 64
    %v2019 = vpop.permute.xlu0 %2018
    %v2021 = vsel %vm545, %v2014, 0
    %v2024 = vsel %vm599, %v2019, 0
    %2026 = vmatprep.subr.bf16.mxu0 0
    %2027 = vmatpush1.bf16.msra.mxu0 %v2024
    %2028 = vmatprep.subr.bf16.mxu0 0
    %2029 = vmatpush1.bf16.msra.mxu0 0
    %2030 = vmatprep.subr.bf16.mxu0 0
    %2031 = vmatpush1.bf16.msra.mxu0 0
    %2032 = vmatprep.subr.bf16.mxu0 0
    %2033 = vmatpush1.bf16.msra.mxu0 0
    %2034 = vmatprep.subr.bf16.mxu0 0
    %2035 = vmatpush1.bf16.msra.mxu0 0
    %2036 = vmatprep.subr.bf16.mxu0 0
    %2037 = vmatpush1.bf16.msra.mxu0 0
    %2038 = vmatprep.subr.bf16.mxu0 0
    %2039 = vmatpush1.bf16.msra.mxu0 0
    %2040 = vmatprep.subr.bf16.mxu0 0
    %2041 = vmatpush1.bf16.msra.mxu0 0
    %2042 = vmatprep.subr.bf16.mxu0 0
    %2043 = vmatpush1.bf16.msra.mxu0 0
    %2044 = vmatprep.subr.bf16.mxu0 0
    %2045 = vmatpush1.bf16.msra.mxu0 0
    %2046 = vmatprep.subr.bf16.mxu0 0
    %2047 = vmatpush1.bf16.msra.mxu0 0
    %2048 = vmatprep.subr.bf16.mxu0 0
    %2049 = vmatpush1.bf16.msra.mxu0 0
    %2050 = vmatprep.subr.bf16.mxu0 0
    %2051 = vmatpush1.bf16.msra.mxu0 0
    %2052 = vmatprep.subr.bf16.mxu0 0
    %2053 = vmatpush1.bf16.msra.mxu0 0
    %2054 = vmatprep.subr.bf16.mxu0 0
    %2055 = vmatpush1.bf16.msra.mxu0 0
    %2056 = vmatprep.subr.bf16.mxu0 0
    %2057 = vmatpush1.bf16.msra.mxu0 0
    %2058 = vmatprep.mubr.bf16.mxu0 0
    %2059 = vmatmul.mubr.bf16.gmra.mrb[0].mxu0 %v2021
    %v2060 = vpop.f32.mrb[0].mxu0
    %v2061 = vadd.f32 0.0, %v2060
    %v2062 = vpop.f32.mrb[0].mxu0
    %v2063 = vpop.f32.mrb[0].mxu0
    %v2064 = vpop.f32.mrb[0].mxu0
    %2065 = vdwg.mxu0
    %2066 = vrot.lane.b32.xlu0 %v1771, 64
    %v2067 = vpop.permute.xlu0 %2066
    %v2069 = vsel %vm545, %v2015, 0
    %v2072 = vsel %vm599, %v2067, 0
    %2074 = vmatprep.subr.bf16.mxu0 0
    %2075 = vmatpush1.bf16.msra.mxu0 %v2072
    %2076 = vmatprep.subr.bf16.mxu0 0
    %2077 = vmatpush1.bf16.msra.mxu0 0
    %2078 = vmatprep.subr.bf16.mxu0 0
    %2079 = vmatpush1.bf16.msra.mxu0 0
    %2080 = vmatprep.subr.bf16.mxu0 0
    %2081 = vmatpush1.bf16.msra.mxu0 0
    %2082 = vmatprep.subr.bf16.mxu0 0
    %2083 = vmatpush1.bf16.msra.mxu0 0
    %2084 = vmatprep.subr.bf16.mxu0 0
    %2085 = vmatpush1.bf16.msra.mxu0 0
    %2086 = vmatprep.subr.bf16.mxu0 0
    %2087 = vmatpush1.bf16.msra.mxu0 0
    %2088 = vmatprep.subr.bf16.mxu0 0
    %2089 = vmatpush1.bf16.msra.mxu0 0
    %2090 = vmatprep.subr.bf16.mxu0 0
    %2091 = vmatpush1.bf16.msra.mxu0 0
    %2092 = vmatprep.subr.bf16.mxu0 0
    %2093 = vmatpush1.bf16.msra.mxu0 0
    %2094 = vmatprep.subr.bf16.mxu0 0
    %2095 = vmatpush1.bf16.msra.mxu0 0
    %2096 = vmatprep.subr.bf16.mxu0 0
    %2097 = vmatpush1.bf16.msra.mxu0 0
    %2098 = vmatprep.subr.bf16.mxu0 0
    %2099 = vmatpush1.bf16.msra.mxu0 0
    %2100 = vmatprep.subr.bf16.mxu0 0
    %2101 = vmatpush1.bf16.msra.mxu0 0
    %2102 = vmatprep.subr.bf16.mxu0 0
    %2103 = vmatpush1.bf16.msra.mxu0 0
    %2104 = vmatprep.subr.bf16.mxu0 0
    %2105 = vmatpush1.bf16.msra.mxu0 0
    %2106 = vmatprep.mubr.bf16.mxu0 0
    %2107 = vmatmul.mubr.bf16.gmra.mrb[0].mxu0 %v2069
    %v2108 = vpop.f32.mrb[0].mxu0
    %v2109 = vadd.f32 0.0, %v2108
    %v2110 = vpop.f32.mrb[0].mxu0
    %v2111 = vpop.f32.mrb[0].mxu0
    %v2112 = vpop.f32.mrb[0].mxu0
    %2113 = vdwg.mxu0
    %2114 = vrot.lane.b32.xlu0 %v1772, 64
    %v2115 = vpop.permute.xlu0 %2114
    %v2117 = vsel %vm545, %v2016, 0
    %v2120 = vsel %vm599, %v2115, 0
    %2122 = vmatprep.subr.bf16.mxu0 0
    %2123 = vmatpush1.bf16.msra.mxu0 %v2120
    %2124 = vmatprep.subr.bf16.mxu0 0
    %2125 = vmatpush1.bf16.msra.mxu0 0
    %2126 = vmatprep.subr.bf16.mxu0 0
    %2127 = vmatpush1.bf16.msra.mxu0 0
    %2128 = vmatprep.subr.bf16.mxu0 0
    %2129 = vmatpush1.bf16.msra.mxu0 0
    %2130 = vmatprep.subr.bf16.mxu0 0
    %2131 = vmatpush1.bf16.msra.mxu0 0
    %2132 = vmatprep.subr.bf16.mxu0 0
    %2133 = vmatpush1.bf16.msra.mxu0 0
    %2134 = vmatprep.subr.bf16.mxu0 0
    %2135 = vmatpush1.bf16.msra.mxu0 0
    %2136 = vmatprep.subr.bf16.mxu0 0
    %2137 = vmatpush1.bf16.msra.mxu0 0
    %2138 = vmatprep.subr.bf16.mxu0 0
    %2139 = vmatpush1.bf16.msra.mxu0 0
    %2140 = vmatprep.subr.bf16.mxu0 0
    %2141 = vmatpush1.bf16.msra.mxu0 0
    %2142 = vmatprep.subr.bf16.mxu0 0
    %2143 = vmatpush1.bf16.msra.mxu0 0
    %2144 = vmatprep.subr.bf16.mxu0 0
    %2145 = vmatpush1.bf16.msra.mxu0 0
    %2146 = vmatprep.subr.bf16.mxu0 0
    %2147 = vmatpush1.bf16.msra.mxu0 0
    %2148 = vmatprep.subr.bf16.mxu0 0
    %2149 = vmatpush1.bf16.msra.mxu0 0
    %2150 = vmatprep.subr.bf16.mxu0 0
    %2151 = vmatpush1.bf16.msra.mxu0 0
    %2152 = vmatprep.subr.bf16.mxu0 0
    %2153 = vmatpush1.bf16.msra.mxu0 0
    %2154 = vmatprep.mubr.bf16.mxu0 0
    %2155 = vmatmul.mubr.bf16.gmra.mrb[0].mxu0 %v2117
    %v2156 = vpop.f32.mrb[0].mxu0
    %v2157 = vadd.f32 0.0, %v2156
    %v2158 = vpop.f32.mrb[0].mxu0
    %v2159 = vpop.f32.mrb[0].mxu0
    %v2160 = vpop.f32.mrb[0].mxu0
    %2161 = vdwg.mxu0
    %2162 = vrot.lane.b32.xlu0 %v1773, 64
    %v2163 = vpop.permute.xlu0 %2162
    %v2165 = vsel %vm545, %v2017, 0
    %v2168 = vsel %vm599, %v2163, 0
    %2170 = vmatprep.subr.bf16.mxu0 0
    %2171 = vmatpush1.bf16.msra.mxu0 %v2168
    %2172 = vmatprep.subr.bf16.mxu0 0
    %2173 = vmatpush1.bf16.msra.mxu0 0
    %2174 = vmatprep.subr.bf16.mxu0 0
    %2175 = vmatpush1.bf16.msra.mxu0 0
    %2176 = vmatprep.subr.bf16.mxu0 0
    %2177 = vmatpush1.bf16.msra.mxu0 0
    %2178 = vmatprep.subr.bf16.mxu0 0
    %2179 = vmatpush1.bf16.msra.mxu0 0
    %2180 = vmatprep.subr.bf16.mxu0 0
    %2181 = vmatpush1.bf16.msra.mxu0 0
    %2182 = vmatprep.subr.bf16.mxu0 0
    %2183 = vmatpush1.bf16.msra.mxu0 0
    %2184 = vmatprep.subr.bf16.mxu0 0
    %2185 = vmatpush1.bf16.msra.mxu0 0
    %2186 = vmatprep.subr.bf16.mxu0 0
    %2187 = vmatpush1.bf16.msra.mxu0 0
    %2188 = vmatprep.subr.bf16.mxu0 0
    %2189 = vmatpush1.bf16.msra.mxu0 0
    %2190 = vmatprep.subr.bf16.mxu0 0
    %2191 = vmatpush1.bf16.msra.mxu0 0
    %2192 = vmatprep.subr.bf16.mxu0 0
    %2193 = vmatpush1.bf16.msra.mxu0 0
    %2194 = vmatprep.subr.bf16.mxu0 0
    %2195 = vmatpush1.bf16.msra.mxu0 0
    %2196 = vmatprep.subr.bf16.mxu0 0
    %2197 = vmatpush1.bf16.msra.mxu0 0
    %2198 = vmatprep.subr.bf16.mxu0 0
    %2199 = vmatpush1.bf16.msra.mxu0 0
    %2200 = vmatprep.subr.bf16.mxu0 0
    %2201 = vmatpush1.bf16.msra.mxu0 0
    %2202 = vmatprep.mubr.bf16.mxu0 0
    %2203 = vmatmul.mubr.bf16.gmra.mrb[0].mxu0 %v2165
    %v2204 = vpop.f32.mrb[0].mxu0
    %v2205 = vadd.f32 0.0, %v2204
    %v2206 = vpop.f32.mrb[0].mxu0
    %v2207 = vpop.f32.mrb[0].mxu0
    %v2208 = vpop.f32.mrb[0].mxu0
    %2209 = vdwg.mxu0
    %v2210 = vpack.c.bf16 %v2109, %v2061
    %v2211 = vpack.c.bf16 %v2205, %v2157
    %v2212 = vpack.c.bf16 %v1767, %v1766
    %2213 = vrot.lane.b32.xlu0 %v1770, 112
    %v2214 = vpop.permute.xlu0 %2213
    %2215 = vrot.lane.b32.xlu0 %v1770, 80
    %v2216 = vpop.permute.xlu0 %2215
    %v2218 = vsel %vm351, %v2214, 0
    %v2221 = vsel %vm351, %v2216, 0
    %2223 = vmatprep.subr.bf16.mxu0 0
    %2224 = vmatpush1.bf16.xpose.msra.mxu0 %v2221
    %2225 = vmatprep.subr.bf16.mxu0 0
    %2226 = vmatpush1.bf16.xpose.msra.mxu0 0
    %2227 = vmatprep.subr.bf16.mxu0 0
    %2228 = vmatpush1.bf16.xpose.msra.mxu0 0
    %2229 = vmatprep.subr.bf16.mxu0 0
    %2230 = vmatpush1.bf16.xpose.msra.mxu0 0
    %2231 = vmatprep.subr.bf16.mxu0 0
    %2232 = vmatpush1.bf16.xpose.msra.mxu0 0
    %2233 = vmatprep.subr.bf16.mxu0 0
    %2234 = vmatpush1.bf16.xpose.msra.mxu0 0
    %2235 = vmatprep.subr.bf16.mxu0 0
    %2236 = vmatpush1.bf16.xpose.msra.mxu0 0
    %2237 = vmatprep.subr.bf16.mxu0 0
    %2238 = vmatpush1.bf16.xpose.msra.mxu0 0
    %2239 = vmatprep.subr.bf16.mxu0 0
    %2240 = vmatpush1.bf16.xpose.msra.mxu0 0
    %2241 = vmatprep.subr.bf16.mxu0 0
    %2242 = vmatpush1.bf16.xpose.msra.mxu0 0
    %2243 = vmatprep.subr.bf16.mxu0 0
    %2244 = vmatpush1.bf16.xpose.msra.mxu0 0
    %2245 = vmatprep.subr.bf16.mxu0 0
    %2246 = vmatpush1.bf16.xpose.msra.mxu0 0
    %2247 = vmatprep.subr.bf16.mxu0 0
    %2248 = vmatpush1.bf16.xpose.msra.mxu0 0
    %2249 = vmatprep.subr.bf16.mxu0 0
    %2250 = vmatpush1.bf16.xpose.msra.mxu0 0
    %2251 = vmatprep.subr.bf16.mxu0 0
    %2252 = vmatpush1.bf16.xpose.msra.mxu0 0
    %2253 = vmatprep.subr.bf16.mxu0 0
    %2254 = vmatpush1.bf16.xpose.msra.mxu0 0
    %2255 = vmatprep.mubr.bf16.mxu0 0
    %2256 = vmatmul.mubr.bf16.gmra.mrb[0].mxu0 %v2218
    %v2257 = vpop.f32.mrb[0].mxu0
    %v2258 = vadd.f32 %v331, %v2257
    %v2259 = vpop.f32.mrb[0].mxu0
    %v2260 = vpop.f32.mrb[0].mxu0
    %v2261 = vpop.f32.mrb[0].mxu0
    %2262 = vdwg.mxu0
    %2263 = vrot.lane.b32.xlu0 %v1771, 112
    %v2264 = vpop.permute.xlu0 %2263
    %2265 = vrot.lane.b32.xlu0 %v1771, 80
    %v2266 = vpop.permute.xlu0 %2265
    %v2268 = vsel %vm351, %v2264, 0
    %v2271 = vsel %vm351, %v2266, 0
    %2273 = vmatprep.subr.bf16.mxu0 0
    %2274 = vmatpush1.bf16.xpose.msra.mxu0 %v2271
    %2275 = vmatprep.subr.bf16.mxu0 0
    %2276 = vmatpush1.bf16.xpose.msra.mxu0 0
    %2277 = vmatprep.subr.bf16.mxu0 0
    %2278 = vmatpush1.bf16.xpose.msra.mxu0 0
    %2279 = vmatprep.subr.bf16.mxu0 0
    %2280 = vmatpush1.bf16.xpose.msra.mxu0 0
    %2281 = vmatprep.subr.bf16.mxu0 0
    %2282 = vmatpush1.bf16.xpose.msra.mxu0 0
    %2283 = vmatprep.subr.bf16.mxu0 0
    %2284 = vmatpush1.bf16.xpose.msra.mxu0 0
    %2285 = vmatprep.subr.bf16.mxu0 0
    %2286 = vmatpush1.bf16.xpose.msra.mxu0 0
    %2287 = vmatprep.subr.bf16.mxu0 0
    %2288 = vmatpush1.bf16.xpose.msra.mxu0 0
    %2289 = vmatprep.subr.bf16.mxu0 0
    %2290 = vmatpush1.bf16.xpose.msra.mxu0 0
    %2291 = vmatprep.subr.bf16.mxu0 0
    %2292 = vmatpush1.bf16.xpose.msra.mxu0 0
    %2293 = vmatprep.subr.bf16.mxu0 0
    %2294 = vmatpush1.bf16.xpose.msra.mxu0 0
    %2295 = vmatprep.subr.bf16.mxu0 0
    %2296 = vmatpush1.bf16.xpose.msra.mxu0 0
    %2297 = vmatprep.subr.bf16.mxu0 0
    %2298 = vmatpush1.bf16.xpose.msra.mxu0 0
    %2299 = vmatprep.subr.bf16.mxu0 0
    %2300 = vmatpush1.bf16.xpose.msra.mxu0 0
    %2301 = vmatprep.subr.bf16.mxu0 0
    %2302 = vmatpush1.bf16.xpose.msra.mxu0 0
    %2303 = vmatprep.subr.bf16.mxu0 0
    %2304 = vmatpush1.bf16.xpose.msra.mxu0 0
    %2305 = vmatprep.mubr.bf16.mxu0 0
    %2306 = vmatmul.mubr.bf16.gmra.mrb[0].mxu0 %v2268
    %v2307 = vpop.f32.mrb[0].mxu0
    %v2308 = vadd.f32 %v335, %v2307
    %v2309 = vpop.f32.mrb[0].mxu0
    %v2310 = vpop.f32.mrb[0].mxu0
    %v2311 = vpop.f32.mrb[0].mxu0
    %2312 = vdwg.mxu0
    %2313 = vrot.lane.b32.xlu0 %v1772, 112
    %v2314 = vpop.permute.xlu0 %2313
    %2315 = vrot.lane.b32.xlu0 %v1772, 80
    %v2316 = vpop.permute.xlu0 %2315
    %v2318 = vsel %vm351, %v2314, 0
    %v2321 = vsel %vm351, %v2316, 0
    %2323 = vmatprep.subr.bf16.mxu0 0
    %2324 = vmatpush1.bf16.xpose.msra.mxu0 %v2321
    %2325 = vmatprep.subr.bf16.mxu0 0
    %2326 = vmatpush1.bf16.xpose.msra.mxu0 0
    %2327 = vmatprep.subr.bf16.mxu0 0
    %2328 = vmatpush1.bf16.xpose.msra.mxu0 0
    %2329 = vmatprep.subr.bf16.mxu0 0
    %2330 = vmatpush1.bf16.xpose.msra.mxu0 0
    %2331 = vmatprep.subr.bf16.mxu0 0
    %2332 = vmatpush1.bf16.xpose.msra.mxu0 0
    %2333 = vmatprep.subr.bf16.mxu0 0
    %2334 = vmatpush1.bf16.xpose.msra.mxu0 0
    %2335 = vmatprep.subr.bf16.mxu0 0
    %2336 = vmatpush1.bf16.xpose.msra.mxu0 0
    %2337 = vmatprep.subr.bf16.mxu0 0
    %2338 = vmatpush1.bf16.xpose.msra.mxu0 0
    %2339 = vmatprep.subr.bf16.mxu0 0
    %2340 = vmatpush1.bf16.xpose.msra.mxu0 0
    %2341 = vmatprep.subr.bf16.mxu0 0
    %2342 = vmatpush1.bf16.xpose.msra.mxu0 0
    %2343 = vmatprep.subr.bf16.mxu0 0
    %2344 = vmatpush1.bf16.xpose.msra.mxu0 0
    %2345 = vmatprep.subr.bf16.mxu0 0
    %2346 = vmatpush1.bf16.xpose.msra.mxu0 0
    %2347 = vmatprep.subr.bf16.mxu0 0
    %2348 = vmatpush1.bf16.xpose.msra.mxu0 0
    %2349 = vmatprep.subr.bf16.mxu0 0
    %2350 = vmatpush1.bf16.xpose.msra.mxu0 0
    %2351 = vmatprep.subr.bf16.mxu0 0
    %2352 = vmatpush1.bf16.xpose.msra.mxu0 0
    %2353 = vmatprep.subr.bf16.mxu0 0
    %2354 = vmatpush1.bf16.xpose.msra.mxu0 0
    %2355 = vmatprep.mubr.bf16.mxu0 0
    %2356 = vmatmul.mubr.bf16.gmra.mrb[0].mxu0 %v2318
    %v2357 = vpop.f32.mrb[0].mxu0
    %v2358 = vadd.f32 %v339, %v2357
    %v2359 = vpop.f32.mrb[0].mxu0
    %v2360 = vpop.f32.mrb[0].mxu0
    %v2361 = vpop.f32.mrb[0].mxu0
    %2362 = vdwg.mxu0
    %2363 = vrot.lane.b32.xlu0 %v1773, 112
    %v2364 = vpop.permute.xlu0 %2363
    %2365 = vrot.lane.b32.xlu0 %v1773, 80
    %v2366 = vpop.permute.xlu0 %2365
    %v2368 = vsel %vm351, %v2364, 0
    %v2371 = vsel %vm351, %v2366, 0
    %2373 = vmatprep.subr.bf16.mxu0 0
    %2374 = vmatpush1.bf16.xpose.msra.mxu0 %v2371
    %2375 = vmatprep.subr.bf16.mxu0 0
    %2376 = vmatpush1.bf16.xpose.msra.mxu0 0
    %2377 = vmatprep.subr.bf16.mxu0 0
    %2378 = vmatpush1.bf16.xpose.msra.mxu0 0
    %2379 = vmatprep.subr.bf16.mxu0 0
    %2380 = vmatpush1.bf16.xpose.msra.mxu0 0
    %2381 = vmatprep.subr.bf16.mxu0 0
    %2382 = vmatpush1.bf16.xpose.msra.mxu0 0
    %2383 = vmatprep.subr.bf16.mxu0 0
    %2384 = vmatpush1.bf16.xpose.msra.mxu0 0
    %2385 = vmatprep.subr.bf16.mxu0 0
    %2386 = vmatpush1.bf16.xpose.msra.mxu0 0
    %2387 = vmatprep.subr.bf16.mxu0 0
    %2388 = vmatpush1.bf16.xpose.msra.mxu0 0
    %2389 = vmatprep.subr.bf16.mxu0 0
    %2390 = vmatpush1.bf16.xpose.msra.mxu0 0
    %2391 = vmatprep.subr.bf16.mxu0 0
    %2392 = vmatpush1.bf16.xpose.msra.mxu0 0
    %2393 = vmatprep.subr.bf16.mxu0 0
    %2394 = vmatpush1.bf16.xpose.msra.mxu0 0
    %2395 = vmatprep.subr.bf16.mxu0 0
    %2396 = vmatpush1.bf16.xpose.msra.mxu0 0
    %2397 = vmatprep.subr.bf16.mxu0 0
    %2398 = vmatpush1.bf16.xpose.msra.mxu0 0
    %2399 = vmatprep.subr.bf16.mxu0 0
    %2400 = vmatpush1.bf16.xpose.msra.mxu0 0
    %2401 = vmatprep.subr.bf16.mxu0 0
    %2402 = vmatpush1.bf16.xpose.msra.mxu0 0
    %2403 = vmatprep.subr.bf16.mxu0 0
    %2404 = vmatpush1.bf16.xpose.msra.mxu0 0
    %2405 = vmatprep.mubr.bf16.mxu0 0
    %2406 = vmatmul.mubr.bf16.gmra.mrb[0].mxu0 %v2368
    %v2407 = vpop.f32.mrb[0].mxu0
    %v2408 = vadd.f32 %v343, %v2407
    %v2409 = vpop.f32.mrb[0].mxu0
    %v2410 = vpop.f32.mrb[0].mxu0
    %v2411 = vpop.f32.mrb[0].mxu0
    %2412 = vdwg.mxu0
    %v2413 = vsel %vm545, %v2258, -inf
    %2414 = vmax.xlane.f32.xlu0 %v2413
    %v2415 = vpop.xlane.xlu0 %2414
    %v2416 = vsel %vm545, %v2308, -inf
    %2417 = vmax.xlane.f32.xlu0 %v2416
    %v2418 = vpop.xlane.xlu0 %2417
    %v2419 = vsel %vm545, %v2358, -inf
    %2420 = vmax.xlane.f32.xlu0 %v2419
    %v2421 = vpop.xlane.xlu0 %2420
    %v2422 = vsel %vm545, %v2408, -inf
    %2423 = vmax.xlane.f32.xlu0 %v2422
    %v2424 = vpop.xlane.xlu0 %2423
    %v2425 = vsub.f32 %v2258, %v2415
    %v2426 = vsub.f32 %v2308, %v2418
    %v2427 = vsub.f32 %v2358, %v2421
    %v2428 = vsub.f32 %v2408, %v2424
    %v2429 = vmul.f32 %v2425, 1.442695
    %v2430 = vpow.pop %v2429
    %v2431 = vmul.f32 %v2426, 1.442695
    %v2432 = vpow.pop %v2431
    %v2433 = vmul.f32 %v2427, 1.442695
    %v2434 = vpow.pop %v2433
    %v2435 = vmul.f32 %v2428, 1.442695
    %v2436 = vpow.pop %v2435
    %v2437 = vsel %vm545, %v2430, 0.0
    %2438 = vadd.xlane.f32.xlu0 %v2437
    %v2439 = vpop.xlane.xlu0 %2438
    %v2440 = vsel %vm545, %v2432, 0.0
    %2441 = vadd.xlane.f32.xlu0 %v2440
    %v2442 = vpop.xlane.xlu0 %2441
    %v2443 = vsel %vm545, %v2434, 0.0
    %2444 = vadd.xlane.f32.xlu0 %v2443
    %v2445 = vpop.xlane.xlu0 %2444
    %v2446 = vsel %vm545, %v2436, 0.0
    %2447 = vadd.xlane.f32.xlu0 %v2446
    %v2448 = vpop.xlane.xlu0 %2447
    %v2449 = vrcp.pop %v2439
    %v2450 = vrcp.pop %v2442
    %v2451 = vrcp.pop %v2445
    %v2452 = vrcp.pop %v2448
    %v2453 = vmul.f32 %v2430, %v2449
    %v2454 = vmul.f32 %v2432, %v2450
    %v2455 = vmul.f32 %v2434, %v2451
    %v2456 = vmul.f32 %v2436, %v2452
    %v2457 = vpack.c.bf16 %v2453, %v2453
    %v2458 = vpack.c.bf16 %v2454, %v2454
    %v2459 = vpack.c.bf16 %v2455, %v2455
    %v2460 = vpack.c.bf16 %v2456, %v2456
    %2461 = vrot.lane.b32.xlu0 %v1770, 48
    %v2462 = vpop.permute.xlu0 %2461
    %v2464 = vsel %vm545, %v2457, 0
    %v2467 = vsel %vm599, %v2462, 0
    %2469 = vmatprep.subr.bf16.mxu0 0
    %2470 = vmatpush1.bf16.msra.mxu0 %v2467
    %2471 = vmatprep.subr.bf16.mxu0 0
    %2472 = vmatpush1.bf16.msra.mxu0 0
    %2473 = vmatprep.subr.bf16.mxu0 0
    %2474 = vmatpush1.bf16.msra.mxu0 0
    %2475 = vmatprep.subr.bf16.mxu0 0
    %2476 = vmatpush1.bf16.msra.mxu0 0
    %2477 = vmatprep.subr.bf16.mxu0 0
    %2478 = vmatpush1.bf16.msra.mxu0 0
    %2479 = vmatprep.subr.bf16.mxu0 0
    %2480 = vmatpush1.bf16.msra.mxu0 0
    %2481 = vmatprep.subr.bf16.mxu0 0
    %2482 = vmatpush1.bf16.msra.mxu0 0
    %2483 = vmatprep.subr.bf16.mxu0 0
    %2484 = vmatpush1.bf16.msra.mxu0 0
    %2485 = vmatprep.subr.bf16.mxu0 0
    %2486 = vmatpush1.bf16.msra.mxu0 0
    %2487 = vmatprep.subr.bf16.mxu0 0
    %2488 = vmatpush1.bf16.msra.mxu0 0
    %2489 = vmatprep.subr.bf16.mxu0 0
    %2490 = vmatpush1.bf16.msra.mxu0 0
    %2491 = vmatprep.subr.bf16.mxu0 0
    %2492 = vmatpush1.bf16.msra.mxu0 0
    %2493 = vmatprep.subr.bf16.mxu0 0
    %2494 = vmatpush1.bf16.msra.mxu0 0
    %2495 = vmatprep.subr.bf16.mxu0 0
    %2496 = vmatpush1.bf16.msra.mxu0 0
    %2497 = vmatprep.subr.bf16.mxu0 0
    %2498 = vmatpush1.bf16.msra.mxu0 0
    %2499 = vmatprep.subr.bf16.mxu0 0
    %2500 = vmatpush1.bf16.msra.mxu0 0
    %2501 = vmatprep.mubr.bf16.mxu0 0
    %2502 = vmatmul.mubr.bf16.gmra.mrb[0].mxu0 %v2464
    %v2503 = vpop.f32.mrb[0].mxu0
    %v2504 = vadd.f32 0.0, %v2503
    %v2505 = vpop.f32.mrb[0].mxu0
    %v2506 = vpop.f32.mrb[0].mxu0
    %v2507 = vpop.f32.mrb[0].mxu0
    %2508 = vdwg.mxu0
    %2509 = vrot.lane.b32.xlu0 %v1771, 48
    %v2510 = vpop.permute.xlu0 %2509
    %v2512 = vsel %vm545, %v2458, 0
    %v2515 = vsel %vm599, %v2510, 0
    %2517 = vmatprep.subr.bf16.mxu0 0
    %2518 = vmatpush1.bf16.msra.mxu0 %v2515
    %2519 = vmatprep.subr.bf16.mxu0 0
    %2520 = vmatpush1.bf16.msra.mxu0 0
    %2521 = vmatprep.subr.bf16.mxu0 0
    %2522 = vmatpush1.bf16.msra.mxu0 0
    %2523 = vmatprep.subr.bf16.mxu0 0
    %2524 = vmatpush1.bf16.msra.mxu0 0
    %2525 = vmatprep.subr.bf16.mxu0 0
    %2526 = vmatpush1.bf16.msra.mxu0 0
    %2527 = vmatprep.subr.bf16.mxu0 0
    %2528 = vmatpush1.bf16.msra.mxu0 0
    %2529 = vmatprep.subr.bf16.mxu0 0
    %2530 = vmatpush1.bf16.msra.mxu0 0
    %2531 = vmatprep.subr.bf16.mxu0 0
    %2532 = vmatpush1.bf16.msra.mxu0 0
    %2533 = vmatprep.subr.bf16.mxu0 0
    %2534 = vmatpush1.bf16.msra.mxu0 0
    %2535 = vmatprep.subr.bf16.mxu0 0
    %2536 = vmatpush1.bf16.msra.mxu0 0
    %2537 = vmatprep.subr.bf16.mxu0 0
    %2538 = vmatpush1.bf16.msra.mxu0 0
    %2539 = vmatprep.subr.bf16.mxu0 0
    %2540 = vmatpush1.bf16.msra.mxu0 0
    %2541 = vmatprep.subr.bf16.mxu0 0
    %2542 = vmatpush1.bf16.msra.mxu0 0
    %2543 = vmatprep.subr.bf16.mxu0 0
    %2544 = vmatpush1.bf16.msra.mxu0 0
    %2545 = vmatprep.subr.bf16.mxu0 0
    %2546 = vmatpush1.bf16.msra.mxu0 0
    %2547 = vmatprep.subr.bf16.mxu0 0
    %2548 = vmatpush1.bf16.msra.mxu0 0
    %2549 = vmatprep.mubr.bf16.mxu0 0
    %2550 = vmatmul.mubr.bf16.gmra.mrb[0].mxu0 %v2512
    %v2551 = vpop.f32.mrb[0].mxu0
    %v2552 = vadd.f32 0.0, %v2551
    %v2553 = vpop.f32.mrb[0].mxu0
    %v2554 = vpop.f32.mrb[0].mxu0
    %v2555 = vpop.f32.mrb[0].mxu0
    %2556 = vdwg.mxu0
    %2557 = vrot.lane.b32.xlu0 %v1772, 48
    %v2558 = vpop.permute.xlu0 %2557
    %v2560 = vsel %vm545, %v2459, 0
    %v2563 = vsel %vm599, %v2558, 0
    %2565 = vmatprep.subr.bf16.mxu0 0
    %2566 = vmatpush1.bf16.msra.mxu0 %v2563
    %2567 = vmatprep.subr.bf16.mxu0 0
    %2568 = vmatpush1.bf16.msra.mxu0 0
    %2569 = vmatprep.subr.bf16.mxu0 0
    %2570 = vmatpush1.bf16.msra.mxu0 0
    %2571 = vmatprep.subr.bf16.mxu0 0
    %2572 = vmatpush1.bf16.msra.mxu0 0
    %2573 = vmatprep.subr.bf16.mxu0 0
    %2574 = vmatpush1.bf16.msra.mxu0 0
    %2575 = vmatprep.subr.bf16.mxu0 0
    %2576 = vmatpush1.bf16.msra.mxu0 0
    %2577 = vmatprep.subr.bf16.mxu0 0
    %2578 = vmatpush1.bf16.msra.mxu0 0
    %2579 = vmatprep.subr.bf16.mxu0 0
    %2580 = vmatpush1.bf16.msra.mxu0 0
    %2581 = vmatprep.subr.bf16.mxu0 0
    %2582 = vmatpush1.bf16.msra.mxu0 0
    %2583 = vmatprep.subr.bf16.mxu0 0
    %2584 = vmatpush1.bf16.msra.mxu0 0
    %2585 = vmatprep.subr.bf16.mxu0 0
    %2586 = vmatpush1.bf16.msra.mxu0 0
    %2587 = vmatprep.subr.bf16.mxu0 0
    %2588 = vmatpush1.bf16.msra.mxu0 0
    %2589 = vmatprep.subr.bf16.mxu0 0
    %2590 = vmatpush1.bf16.msra.mxu0 0
    %2591 = vmatprep.subr.bf16.mxu0 0
    %2592 = vmatpush1.bf16.msra.mxu0 0
    %2593 = vmatprep.subr.bf16.mxu0 0
    %2594 = vmatpush1.bf16.msra.mxu0 0
    %2595 = vmatprep.subr.bf16.mxu0 0
    %2596 = vmatpush1.bf16.msra.mxu0 0
    %2597 = vmatprep.mubr.bf16.mxu0 0
    %2598 = vmatmul.mubr.bf16.gmra.mrb[0].mxu0 %v2560
    %v2599 = vpop.f32.mrb[0].mxu0
    %v2600 = vadd.f32 0.0, %v2599
    %v2601 = vpop.f32.mrb[0].mxu0
    %v2602 = vpop.f32.mrb[0].mxu0
    %v2603 = vpop.f32.mrb[0].mxu0
    %2604 = vdwg.mxu0
    %2605 = vrot.lane.b32.xlu0 %v1773, 48
    %v2606 = vpop.permute.xlu0 %2605
    %v2608 = vsel %vm545, %v2460, 0
    %v2611 = vsel %vm599, %v2606, 0
    %2613 = vmatprep.subr.bf16.mxu0 0
    %2614 = vmatpush1.bf16.msra.mxu0 %v2611
    %2615 = vmatprep.subr.bf16.mxu0 0
    %2616 = vmatpush1.bf16.msra.mxu0 0
    %2617 = vmatprep.subr.bf16.mxu0 0
    %2618 = vmatpush1.bf16.msra.mxu0 0
    %2619 = vmatprep.subr.bf16.mxu0 0
    %2620 = vmatpush1.bf16.msra.mxu0 0
    %2621 = vmatprep.subr.bf16.mxu0 0
    %2622 = vmatpush1.bf16.msra.mxu0 0
    %2623 = vmatprep.subr.bf16.mxu0 0
    %2624 = vmatpush1.bf16.msra.mxu0 0
    %2625 = vmatprep.subr.bf16.mxu0 0
    %2626 = vmatpush1.bf16.msra.mxu0 0
    %2627 = vmatprep.subr.bf16.mxu0 0
    %2628 = vmatpush1.bf16.msra.mxu0 0
    %2629 = vmatprep.subr.bf16.mxu0 0
    %2630 = vmatpush1.bf16.msra.mxu0 0
    %2631 = vmatprep.subr.bf16.mxu0 0
    %2632 = vmatpush1.bf16.msra.mxu0 0
    %2633 = vmatprep.subr.bf16.mxu0 0
    %2634 = vmatpush1.bf16.msra.mxu0 0
    %2635 = vmatprep.subr.bf16.mxu0 0
    %2636 = vmatpush1.bf16.msra.mxu0 0
    %2637 = vmatprep.subr.bf16.mxu0 0
    %2638 = vmatpush1.bf16.msra.mxu0 0
    %2639 = vmatprep.subr.bf16.mxu0 0
    %2640 = vmatpush1.bf16.msra.mxu0 0
    %2641 = vmatprep.subr.bf16.mxu0 0
    %2642 = vmatpush1.bf16.msra.mxu0 0
    %2643 = vmatprep.subr.bf16.mxu0 0
    %2644 = vmatpush1.bf16.msra.mxu0 0
    %2645 = vmatprep.mubr.bf16.mxu0 0
    %2646 = vmatmul.mubr.bf16.gmra.mrb[0].mxu0 %v2608
    %v2647 = vpop.f32.mrb[0].mxu0
    %v2648 = vadd.f32 0.0, %v2647
    %v2649 = vpop.f32.mrb[0].mxu0
    %v2650 = vpop.f32.mrb[0].mxu0
    %v2651 = vpop.f32.mrb[0].mxu0
    %2652 = vdwg.mxu0
    %v2653 = vpack.c.bf16 %v2552, %v2504
    %v2654 = vpack.c.bf16 %v2648, %v2600
    %v2655 = vpack.c.bf16 %v1769, %v1768
    %v2657 = vsel %vm351, %v2653, 0
    %v2660 = vsel %vm351, %v2654, 0
    %2662 = vmatprep.subr.bf16.mxu0 0
    %2663 = vmatpush1.bf16.msra.mxu0 %v2655
    %2664 = vmatprep.subr.bf16.mxu0 0
    %2665 = vmatpush1.bf16.msra.mxu0 0
    %2666 = vmatprep.subr.bf16.mxu0 0
    %2667 = vmatpush1.bf16.msra.mxu0 0
    %2668 = vmatprep.subr.bf16.mxu0 0
    %2669 = vmatpush1.bf16.msra.mxu0 0
    %2670 = vmatprep.subr.bf16.mxu0 0
    %2671 = vmatpush1.bf16.msra.mxu0 0
    %2672 = vmatprep.subr.bf16.mxu0 0
    %2673 = vmatpush1.bf16.msra.mxu0 0
    %2674 = vmatprep.subr.bf16.mxu0 0
    %2675 = vmatpush1.bf16.msra.mxu0 0
    %2676 = vmatprep.subr.bf16.mxu0 0
    %2677 = vmatpush1.bf16.msra.mxu0 0
    %2678 = vmatprep.subr.bf16.mxu0 0
    %2679 = vmatpush1.bf16.msra.mxu0 0
    %2680 = vmatprep.subr.bf16.mxu0 0
    %2681 = vmatpush1.bf16.msra.mxu0 0
    %2682 = vmatprep.subr.bf16.mxu0 0
    %2683 = vmatpush1.bf16.msra.mxu0 0
    %2684 = vmatprep.subr.bf16.mxu0 0
    %2685 = vmatpush1.bf16.msra.mxu0 0
    %2686 = vmatprep.subr.bf16.mxu0 0
    %2687 = vmatpush1.bf16.msra.mxu0 0
    %2688 = vmatprep.subr.bf16.mxu0 0
    %2689 = vmatpush1.bf16.msra.mxu0 0
    %2690 = vmatprep.subr.bf16.mxu0 0
    %2691 = vmatpush1.bf16.msra.mxu0 0
    %2692 = vmatprep.subr.bf16.mxu0 0
    %2693 = vmatpush1.bf16.msra.mxu0 0
    %2694 = vmatprep.mubr.bf16.mxu0 0
    %2695 = vmatmul.mubr.bf16.gmra.mrb[0].mxu0 %v2657
    %v2696 = vpop.f32.mrb[0].mxu0
    %v2697 = vadd.f32 0.0, %v2696
    %v2698 = vpop.f32.mrb[0].mxu0
    %v2699 = vpop.f32.mrb[0].mxu0
    %v2700 = vadd.f32 0.0, %v2699
    %v2701 = vpop.f32.mrb[0].mxu0
    %2702 = vmatprep.mubr.bf16.mxu0 0
    %2703 = vmatmul.mubr.bf16.gmra.mrb[0].mxu0 %v2660
    %v2704 = vpop.f32.mrb[0].mxu0
    %v2705 = vadd.f32 0.0, %v2704
    %v2706 = vpop.f32.mrb[0].mxu0
    %v2707 = vpop.f32.mrb[0].mxu0
    %v2708 = vadd.f32 0.0, %v2707
    %v2709 = vpop.f32.mrb[0].mxu0
    %2710 = vdwg.mxu0
    %v2712 = vsel %vm351, %v2210, 0
    %v2715 = vsel %vm351, %v2211, 0
    %2717 = vmatprep.subr.bf16.mxu0 0
    %2718 = vmatpush1.bf16.msra.mxu0 %v2212
    %2719 = vmatprep.subr.bf16.mxu0 0
    %2720 = vmatpush1.bf16.msra.mxu0 0
    %2721 = vmatprep.subr.bf16.mxu0 0
    %2722 = vmatpush1.bf16.msra.mxu0 0
    %2723 = vmatprep.subr.bf16.mxu0 0
    %2724 = vmatpush1.bf16.msra.mxu0 0
    %2725 = vmatprep.subr.bf16.mxu0 0
    %2726 = vmatpush1.bf16.msra.mxu0 0
    %2727 = vmatprep.subr.bf16.mxu0 0
    %2728 = vmatpush1.bf16.msra.mxu0 0
    %2729 = vmatprep.subr.bf16.mxu0 0
    %2730 = vmatpush1.bf16.msra.mxu0 0
    %2731 = vmatprep.subr.bf16.mxu0 0
    %2732 = vmatpush1.bf16.msra.mxu0 0
    %2733 = vmatprep.subr.bf16.mxu0 0
    %2734 = vmatpush1.bf16.msra.mxu0 0
    %2735 = vmatprep.subr.bf16.mxu0 0
    %2736 = vmatpush1.bf16.msra.mxu0 0
    %2737 = vmatprep.subr.bf16.mxu0 0
    %2738 = vmatpush1.bf16.msra.mxu0 0
    %2739 = vmatprep.subr.bf16.mxu0 0
    %2740 = vmatpush1.bf16.msra.mxu0 0
    %2741 = vmatprep.subr.bf16.mxu0 0
    %2742 = vmatpush1.bf16.msra.mxu0 0
    %2743 = vmatprep.subr.bf16.mxu0 0
    %2744 = vmatpush1.bf16.msra.mxu0 0
    %2745 = vmatprep.subr.bf16.mxu0 0
    %2746 = vmatpush1.bf16.msra.mxu0 0
    %2747 = vmatprep.subr.bf16.mxu0 0
    %2748 = vmatpush1.bf16.msra.mxu0 0
    %2749 = vmatprep.mubr.bf16.mxu0 0
    %2750 = vmatmul.mubr.bf16.gmra.mrb[0].mxu0 %v2712
    %v2751 = vpop.f32.mrb[0].mxu0
    %v2752 = vadd.f32 %v2697, %v2751
    %v2753 = vpop.f32.mrb[0].mxu0
    %v2754 = vpop.f32.mrb[0].mxu0
    %v2755 = vadd.f32 %v2700, %v2754
    %v2756 = vpop.f32.mrb[0].mxu0
    %2757 = vmatprep.mubr.bf16.mxu0 0
    %2758 = vmatmul.mubr.bf16.gmra.mrb[0].mxu0 %v2715
    %v2759 = vpop.f32.mrb[0].mxu0
    %v2760 = vadd.f32 %v2705, %v2759
    %v2761 = vpop.f32.mrb[0].mxu0
    %v2762 = vpop.f32.mrb[0].mxu0
    %v2763 = vadd.f32 %v2708, %v2762
    %v2764 = vpop.f32.mrb[0].mxu0
    %2765 = vdwg.mxu0
    %s2766 = scalar_lea.vmem %s19, 1
    %v2767 = vld [vmem:[%s2766] sm:$0x1]
    %v2769 = vlaneseq
    %v2770 = vshrl.u32 %v2769, 7
    %v2771 = vsub.s32 0, %v2770
    %v2772 = vrot.slane %v2767, %v2771
    %v2774 = vadd.f32 %v2752, %v2772
    %v2775 = vadd.f32 %v2755, %v2772
    %v2776 = vadd.f32 %v2760, %v2772
    %v2777 = vadd.f32 %v2763, %v2772
    %v2778 = vadd.f32 %v2774, %v1689
    %v2779 = vadd.f32 %v2775, %v1690
    %v2780 = vadd.f32 %v2776, %v1691
    %v2781 = vadd.f32 %v2777, %v1692
    %s2782 = scalar_lea.vmem %s21, 1
    %v2783 = vld [vmem:[%s2782] sm:$0x1]
    %s2784 = scalar_lea.vmem %s23, 1
    %v2785 = vld [vmem:[%s2784] sm:$0x1]
    %v2786 = vsel %vm150, %v2778, 0.0
    %2787 = vadd.xlane.f32.xlu0 %v2786
    %v2788 = vpop.xlane.xlu0 %2787
    %v2789 = vsel %vm150, %v2779, 0.0
    %2790 = vadd.xlane.f32.xlu0 %v2789
    %v2791 = vpop.xlane.xlu0 %2790
    %v2792 = vsel %vm150, %v2780, 0.0
    %2793 = vadd.xlane.f32.xlu0 %v2792
    %v2794 = vpop.xlane.xlu0 %2793
    %v2795 = vsel %vm150, %v2781, 0.0
    %2796 = vadd.xlane.f32.xlu0 %v2795
    %v2797 = vpop.xlane.xlu0 %2796
    %v2798 = vmul.f32 %v2788, %v163
    %v2799 = vmul.f32 %v2791, %v163
    %v2800 = vmul.f32 %v2794, %v163
    %v2801 = vmul.f32 %v2797, %v163
    %v2802 = vsub.f32 %v2778, %v2798
    %v2803 = vsub.f32 %v2779, %v2799
    %v2804 = vsub.f32 %v2780, %v2800
    %v2805 = vsub.f32 %v2781, %v2801
    %v2806 = vmul.f32 %v2802, %v2802
    %v2807 = vmul.f32 %v2803, %v2803
    %v2808 = vmul.f32 %v2804, %v2804
    %v2809 = vmul.f32 %v2805, %v2805
    %v2810 = vsel %vm150, %v2806, 0.0
    %2811 = vadd.xlane.f32.xlu0 %v2810
    %v2812 = vpop.xlane.xlu0 %2811
    %v2813 = vsel %vm150, %v2807, 0.0
    %2814 = vadd.xlane.f32.xlu0 %v2813
    %v2815 = vpop.xlane.xlu0 %2814
    %v2816 = vsel %vm150, %v2808, 0.0
    %2817 = vadd.xlane.f32.xlu0 %v2816
    %v2818 = vpop.xlane.xlu0 %2817
    %v2819 = vsel %vm150, %v2809, 0.0
    %2820 = vadd.xlane.f32.xlu0 %v2819
    %v2821 = vpop.xlane.xlu0 %2820
    %v2822 = vmul.f32 %v2812, %v163
    %v2823 = vmul.f32 %v2815, %v163
    %v2824 = vmul.f32 %v2818, %v163
    %v2825 = vmul.f32 %v2821, %v163
    %v2826 = vadd.f32 %v2822, 1e-12
    %v2827 = vadd.f32 %v2823, 1e-12
    %v2828 = vadd.f32 %v2824, 1e-12
    %v2829 = vadd.f32 %v2825, 1e-12
    %v2830 = vrsqrt.pop %v2826
    %v2831 = vrsqrt.pop %v2827
    %v2832 = vrsqrt.pop %v2828
    %v2833 = vrsqrt.pop %v2829
    %v2834 = vmul.f32 %v2802, %v2830
    %v2835 = vmul.f32 %v2803, %v2831
    %v2836 = vmul.f32 %v2804, %v2832
    %v2837 = vmul.f32 %v2805, %v2833
    %v2839 = vlaneseq
    %v2840 = vshrl.u32 %v2839, 7
    %v2841 = vsub.s32 0, %v2840
    %v2842 = vrot.slane %v2783, %v2841
    %v2844 = vmul.f32 %v2834, %v2842
    %v2845 = vmul.f32 %v2835, %v2842
    %v2846 = vmul.f32 %v2836, %v2842
    %v2847 = vmul.f32 %v2837, %v2842
    %v2849 = vlaneseq
    %v2850 = vshrl.u32 %v2849, 7
    %v2851 = vsub.s32 0, %v2850
    %v2852 = vrot.slane %v2785, %v2851
    %v2854 = vadd.f32 %v2844, %v2852
    %v2855 = vadd.f32 %v2845, %v2852
    %v2856 = vadd.f32 %v2846, %v2852
    %v2857 = vadd.f32 %v2847, %v2852
    %s2858 = scalar_lea.vmem %s25, 32
    %v2859 = vld [vmem:[%s2858] sm:$0xff]
    %v2860 = vld [vmem:[%s2858 + $0x8] sm:$0xff]
    %v2861 = vld [vmem:[%s2858 + $0x10] sm:$0xff]
    %v2862 = vld [vmem:[%s2858 + $0x18] sm:$0xff]
    %v2863 = vpack.c.bf16 %v2855, %v2854
    %v2864 = vpack.c.bf16 %v2857, %v2856
    %v2865 = vpack.c.bf16 %v2860, %v2859
    %v2866 = vpack.c.bf16 %v2862, %v2861
    %s2867 = scalar_lea.vmem %s27, 1
    %v2868 = vld [vmem:[%s2867] sm:$0x1]
    %v2870 = vlaneseq
    %v2871 = vshrl.u32 %v2870, 7
    %v2872 = vsub.s32 0, %v2871
    %v2873 = vrot.slane %v2868, %v2872
    %v2876 = vsel %vm150, %v2863, 0
    %v2879 = vsel %vm150, %v2864, 0
    %2881 = vmatprep.subr.bf16.mxu0 0
    %2882 = vmatpush1.bf16.msra.mxu0 %v2865
    %2883 = vmatprep.subr.bf16.mxu0 0
    %2884 = vmatpush1.bf16.msra.mxu0 %v2866
    %2885 = vmatprep.subr.bf16.mxu0 0
    %2886 = vmatpush1.bf16.msra.mxu0 0
    %2887 = vmatprep.subr.bf16.mxu0 0
    %2888 = vmatpush1.bf16.msra.mxu0 0
    %2889 = vmatprep.subr.bf16.mxu0 0
    %2890 = vmatpush1.bf16.msra.mxu0 0
    %2891 = vmatprep.subr.bf16.mxu0 0
    %2892 = vmatpush1.bf16.msra.mxu0 0
    %2893 = vmatprep.subr.bf16.mxu0 0
    %2894 = vmatpush1.bf16.msra.mxu0 0
    %2895 = vmatprep.subr.bf16.mxu0 0
    %2896 = vmatpush1.bf16.msra.mxu0 0
    %2897 = vmatprep.subr.bf16.mxu0 0
    %2898 = vmatpush1.bf16.msra.mxu0 0
    %2899 = vmatprep.subr.bf16.mxu0 0
    %2900 = vmatpush1.bf16.msra.mxu0 0
    %2901 = vmatprep.subr.bf16.mxu0 0
    %2902 = vmatpush1.bf16.msra.mxu0 0
    %2903 = vmatprep.subr.bf16.mxu0 0
    %2904 = vmatpush1.bf16.msra.mxu0 0
    %2905 = vmatprep.subr.bf16.mxu0 0
    %2906 = vmatpush1.bf16.msra.mxu0 0
    %2907 = vmatprep.subr.bf16.mxu0 0
    %2908 = vmatpush1.bf16.msra.mxu0 0
    %2909 = vmatprep.subr.bf16.mxu0 0
    %2910 = vmatpush1.bf16.msra.mxu0 0
    %2911 = vmatprep.subr.bf16.mxu0 0
    %2912 = vmatpush1.bf16.msra.mxu0 0
    %2913 = vmatprep.mubr.bf16.mxu0 0
    %2914 = vmatmul.mubr.bf16.gmra.mrb[0].mxu0 %v2876
    %v2915 = vpop.f32.mrb[0].mxu0
    %v2916 = vadd.f32 %v2873, %v2915
    %v2917 = vpop.f32.mrb[0].mxu0
    %v2918 = vpop.f32.mrb[0].mxu0
    %v2919 = vadd.f32 %v2873, %v2918
    %v2920 = vpop.f32.mrb[0].mxu0
    %2921 = vmatprep.mubr.bf16.mxu0 0
    %2922 = vmatmul.mubr.bf16.gmra.mrb[0].mxu0 %v2879
    %v2923 = vpop.f32.mrb[0].mxu0
    %v2924 = vadd.f32 %v2873, %v2923
    %v2925 = vpop.f32.mrb[0].mxu0
    %v2926 = vpop.f32.mrb[0].mxu0
    %v2927 = vadd.f32 %v2873, %v2926
    %v2928 = vpop.f32.mrb[0].mxu0
    %2929 = vdwg.mxu0
    %v2930 = vmul.f32 %v2916, 0.5
    %v2931 = vmul.f32 %v2919, 0.5
    %v2932 = vmul.f32 %v2924, 0.5
    %v2933 = vmul.f32 %v2927, 0.5
    %v2934 = vmul.f32 %v2916, 0.044715
    %v2935 = vmul.f32 %v2919, 0.044715
    %v2936 = vmul.f32 %v2924, 0.044715
    %v2937 = vmul.f32 %v2927, 0.044715
    %v2938 = vmul.f32 %v2934, %v2916
    %v2939 = vmul.f32 %v2935, %v2919
    %v2940 = vmul.f32 %v2936, %v2924
    %v2941 = vmul.f32 %v2937, %v2927
    %v2942 = vmul.f32 %v2938, %v2916
    %v2943 = vmul.f32 %v2939, %v2919
    %v2944 = vmul.f32 %v2940, %v2924
    %v2945 = vmul.f32 %v2941, %v2927
    %v2946 = vadd.f32 %v2916, %v2942
    %v2947 = vadd.f32 %v2919, %v2943
    %v2948 = vadd.f32 %v2924, %v2944
    %v2949 = vadd.f32 %v2927, %v2945
    %v2950 = vmul.f32 %v2946, 0.7978846
    %v2951 = vmul.f32 %v2947, 0.7978846
    %v2952 = vmul.f32 %v2948, 0.7978846
    %v2953 = vmul.f32 %v2949, 0.7978846
    %v2954 = vtanh.pop %v2950
    %v2955 = vtanh.pop %v2951
    %v2956 = vtanh.pop %v2952
    %v2957 = vtanh.pop %v2953
    %v2958 = vadd.f32 %v2954, 1.0
    %v2959 = vadd.f32 %v2955, 1.0
    %v2960 = vadd.f32 %v2956, 1.0
    %v2961 = vadd.f32 %v2957, 1.0
    %v2962 = vmul.f32 %v2930, %v2958
    %v2963 = vmul.f32 %v2931, %v2959
    %v2964 = vmul.f32 %v2932, %v2960
    %v2965 = vmul.f32 %v2933, %v2961
    %s2966 = scalar_lea.vmem %s29, 64
    %v2967 = vld [vmem:[%s2966] sm:$0xff]
    %v2968 = vld [vmem:[%s2966 + $0x8] sm:$0xff]
    %v2969 = vld [vmem:[%s2966 + $0x10] sm:$0xff]
    %v2970 = vld [vmem:[%s2966 + $0x18] sm:$0xff]
    %v2971 = vld [vmem:[%s2966 + $0x20] sm:$0xff]
    %v2972 = vld [vmem:[%s2966 + $0x28] sm:$0xff]
    %v2973 = vld [vmem:[%s2966 + $0x30] sm:$0xff]
    %v2974 = vld [vmem:[%s2966 + $0x38] sm:$0xff]
    %v2975 = vpack.c.bf16 %v2963, %v2962
    %v2976 = vpack.c.bf16 %v2965, %v2964
    %v2977 = vpack.c.bf16 %v2968, %v2967
    %v2978 = vpack.c.bf16 %v2970, %v2969
    %v2979 = vpack.c.bf16 %v2972, %v2971
    %v2980 = vpack.c.bf16 %v2974, %v2973
    %s2981 = scalar_lea.vmem %s31, 1
    %v2982 = vld [vmem:[%s2981] sm:$0x1]
    %v2984 = vlaneseq
    %v2985 = vshrl.u32 %v2984, 7
    %v2986 = vsub.s32 0, %v2985
    %v2987 = vrot.slane %v2982, %v2986
    %v2990 = vsel %vm1559, %v2975, 0
    %v2993 = vsel %vm1559, %v2976, 0
    %2995 = vmatprep.subr.bf16.mxu0 0
    %2996 = vmatpush1.bf16.msra.mxu0 %v2977
    %2997 = vmatprep.subr.bf16.mxu0 0
    %2998 = vmatpush1.bf16.msra.mxu0 %v2978
    %2999 = vmatprep.subr.bf16.mxu0 0
    %3000 = vmatpush1.bf16.msra.mxu0 %v2979
    %3001 = vmatprep.subr.bf16.mxu0 0
    %3002 = vmatpush1.bf16.msra.mxu0 %v2980
    %3003 = vmatprep.subr.bf16.mxu0 0
    %3004 = vmatpush1.bf16.msra.mxu0 0
    %3005 = vmatprep.subr.bf16.mxu0 0
    %3006 = vmatpush1.bf16.msra.mxu0 0
    %3007 = vmatprep.subr.bf16.mxu0 0
    %3008 = vmatpush1.bf16.msra.mxu0 0
    %3009 = vmatprep.subr.bf16.mxu0 0
    %3010 = vmatpush1.bf16.msra.mxu0 0
    %3011 = vmatprep.subr.bf16.mxu0 0
    %3012 = vmatpush1.bf16.msra.mxu0 0
    %3013 = vmatprep.subr.bf16.mxu0 0
    %3014 = vmatpush1.bf16.msra.mxu0 0
    %3015 = vmatprep.subr.bf16.mxu0 0
    %3016 = vmatpush1.bf16.msra.mxu0 0
    %3017 = vmatprep.subr.bf16.mxu0 0
    %3018 = vmatpush1.bf16.msra.mxu0 0
    %3019 = vmatprep.subr.bf16.mxu0 0
    %3020 = vmatpush1.bf16.msra.mxu0 0
    %3021 = vmatprep.subr.bf16.mxu0 0
    %3022 = vmatpush1.bf16.msra.mxu0 0
    %3023 = vmatprep.subr.bf16.mxu0 0
    %3024 = vmatpush1.bf16.msra.mxu0 0
    %3025 = vmatprep.subr.bf16.mxu0 0
    %3026 = vmatpush1.bf16.msra.mxu0 0
    %3027 = vmatprep.mubr.bf16.mxu0 0
    %3028 = vmatmul.mubr.bf16.gmra.mrb[0].mxu0 %v2990
    %v3029 = vpop.f32.mrb[0].mxu0
    %v3030 = vadd.f32 %v2987, %v3029
    %v3031 = vpop.f32.mrb[0].mxu0
    %v3032 = vpop.f32.mrb[0].mxu0
    %v3033 = vadd.f32 %v2987, %v3032
    %v3034 = vpop.f32.mrb[0].mxu0
    %3035 = vmatprep.mubr.bf16.mxu0 0
    %3036 = vmatmul.mubr.bf16.gmra.mrb[0].mxu0 %v2993
    %v3037 = vpop.f32.mrb[0].mxu0
    %v3038 = vadd.f32 %v2987, %v3037
    %v3039 = vpop.f32.mrb[0].mxu0
    %v3040 = vpop.f32.mrb[0].mxu0
    %v3041 = vadd.f32 %v2987, %v3040
    %v3042 = vpop.f32.mrb[0].mxu0
    %3043 = vdwg.mxu0
    %v3044 = vadd.f32 %v3030, %v2854
    %v3045 = vadd.f32 %v3033, %v2855
    %v3046 = vadd.f32 %v3038, %v2856
    %v3047 = vadd.f32 %v3041, %v2857
    %s3048 = scalar_lea.vmem %s33, 1
    %v3049 = vld [vmem:[%s3048] sm:$0x1]
    %s3050 = scalar_lea.vmem %s35, 1
    %v3051 = vld [vmem:[%s3050] sm:$0x1]
    %v3052 = vsel %vm150, %v3044, 0.0
    %3053 = vadd.xlane.f32.xlu0 %v3052
    %v3054 = vpop.xlane.xlu0 %3053
    %v3055 = vsel %vm150, %v3045, 0.0
    %3056 = vadd.xlane.f32.xlu0 %v3055
    %v3057 = vpop.xlane.xlu0 %3056
    %v3058 = vsel %vm150, %v3046, 0.0
    %3059 = vadd.xlane.f32.xlu0 %v3058
    %v3060 = vpop.xlane.xlu0 %3059
    %v3061 = vsel %vm150, %v3047, 0.0
    %3062 = vadd.xlane.f32.xlu0 %v3061
    %v3063 = vpop.xlane.xlu0 %3062
    %v3064 = vmul.f32 %v3054, %v163
    %v3065 = vmul.f32 %v3057, %v163
    %v3066 = vmul.f32 %v3060, %v163
    %v3067 = vmul.f32 %v3063, %v163
    %v3068 = vsub.f32 %v3044, %v3064
    %v3069 = vsub.f32 %v3045, %v3065
    %v3070 = vsub.f32 %v3046, %v3066
    %v3071 = vsub.f32 %v3047, %v3067
    %v3072 = vmul.f32 %v3068, %v3068
    %v3073 = vmul.f32 %v3069, %v3069
    %v3074 = vmul.f32 %v3070, %v3070
    %v3075 = vmul.f32 %v3071, %v3071
    %v3076 = vsel %vm150, %v3072, 0.0
    %3077 = vadd.xlane.f32.xlu0 %v3076
    %v3078 = vpop.xlane.xlu0 %3077
    %v3079 = vsel %vm150, %v3073, 0.0
    %3080 = vadd.xlane.f32.xlu0 %v3079
    %v3081 = vpop.xlane.xlu0 %3080
    %v3082 = vsel %vm150, %v3074, 0.0
    %3083 = vadd.xlane.f32.xlu0 %v3082
    %v3084 = vpop.xlane.xlu0 %3083
    %v3085 = vsel %vm150, %v3075, 0.0
    %3086 = vadd.xlane.f32.xlu0 %v3085
    %v3087 = vpop.xlane.xlu0 %3086
    %v3088 = vmul.f32 %v3078, %v163
    %v3089 = vmul.f32 %v3081, %v163
    %v3090 = vmul.f32 %v3084, %v163
    %v3091 = vmul.f32 %v3087, %v163
    %v3092 = vadd.f32 %v3088, 1e-12
    %v3093 = vadd.f32 %v3089, 1e-12
    %v3094 = vadd.f32 %v3090, 1e-12
    %v3095 = vadd.f32 %v3091, 1e-12
    %v3096 = vrsqrt.pop %v3092
    %v3097 = vrsqrt.pop %v3093
    %v3098 = vrsqrt.pop %v3094
    %v3099 = vrsqrt.pop %v3095
    %v3100 = vmul.f32 %v3068, %v3096
    %v3101 = vmul.f32 %v3069, %v3097
    %v3102 = vmul.f32 %v3070, %v3098
    %v3103 = vmul.f32 %v3071, %v3099
    %v3105 = vlaneseq
    %v3106 = vshrl.u32 %v3105, 7
    %v3107 = vsub.s32 0, %v3106
    %v3108 = vrot.slane %v3049, %v3107
    %v3110 = vmul.f32 %v3100, %v3108
    %v3111 = vmul.f32 %v3101, %v3108
    %v3112 = vmul.f32 %v3102, %v3108
    %v3113 = vmul.f32 %v3103, %v3108
    %v3115 = vlaneseq
    %v3116 = vshrl.u32 %v3115, 7
    %v3117 = vsub.s32 0, %v3116
    %v3118 = vrot.slane %v3051, %v3117
    %v3120 = vadd.f32 %v3110, %v3118
    %v3121 = vadd.f32 %v3111, %v3118
    %v3122 = vadd.f32 %v3112, %v3118
    %v3123 = vadd.f32 %v3113, %v3118
    %v3124 = vld [vmem:[%s37] sm:$0xff]
    %v3125 = vld [vmem:[%s37 + $0x8] sm:$0xff]
    %v3126 = vld [vmem:[%s37 + $0x10] sm:$0xff]
    %v3127 = vld [vmem:[%s37 + $0x18] sm:$0xff]
    %v3128 = vpack.c.bf16 %v3120, %v3120
    %v3129 = vpack.c.bf16 %v3121, %v3121
    %v3130 = vpack.c.bf16 %v3122, %v3122
    %v3131 = vpack.c.bf16 %v3123, %v3123
    %v3132 = vpack.c.bf16 %v3125, %v3124
    %v3133 = vpack.c.bf16 %v3127, %v3126
    %v3134 = vld [vmem:[%s39] sm:$0x1]
    %v3136 = vlaneseq
    %v3137 = vshrl.u32 %v3136, 7
    %v3138 = vsub.s32 0, %v3137
    %v3139 = vrot.slane %v3134, %v3138
    %v3145 = vunpack.c.l.b16 %v3128
    %v3146 = vunpack.c.l.b16 %v3129
    %v3147 = vunpack.c.l.b16 %v3130
    %v3148 = vunpack.c.l.b16 %v3131
    %v3149 = vrot.slane %v3146, 7
    %vm3150 = vcmask 1041409
    %v3151 = vsel %vm3150, %v3149, %v3145
    %v3152 = vrot.slane %v3147, 6
    %vm3153 = vcmask 1042434
    %v3154 = vsel %vm3153, %v3152, %v3151
    %v3155 = vrot.slane %v3148, 5
    %vm3156 = vcmask 1043459
    %v3157 = vsel %vm3156, %v3155, %v3154
    %v3158 = vpack.c.b16 %v3157, %v3157
    %v3160 = vsel %vm150, %v3158, 0
    %3162 = vmatprep.subr.bf16.mxu0 0
    %3163 = vmatpush1.bf16.msra.mxu0 %v3132
    %3164 = vmatprep.subr.bf16.mxu0 0
    %3165 = vmatpush1.bf16.msra.mxu0 %v3133
    %3166 = vmatprep.subr.bf16.mxu0 0
    %3167 = vmatpush1.bf16.msra.mxu0 0
    %3168 = vmatprep.subr.bf16.mxu0 0
    %3169 = vmatpush1.bf16.msra.mxu0 0
    %3170 = vmatprep.subr.bf16.mxu0 0
    %3171 = vmatpush1.bf16.msra.mxu0 0
    %3172 = vmatprep.subr.bf16.mxu0 0
    %3173 = vmatpush1.bf16.msra.mxu0 0
    %3174 = vmatprep.subr.bf16.mxu0 0
    %3175 = vmatpush1.bf16.msra.mxu0 0
    %3176 = vmatprep.subr.bf16.mxu0 0
    %3177 = vmatpush1.bf16.msra.mxu0 0
    %3178 = vmatprep.subr.bf16.mxu0 0
    %3179 = vmatpush1.bf16.msra.mxu0 0
    %3180 = vmatprep.subr.bf16.mxu0 0
    %3181 = vmatpush1.bf16.msra.mxu0 0
    %3182 = vmatprep.subr.bf16.mxu0 0
    %3183 = vmatpush1.bf16.msra.mxu0 0
    %3184 = vmatprep.subr.bf16.mxu0 0
    %3185 = vmatpush1.bf16.msra.mxu0 0
    %3186 = vmatprep.subr.bf16.mxu0 0
    %3187 = vmatpush1.bf16.msra.mxu0 0
    %3188 = vmatprep.subr.bf16.mxu0 0
    %3189 = vmatpush1.bf16.msra.mxu0 0
    %3190 = vmatprep.subr.bf16.mxu0 0
    %3191 = vmatpush1.bf16.msra.mxu0 0
    %3192 = vmatprep.subr.bf16.mxu0 0
    %3193 = vmatpush1.bf16.msra.mxu0 0
    %3194 = vmatprep.mubr.bf16.mxu0 0
    %3195 = vmatmul.mubr.bf16.gmra.mrb[0].mxu0 %v3160
    %v3196 = vpop.f32.mrb[0].mxu0
    %v3197 = vadd.f32 %v3139, %v3196
    %v3198 = vpop.f32.mrb[0].mxu0
    %v3199 = vpop.f32.mrb[0].mxu0
    %v3200 = vpop.f32.mrb[0].mxu0
    %3201 = vdwg.mxu0
    %v3202 = vtanh.pop %v3197
    %v3203 = vld [vmem:[%s45] sm:$0xff]
    %v3204 = vld [vmem:[%s45 + $0x8] sm:$0xff]
    %v3205 = vld [vmem:[%s45 + $0x10] sm:$0xff]
    %v3206 = vld [vmem:[%s45 + $0x18] sm:$0xff]
    %v3207 = vpack.c.bf16 %v3202, %v3202
    %v3208 = vpack.c.bf16 %v3204, %v3203
    %v3209 = vpack.c.bf16 %v3206, %v3205
    %v3210 = vld [vmem:[%s41] sm:$0xf]
    %v3211 = vld [vmem:[%s47] sm:$0x1]
    %3213 = vset.pattern.permute.xlu0 0
    %3214 = vperm.xlu0 %3213, %v3210
    %v3215 = vpop.permute.xlu0 %3214
    %v3218 = vlaneseq
    %v3219 = vshrl.u32 %v3218, 7
    %v3220 = vsub.s32 0, %v3219
    %v3221 = vrot.slane %v3211, %v3220
    %v3223 = vmul.f32 %v3215, %v3221
    %v3225 = vsel %vm150, %v3207, 0
    %3227 = vmatprep.subr.bf16.mxu0 0
    %3228 = vmatpush1.bf16.msra.mxu0 %v3208
    %3229 = vmatprep.subr.bf16.mxu0 0
    %3230 = vmatpush1.bf16.msra.mxu0 %v3209
    %3231 = vmatprep.subr.bf16.mxu0 0
    %3232 = vmatpush1.bf16.msra.mxu0 0
    %3233 = vmatprep.subr.bf16.mxu0 0
    %3234 = vmatpush1.bf16.msra.mxu0 0
    %3235 = vmatprep.subr.bf16.mxu0 0
    %3236 = vmatpush1.bf16.msra.mxu0 0
    %3237 = vmatprep.subr.bf16.mxu0 0
    %3238 = vmatpush1.bf16.msra.mxu0 0
    %3239 = vmatprep.subr.bf16.mxu0 0
    %3240 = vmatpush1.bf16.msra.mxu0 0
    %3241 = vmatprep.subr.bf16.mxu0 0
    %3242 = vmatpush1.bf16.msra.mxu0 0
    %3243 = vmatprep.subr.bf16.mxu0 0
    %3244 = vmatpush1.bf16.msra.mxu0 0
    %3245 = vmatprep.subr.bf16.mxu0 0
    %3246 = vmatpush1.bf16.msra.mxu0 0
    %3247 = vmatprep.subr.bf16.mxu0 0
    %3248 = vmatpush1.bf16.msra.mxu0 0
    %3249 = vmatprep.subr.bf16.mxu0 0
    %3250 = vmatpush1.bf16.msra.mxu0 0
    %3251 = vmatprep.subr.bf16.mxu0 0
    %3252 = vmatpush1.bf16.msra.mxu0 0
    %3253 = vmatprep.subr.bf16.mxu0 0
    %3254 = vmatpush1.bf16.msra.mxu0 0
    %3255 = vmatprep.subr.bf16.mxu0 0
    %3256 = vmatpush1.bf16.msra.mxu0 0
    %3257 = vmatprep.subr.bf16.mxu0 0
    %3258 = vmatpush1.bf16.msra.mxu0 0
    %3259 = vmatprep.mubr.bf16.mxu0 0
    %3260 = vmatmul.mubr.bf16.gmra.mrb[0].mxu0 %v3225
    %v3261 = vpop.f32.mrb[0].mxu0
    %v3262 = vadd.f32 %v3223, %v3261
    %v3263 = vpop.f32.mrb[0].mxu0
    %v3264 = vpop.f32.mrb[0].mxu0
    %v3265 = vpop.f32.mrb[0].mxu0
    %3266 = vdwg.mxu0
    %v3267 = vld [vmem:[%s43] sm:$0xf]
    %v3268 = vld [vmem:[%s49] sm:$0x1]
    %3270 = vset.pattern.permute.xlu0 0
    %3271 = vperm.xlu0 %3270, %v3267
    %v3272 = vpop.permute.xlu0 %3271
    %v3275 = vlaneseq
    %v3276 = vshrl.u32 %v3275, 7
    %v3277 = vsub.s32 0, %v3276
    %v3278 = vrot.slane %v3268, %v3277
    %v3280 = vmul.f32 %v3272, %v3278
    %v3281 = vadd.f32 %v3262, %v3280
    %v3282 = vld [vmem:[%s51] sm:$0x1]
    %v3284 = vlaneseq
    %v3285 = vshrl.u32 %v3284, 7
    %v3286 = vsub.s32 0, %v3285
    %v3287 = vrot.slane %v3282, %v3286
    %v3289 = vadd.f32 %v3281, %v3287
    %v3290 = vmax.f32 %v3289, 0.0
    %v3291 = vld [vmem:[%s53] sm:$0xff]
    %v3292 = vld [vmem:[%s53 + $0x8] sm:$0xff]
    %v3293 = vld [vmem:[%s53 + $0x10] sm:$0xff]
    %v3294 = vld [vmem:[%s53 + $0x18] sm:$0xff]
    %v3295 = vpack.c.bf16 %v3290, %v3290
    %v3296 = vpack.c.bf16 %v3292, %v3291
    %v3297 = vpack.c.bf16 %v3294, %v3293
    %v3298 = vld [vmem:[%s55] sm:$0x1]
    %v3300 = vlaneseq
    %v3301 = vshrl.u32 %v3300, 7
    %v3302 = vsub.s32 0, %v3301
    %v3303 = vrot.slane %v3298, %v3302
    %v3306 = vsel %vm150, %v3295, 0
    %3308 = vmatprep.subr.bf16.mxu0 0
    %3309 = vmatpush1.bf16.msra.mxu0 %v3296
    %3310 = vmatprep.subr.bf16.mxu0 0
    %3311 = vmatpush1.bf16.msra.mxu0 %v3297
    %3312 = vmatprep.subr.bf16.mxu0 0
    %3313 = vmatpush1.bf16.msra.mxu0 0
    %3314 = vmatprep.subr.bf16.mxu0 0
    %3315 = vmatpush1.bf16.msra.mxu0 0
    %3316 = vmatprep.subr.bf16.mxu0 0
    %3317 = vmatpush1.bf16.msra.mxu0 0
    %3318 = vmatprep.subr.bf16.mxu0 0
    %3319 = vmatpush1.bf16.msra.mxu0 0
    %3320 = vmatprep.subr.bf16.mxu0 0
    %3321 = vmatpush1.bf16.msra.mxu0 0
    %3322 = vmatprep.subr.bf16.mxu0 0
    %3323 = vmatpush1.bf16.msra.mxu0 0
    %3324 = vmatprep.subr.bf16.mxu0 0
    %3325 = vmatpush1.bf16.msra.mxu0 0
    %3326 = vmatprep.subr.bf16.mxu0 0
    %3327 = vmatpush1.bf16.msra.mxu0 0
    %3328 = vmatprep.subr.bf16.mxu0 0
    %3329 = vmatpush1.bf16.msra.mxu0 0
    %3330 = vmatprep.subr.bf16.mxu0 0
    %3331 = vmatpush1.bf16.msra.mxu0 0
    %3332 = vmatprep.subr.bf16.mxu0 0
    %3333 = vmatpush1.bf16.msra.mxu0 0
    %3334 = vmatprep.subr.bf16.mxu0 0
    %3335 = vmatpush1.bf16.msra.mxu0 0
    %3336 = vmatprep.subr.bf16.mxu0 0
    %3337 = vmatpush1.bf16.msra.mxu0 0
    %3338 = vmatprep.subr.bf16.mxu0 0
    %3339 = vmatpush1.bf16.msra.mxu0 0
    %3340 = vmatprep.mubr.bf16.mxu0 0
    %3341 = vmatmul.mubr.bf16.gmra.mrb[0].mxu0 %v3306
    %v3342 = vpop.f32.mrb[0].mxu0
    %v3343 = vadd.f32 %v3303, %v3342
    %v3344 = vpop.f32.mrb[0].mxu0
    %v3345 = vpop.f32.mrb[0].mxu0
    %v3346 = vpop.f32.mrb[0].mxu0
    %3347 = vdwg.mxu0
    %v3348 = vmax.f32 %v3343, 0.0
    %v3349 = vld [vmem:[%s57] sm:$0xff]
    %v3350 = vld [vmem:[%s57 + $0x8] sm:$0xff]
    %v3351 = vpack.c.bf16 %v3348, %v3348
    %v3352 = vpack.c.bf16 %v3350, %v3349
    %v3353 = vld [vmem:[%s59] sm:$0x1]
    %v3355 = vlaneseq
    %v3356 = vshrl.u32 %v3355, 7
    %v3357 = vsub.s32 0, %v3356
    %v3358 = vrot.slane %v3353, %v3357
    %v3361 = vsel %vm351, %v3351, 0
    %3363 = vmatprep.subr.bf16.mxu0 0
    %3364 = vmatpush1.bf16.msra.mxu0 %v3352
    %3365 = vmatprep.subr.bf16.mxu0 0
    %3366 = vmatpush1.bf16.msra.mxu0 0
    %3367 = vmatprep.subr.bf16.mxu0 0
    %3368 = vmatpush1.bf16.msra.mxu0 0
    %3369 = vmatprep.subr.bf16.mxu0 0
    %3370 = vmatpush1.bf16.msra.mxu0 0
    %3371 = vmatprep.subr.bf16.mxu0 0
    %3372 = vmatpush1.bf16.msra.mxu0 0
    %3373 = vmatprep.subr.bf16.mxu0 0
    %3374 = vmatpush1.bf16.msra.mxu0 0
    %3375 = vmatprep.subr.bf16.mxu0 0
    %3376 = vmatpush1.bf16.msra.mxu0 0
    %3377 = vmatprep.subr.bf16.mxu0 0
    %3378 = vmatpush1.bf16.msra.mxu0 0
    %3379 = vmatprep.subr.bf16.mxu0 0
    %3380 = vmatpush1.bf16.msra.mxu0 0
    %3381 = vmatprep.subr.bf16.mxu0 0
    %3382 = vmatpush1.bf16.msra.mxu0 0
    %3383 = vmatprep.subr.bf16.mxu0 0
    %3384 = vmatpush1.bf16.msra.mxu0 0
    %3385 = vmatprep.subr.bf16.mxu0 0
    %3386 = vmatpush1.bf16.msra.mxu0 0
    %3387 = vmatprep.subr.bf16.mxu0 0
    %3388 = vmatpush1.bf16.msra.mxu0 0
    %3389 = vmatprep.subr.bf16.mxu0 0
    %3390 = vmatpush1.bf16.msra.mxu0 0
    %3391 = vmatprep.subr.bf16.mxu0 0
    %3392 = vmatpush1.bf16.msra.mxu0 0
    %3393 = vmatprep.subr.bf16.mxu0 0
    %3394 = vmatpush1.bf16.msra.mxu0 0
    %3395 = vmatprep.mubr.bf16.mxu0 0
    %3396 = vmatmul.mubr.bf16.gmra.mrb[0].mxu0 %v3361
    %v3397 = vpop.f32.mrb[0].mxu0
    %v3398 = vadd.f32 %v3358, %v3397
    %v3399 = vpop.f32.mrb[0].mxu0
    %v3400 = vpop.f32.mrb[0].mxu0
    %v3401 = vpop.f32.mrb[0].mxu0
    %3402 = vdwg.mxu0
    %3403 = vst [vmem:[#allocation2] sm:$0xf] %v3398
    // Predicated region
    $region122: #{bert_review_classifier_forward.1} parent=1 // pred_check
      _
    $region123: #{bert_review_classifier_forward.1} parent=1 // pred_check_branch
      %3405 = sbr.rel (0) target = $region125
    $region124: #{bert_review_classifier_forward.1} parent=1 // pred_region
      %s3407 = ssub.s32 64, 64
      %3408 = vsyncadd [#allocation3], %s3407
      %s3410 = sshll.u32 [#allocation2], 4
      %s3411 = int_to_ptr.vmem [resolvable:$true] %s3410
      %3413 = dma.vmem_to_hbm [thread:$0]  %s3411, 64, %s61, [#allocation3]
    $region125: #{bert_review_classifier_forward.1} parent=1 // pred_fallthru
      _
    // Predicated region
    $region126: #{bert_review_classifier_forward.1} parent=1 // pred_check
      _
    $region127: #{bert_review_classifier_forward.1} parent=1 // pred_check_branch
      %3415 = sbr.rel (0) target = $region129
    $region128: #{bert_review_classifier_forward.1} parent=1 // pred_region
      %3416 = dma.done [#allocation3], 64
    $region129: #{bert_review_classifier_forward.1} parent=1 // pred_fallthru
      _
    %3417 = vsyncpa [#allocation3], 1

</llo_original>
